<compile_context>
chip_gen: v7x
topology: tpu7x:2x2x1
jax: 0.10.0
libtpu: 0.0.40
codegen_flags: <defaults>
</compile_context>

<pallas_src>
import functools

import jax
import jax.numpy as jnp
from jax.experimental import pallas as pl
from jax.experimental.pallas import tpu as pltpu

LATENT_DIM = 20
IN_DIM = 784
HID_DIM = 400
ENC_OUT = 40
LANE = 128
MLV_W = 2 * LANE        # fused (mu | log_var) head: mu @ lanes [0:20), log_var @ [128:148)


def _round_up(n, m):
    return -(-n // m) * m


# --------------------------------------------------------------------------------------
# Kernel
# --------------------------------------------------------------------------------------
def _vae_kernel(
    x_ref, eps_ref,
    w1_ref, b1_ref,        # encoder Linear(784, 400)
    wh_ref, bh_ref,        # folded encoder Linear(400,40) @ (fc_mu | fc_log_var), (400, 256)
    w3_ref, b3_ref,        # decoder Linear(latent, 400), rows zero-padded to 128
    w4_ref, b4_ref,        # decoder Linear(400, 784)
    recon_ref, mlv_ref,
):
    bf16 = jnp.bfloat16

    # ---- encoder: Linear(784,400) -> ReLU  (x already bf16) ----
    h1 = jnp.dot(x_ref[...], w1_ref[...], preferred_element_type=jnp.float32) + b1_ref[...]
    h1 = jnp.maximum(h1, 0.0)

    # ---- folded encoder[2] + latent heads: lanes [0:20)=mu, [128:148)=log_var ----
    mlv = jnp.dot(h1.astype(bf16), wh_ref[...], preferred_element_type=jnp.float32) + bh_ref[...]
    mu_pad = mlv[:, :LANE]          # whole-vreg lane-group slices: no cross-lane relayout
    lv_pad = mlv[:, LANE:]

    # ---- reparameterize: z = mu + eps * exp(0.5 * log_var) ----
    # eps is zero beyond lane 19 and mu_pad is zero there too, so padded lanes of z are 0.
    z = mu_pad + eps_ref[...] * jnp.exp(0.5 * lv_pad)

    # ---- decoder: Linear(20->400) (K zero-padded to 128) -> ReLU -> Linear -> Sigmoid ----
    h3 = jnp.dot(z.astype(bf16), w3_ref[...], preferred_element_type=jnp.float32) + b3_ref[...]
    h3 = jnp.maximum(h3, 0.0)
    logits = jnp.dot(h3.astype(bf16), w4_ref[...], preferred_element_type=jnp.float32) + b4_ref[...]

    recon_ref[...] = jax.nn.sigmoid(logits).astype(recon_ref.dtype)   # bf16 store
    mlv_ref[...] = mlv                                                # f32 (mu | log_var)


# --------------------------------------------------------------------------------------
# One-time weight preparation (fold / pad / cast) -- keep OUT of the per-batch forward.
# --------------------------------------------------------------------------------------
def prepare_params(params):
    f32, bf16 = jnp.float32, jnp.bfloat16
    w2, b2 = params["w2"].astype(f32), params["b2"].astype(f32)

    # Fold encoder Linear(400,40) into the two heads (exact: no nonlinearity between).
    w_mu = w2 @ params["wmu"]                       # (400, 20)
    b_mu = b2 @ params["wmu"] + params["bmu"]       # (1, 20)
    w_lv = w2 @ params["wlv"]
    b_lv = b2 @ params["wlv"] + params["blv"]

    # Pack into a single lane-aligned (400, 256) head.
    wh = jnp.zeros((HID_DIM, MLV_W), f32)
    wh = wh.at[:, :LATENT_DIM].set(w_mu)
    wh = wh.at[:, LANE:LANE + LATENT_DIM].set(w_lv)
    bh = jnp.zeros((1, MLV_W), f32)
    bh = bh.at[:, :LATENT_DIM].set(b_mu)
    bh = bh.at[:, LANE:LANE + LATENT_DIM].set(b_lv)

    # Decoder first layer zero-padded so z can stay a full 128-lane tile.
    w3p = jnp.zeros((LANE, HID_DIM), f32).at[:LATENT_DIM, :].set(params["w3"])

    return {
        "w1": params["w1"].astype(bf16), "b1": params["b1"].astype(f32),
        "wh": wh.astype(bf16),           "bh": bh,
        "w3": w3p.astype(bf16),          "b3": params["b3"].astype(f32),
        "w4": params["w4"].astype(bf16), "b4": params["b4"].astype(f32),
    }


# --------------------------------------------------------------------------------------
# Wrapper
# --------------------------------------------------------------------------------------
def _choose_tiles(batch, tb_target):
    """Split round_up(batch, 8) into near-equal 8-aligned tiles (minimal padding)."""
    b8 = _round_up(max(batch, 1), 8)
    tb_target = max(8, _round_up(tb_target, 8))
    n = max(1, pl.cdiv(b8, tb_target))
    if n == 1 and b8 >= 16:
        n = 2                      # >=2 grid steps so both v7x TensorCores get work
    tb = _round_up(pl.cdiv(b8, n), 8)
    return tb, tb * n, n


@functools.partial(jax.jit, static_argnames=("tb_target",))
def vae_forward(x_nchw, eps, prepared, *, tb_target=1024):
    """x_nchw: (B, 1, 28, 28) float32. eps: (B, latent) float32.

    prepared: output of prepare_params().  tb_target: desired batch-tile rows
    (1024 default for bf16 activation IO; the actual tile is an even 8-aligned split).
    """
    B = x_nchw.shape[0]
    tb, b_pad, n_tiles = _choose_tiles(B, tb_target)

    x = x_nchw.reshape(B, IN_DIM).astype(jnp.bfloat16)      # == torch x.view(-1, 784), bf16 IO
    if b_pad != B:
        x = jnp.pad(x, ((0, b_pad - B), (0, 0)))
    eps_p = jnp.zeros((b_pad, LANE), jnp.float32).at[:B, :LATENT_DIM].set(eps)

    w1, b1 = prepared["w1"], prepared["b1"]
    wh, bh = prepared["wh"], prepared["bh"]
    w3, b3 = prepared["w3"], prepared["b3"]
    w4, b4 = prepared["w4"], prepared["b4"]

    def batch_spec(d):
        return pl.BlockSpec((tb, d), lambda i: (i, 0))

    def resident(a):                                   # fetched once, stays in VMEM
        return pl.BlockSpec(a.shape, lambda i: (0, 0))

    weights = (w1, b1, wh, bh, w3, b3, w4, b4)
    in_specs = [batch_spec(IN_DIM), batch_spec(LANE)] + [resident(a) for a in weights]

    weight_bytes = sum(int(a.size) * a.dtype.itemsize for a in weights)
    io_bytes = b_pad * (IN_DIM * 2 + LANE * 4 + IN_DIM * 2 + MLV_W * 4)
    cost = pl.CostEstimate(
        flops=2 * b_pad * (IN_DIM * HID_DIM + HID_DIM * MLV_W
                           + LANE * HID_DIM + HID_DIM * IN_DIM),
        transcendentals=b_pad * (LANE + IN_DIM),
        bytes_accessed=weight_bytes + io_bytes,
    )

    recon, mlv = pl.pallas_call(
        _vae_kernel,
        out_shape=(
            jax.ShapeDtypeStruct((b_pad, IN_DIM), jnp.bfloat16),
            jax.ShapeDtypeStruct((b_pad, MLV_W), jnp.float32),
        ),
        grid=(n_tiles,),
        in_specs=in_specs,
        out_specs=(batch_spec(IN_DIM), batch_spec(MLV_W)),
        compiler_params=pltpu.CompilerParams(
            dimension_semantics=("parallel",),     # shard batch tiles across v7x TCs
            vmem_limit_bytes=40 << 20,             # fits v7x 64 MiB physical VMEM
        ),
        cost_estimate=cost,
    )(x, eps_p, *weights)

    recon = recon[:B].astype(jnp.float32)
    mu = mlv[:B, :LATENT_DIM]
    log_var = mlv[:B, LANE:LANE + LATENT_DIM]
    return recon, mu, log_var


# --------------------------------------------------------------------------------------
# Params / reference
# --------------------------------------------------------------------------------------
def init_params(key):
    """Deterministic init matching PyTorch Linear shapes (stored as (in, out))."""
    def linear(key, fan_in, fan_out):
        kw, kb = jax.random.split(key)
        bound = 1.0 / jnp.sqrt(fan_in)
        w = jax.random.uniform(kw, (fan_in, fan_out), jnp.float32, -bound, bound)
        b = jax.random.uniform(kb, (1, fan_out), jnp.float32, -bound, bound)
        return w, b

    keys = jax.random.split(key, 6)
    p = {}
    p["w1"], p["b1"] = linear(keys[0], IN_DIM, HID_DIM)        # encoder[0]
    p["w2"], p["b2"] = linear(keys[1], HID_DIM, ENC_OUT)       # encoder[2]
    p["wmu"], p["bmu"] = linear(keys[2], ENC_OUT, LATENT_DIM)  # fc_mu
    p["wlv"], p["blv"] = linear(keys[3], ENC_OUT, LATENT_DIM)  # fc_log_var
    p["w3"], p["b3"] = linear(keys[4], LATENT_DIM, HID_DIM)    # decoder[0]
    p["w4"], p["b4"] = linear(keys[5], HID_DIM, IN_DIM)        # decoder[2]
    return p


def reference_forward(x_nchw, eps, params):
    """Pure-JAX reference (un-folded two-matmul head) with bf16 weights / f32 accumulate."""
    bf16 = jnp.bfloat16

    def dot(a, w):
        return jnp.dot(a.astype(bf16), w.astype(bf16),
                       preferred_element_type=jnp.float32)

    x = x_nchw.reshape(x_nchw.shape[0], IN_DIM)
    h1 = jnp.maximum(dot(x, params["w1"]) + params["b1"], 0.0)
    h2 = dot(h1, params["w2"]) + params["b2"]
    mu = dot(h2, params["wmu"]) + params["bmu"]
    log_var = dot(h2, params["wlv"]) + params["blv"]
    z = mu + eps * jnp.exp(0.5 * log_var)
    h3 = jnp.maximum(dot(z, params["w3"]) + params["b3"], 0.0)
    recon = jax.nn.sigmoid(dot(h3, params["w4"]) + params["b4"])
    return recon, mu, log_var


if __name__ == "__main__":
    key = jax.random.PRNGKey(0)
    k_param, k_x, k_eps = jax.random.split(key, 3)

    B = 50  # deliberately not a tile multiple: exercises padding + a 2-step grid
    params = init_params(k_param)
    prepared = prepare_params(params)      # one-time weight prep (fold / pad / bf16)

    # MNIST-like NCHW input in [0, 1]
    x = jax.random.uniform(k_x, (B, 1, 28, 28), jnp.float32)
    # Reparameterization noise (torch.randn_like equivalent), fixed for determinism.
    eps = jax.random.normal(k_eps, (B, LATENT_DIM), jnp.float32)

    # tb_target=32 at this toy batch gives a 2-step grid; use the 1024 default in prod.
    recon, mu, log_var = vae_forward(x, eps, prepared, tb_target=32)
    jax.block_until_ready((recon, mu, log_var))

    # sanity check against pure-JAX reference (same bf16/f32 mixed precision, un-folded)
    r_ref, mu_ref, lv_ref = reference_forward(x, eps, params)
    assert recon.shape == (B, IN_DIM) and mu.shape == (B, LATENT_DIM)
    assert log_var.shape == (B, LATENT_DIM)
    # mu/log_var are f32 outputs; recon is stored bf16 by the kernel, hence looser tol.
    assert jnp.allclose(mu, mu_ref, atol=5e-3, rtol=5e-3)
    assert jnp.allclose(log_var, lv_ref, atol=5e-3, rtol=5e-3)
    assert jnp.allclose(recon, r_ref, atol=1e-2, rtol=1e-2)

    print("KERNEL_OK")
</pallas_src>

<mosaic_0001>
module attributes {stable_mosaic.version = 11 : i64} {
  func.func @_vae_kernel(%arg0: i32, %arg1: memref<32x784xbf16, #tpu.memory_space<vmem>>, %arg2: memref<32x128xf32, #tpu.memory_space<vmem>>, %arg3: memref<784x400xbf16, #tpu.memory_space<vmem>>, %arg4: memref<1x400xf32, #tpu.memory_space<vmem>>, %arg5: memref<400x256xbf16, #tpu.memory_space<vmem>>, %arg6: memref<1x256xf32, #tpu.memory_space<vmem>>, %arg7: memref<128x400xbf16, #tpu.memory_space<vmem>>, %arg8: memref<1x400xf32, #tpu.memory_space<vmem>>, %arg9: memref<400x784xbf16, #tpu.memory_space<vmem>>, %arg10: memref<1x784xf32, #tpu.memory_space<vmem>>, %arg11: memref<32x784xbf16, #tpu.memory_space<vmem>>, %arg12: memref<32x256xf32, #tpu.memory_space<vmem>>) attributes {dimension_semantics = [#tpu.dimension_semantics<parallel>], iteration_bounds = array<i64: 2>, scalar_prefetch = 0 : i64, scratch_operands = 0 : i64, tpu.core_type = #tpu.core_type<tc>, window_params = [{transform_indices = @transform_0, window_bounds = array<i64: 32, 784>}, {transform_indices = @transform_1, window_bounds = array<i64: 32, 128>}, {pipeline_mode = #tpu.pipeline_mode<synchronous>, transform_indices = @transform_2, window_bounds = array<i64: 784, 400>}, {pipeline_mode = #tpu.pipeline_mode<synchronous>, transform_indices = @transform_3, window_bounds = array<i64: 1, 400>}, {pipeline_mode = #tpu.pipeline_mode<synchronous>, transform_indices = @transform_4, window_bounds = array<i64: 400, 256>}, {pipeline_mode = #tpu.pipeline_mode<synchronous>, transform_indices = @transform_5, window_bounds = array<i64: 1, 256>}, {pipeline_mode = #tpu.pipeline_mode<synchronous>, transform_indices = @transform_6, window_bounds = array<i64: 128, 400>}, {pipeline_mode = #tpu.pipeline_mode<synchronous>, transform_indices = @transform_7, window_bounds = array<i64: 1, 400>}, {pipeline_mode = #tpu.pipeline_mode<synchronous>, transform_indices = @transform_8, window_bounds = array<i64: 400, 784>}, {pipeline_mode = #tpu.pipeline_mode<synchronous>, transform_indices = @transform_9, window_bounds = array<i64: 1, 784>}, {transform_indices = @transform_10, window_bounds = array<i64: 32, 784>}, {transform_indices = @transform_11, window_bounds = array<i64: 32, 256>}]} {
    %c0 = arith.constant 0 : index
    %c0_0 = arith.constant 0 : index
    %0 = vector.load %arg1[%c0, %c0_0] : memref<32x784xbf16, #tpu.memory_space<vmem>>, vector<32x784xbf16>
    %c0_1 = arith.constant 0 : index
    %c0_2 = arith.constant 0 : index
    %1 = vector.load %arg3[%c0_1, %c0_2] : memref<784x400xbf16, #tpu.memory_space<vmem>>, vector<784x400xbf16>
    %cst = arith.constant dense<0.000000e+00> : vector<32x400xf32>
    %2 = tpu.matmul %0, %1, %cst {dimension_numbers = #tpu.dot_dimension_numbers<[1], [0], [0], [1], [0, 0, 1, 1], [], []>} : vector<32x784xbf16>, vector<784x400xbf16>, vector<32x400xf32> -> vector<32x400xf32>
    %c0_3 = arith.constant 0 : index
    %c0_4 = arith.constant 0 : index
    %3 = vector.load %arg4[%c0_3, %c0_4] : memref<1x400xf32, #tpu.memory_space<vmem>>, vector<1x400xf32>
    %4 = vector.broadcast %3 : vector<1x400xf32> to vector<32x400xf32>
    %5 = arith.addf %2, %4 : vector<32x400xf32>
    %cst_5 = arith.constant 0.000000e+00 : f32
    %6 = vector.broadcast %cst_5 : f32 to vector<32x400xf32>
    %7 = arith.maximumf %5, %6 : vector<32x400xf32>
    %8 = arith.truncf %7 : vector<32x400xf32> to vector<32x400xbf16>
    %c0_6 = arith.constant 0 : index
    %c0_7 = arith.constant 0 : index
    %9 = vector.load %arg5[%c0_6, %c0_7] : memref<400x256xbf16, #tpu.memory_space<vmem>>, vector<400x256xbf16>
    %cst_8 = arith.constant dense<0.000000e+00> : vector<32x256xf32>
    %10 = tpu.matmul %8, %9, %cst_8 {dimension_numbers = #tpu.dot_dimension_numbers<[1], [0], [0], [1], [0, 0, 1, 1], [], []>} : vector<32x400xbf16>, vector<400x256xbf16>, vector<32x256xf32> -> vector<32x256xf32>
    %c0_9 = arith.constant 0 : index
    %c0_10 = arith.constant 0 : index
    %11 = vector.load %arg6[%c0_9, %c0_10] : memref<1x256xf32, #tpu.memory_space<vmem>>, vector<1x256xf32>
    %12 = vector.broadcast %11 : vector<1x256xf32> to vector<32x256xf32>
    %13 = arith.addf %10, %12 : vector<32x256xf32>
    %14 = vector.extract_strided_slice %13 {offsets = [0, 0], sizes = [32, 128], strides = [1, 1]} : vector<32x256xf32> to vector<32x128xf32>
    %15 = vector.extract_strided_slice %13 {offsets = [0, 128], sizes = [32, 128], strides = [1, 1]} : vector<32x256xf32> to vector<32x128xf32>
    %c0_11 = arith.constant 0 : index
    %c0_12 = arith.constant 0 : index
    %16 = vector.load %arg2[%c0_11, %c0_12] : memref<32x128xf32, #tpu.memory_space<vmem>>, vector<32x128xf32>
    %cst_13 = arith.constant 5.000000e-01 : f32
    %17 = vector.broadcast %cst_13 : f32 to vector<32x128xf32>
    %18 = arith.mulf %17, %15 : vector<32x128xf32>
    %19 = math.exp %18 : vector<32x128xf32>
    %20 = arith.mulf %16, %19 : vector<32x128xf32>
    %21 = arith.addf %14, %20 : vector<32x128xf32>
    %22 = arith.truncf %21 : vector<32x128xf32> to vector<32x128xbf16>
    %c0_14 = arith.constant 0 : index
    %c0_15 = arith.constant 0 : index
    %23 = vector.load %arg7[%c0_14, %c0_15] : memref<128x400xbf16, #tpu.memory_space<vmem>>, vector<128x400xbf16>
    %cst_16 = arith.constant dense<0.000000e+00> : vector<32x400xf32>
    %24 = tpu.matmul %22, %23, %cst_16 {dimension_numbers = #tpu.dot_dimension_numbers<[1], [0], [0], [1], [0, 0, 1, 1], [], []>} : vector<32x128xbf16>, vector<128x400xbf16>, vector<32x400xf32> -> vector<32x400xf32>
    %c0_17 = arith.constant 0 : index
    %c0_18 = arith.constant 0 : index
    %25 = vector.load %arg8[%c0_17, %c0_18] : memref<1x400xf32, #tpu.memory_space<vmem>>, vector<1x400xf32>
    %26 = vector.broadcast %25 : vector<1x400xf32> to vector<32x400xf32>
    %27 = arith.addf %24, %26 : vector<32x400xf32>
    %cst_19 = arith.constant 0.000000e+00 : f32
    %28 = vector.broadcast %cst_19 : f32 to vector<32x400xf32>
    %29 = arith.maximumf %27, %28 : vector<32x400xf32>
    %30 = arith.truncf %29 : vector<32x400xf32> to vector<32x400xbf16>
    %c0_20 = arith.constant 0 : index
    %c0_21 = arith.constant 0 : index
    %31 = vector.load %arg9[%c0_20, %c0_21] : memref<400x784xbf16, #tpu.memory_space<vmem>>, vector<400x784xbf16>
    %cst_22 = arith.constant dense<0.000000e+00> : vector<32x784xf32>
    %32 = tpu.matmul %30, %31, %cst_22 {dimension_numbers = #tpu.dot_dimension_numbers<[1], [0], [0], [1], [0, 0, 1, 1], [], []>} : vector<32x400xbf16>, vector<400x784xbf16>, vector<32x784xf32> -> vector<32x784xf32>
    %c0_23 = arith.constant 0 : index
    %c0_24 = arith.constant 0 : index
    %33 = vector.load %arg10[%c0_23, %c0_24] : memref<1x784xf32, #tpu.memory_space<vmem>>, vector<1x784xf32>
    %34 = vector.broadcast %33 : vector<1x784xf32> to vector<32x784xf32>
    %35 = arith.addf %32, %34 : vector<32x784xf32>
    %36 = arith.negf %35 : vector<32x784xf32>
    %37 = math.exp %36 : vector<32x784xf32>
    %cst_25 = arith.constant 1.000000e+00 : f32
    %38 = vector.broadcast %cst_25 : f32 to vector<32x784xf32>
    %39 = arith.addf %38, %37 : vector<32x784xf32>
    %40 = arith.divf %38, %39 : vector<32x784xf32>
    %41 = arith.truncf %40 : vector<32x784xf32> to vector<32x784xbf16>
    %c0_26 = arith.constant 0 : index
    %c0_27 = arith.constant 0 : index
    %42 = vector.load %arg11[%c0_26, %c0_27] : memref<32x784xbf16, #tpu.memory_space<vmem>>, vector<32x784xbf16>
    tpu.vector_store %arg11[%c0_26, %c0_27], %41 {strides = array<i32>} : memref<32x784xbf16, #tpu.memory_space<vmem>>, vector<32x784xbf16>,
    %c0_28 = arith.constant 0 : index
    %c0_29 = arith.constant 0 : index
    %43 = vector.load %arg12[%c0_28, %c0_29] : memref<32x256xf32, #tpu.memory_space<vmem>>, vector<32x256xf32>
    tpu.vector_store %arg12[%c0_28, %c0_29], %13 {strides = array<i32>} : memref<32x256xf32, #tpu.memory_space<vmem>>, vector<32x256xf32>,
    return
  }
  func.func @transform_0(%arg0: i32) -> (i32, i32) {
    %c0_i32 = arith.constant 0 : i32
    %c0_i32_0 = arith.constant 0 : i32
    return %arg0, %c0_i32 : i32, i32
  }
  func.func @transform_1(%arg0: i32) -> (i32, i32) {
    %c0_i32 = arith.constant 0 : i32
    %c0_i32_0 = arith.constant 0 : i32
    return %arg0, %c0_i32 : i32, i32
  }
  func.func @transform_2(%arg0: i32) -> (i32, i32) {
    %c0_i32 = arith.constant 0 : i32
    %c0_i32_0 = arith.constant 0 : i32
    %c0_i32_1 = arith.constant 0 : i32
    return %c0_i32, %c0_i32_0 : i32, i32
  }
  func.func @transform_3(%arg0: i32) -> (i32, i32) {
    %c0_i32 = arith.constant 0 : i32
    %c0_i32_0 = arith.constant 0 : i32
    %c0_i32_1 = arith.constant 0 : i32
    return %c0_i32, %c0_i32_0 : i32, i32
  }
  func.func @transform_4(%arg0: i32) -> (i32, i32) {
    %c0_i32 = arith.constant 0 : i32
    %c0_i32_0 = arith.constant 0 : i32
    %c0_i32_1 = arith.constant 0 : i32
    return %c0_i32, %c0_i32_0 : i32, i32
  }
  func.func @transform_5(%arg0: i32) -> (i32, i32) {
    %c0_i32 = arith.constant 0 : i32
    %c0_i32_0 = arith.constant 0 : i32
    %c0_i32_1 = arith.constant 0 : i32
    return %c0_i32, %c0_i32_0 : i32, i32
  }
  func.func @transform_6(%arg0: i32) -> (i32, i32) {
    %c0_i32 = arith.constant 0 : i32
    %c0_i32_0 = arith.constant 0 : i32
    %c0_i32_1 = arith.constant 0 : i32
    return %c0_i32, %c0_i32_0 : i32, i32
  }
  func.func @transform_7(%arg0: i32) -> (i32, i32) {
    %c0_i32 = arith.constant 0 : i32
    %c0_i32_0 = arith.constant 0 : i32
    %c0_i32_1 = arith.constant 0 : i32
    return %c0_i32, %c0_i32_0 : i32, i32
  }
  func.func @transform_8(%arg0: i32) -> (i32, i32) {
    %c0_i32 = arith.constant 0 : i32
    %c0_i32_0 = arith.constant 0 : i32
    %c0_i32_1 = arith.constant 0 : i32
    return %c0_i32, %c0_i32_0 : i32, i32
  }
  func.func @transform_9(%arg0: i32) -> (i32, i32) {
    %c0_i32 = arith.constant 0 : i32
    %c0_i32_0 = arith.constant 0 : i32
    %c0_i32_1 = arith.constant 0 : i32
    return %c0_i32, %c0_i32_0 : i32, i32
  }
  func.func @transform_10(%arg0: i32) -> (i32, i32) {
    %c0_i32 = arith.constant 0 : i32
    %c0_i32_0 = arith.constant 0 : i32
    return %arg0, %c0_i32 : i32, i32
  }
  func.func @transform_11(%arg0: i32) -> (i32, i32) {
    %c0_i32 = arith.constant 0 : i32
    %c0_i32_0 = arith.constant 0 : i32
    return %arg0, %c0_i32 : i32, i32
  }
}

</mosaic_0001>

<llo_original>
// kernel: vae_forward.1
$region0: #{vae_forward.1}
  #allocation0 [shape = 'u32[]', space=smem, size = 0x4, offset = 0x4, fixed_abs, tag = 'smem constant byte address 0x4 - core index']
  #allocation1 [shape = 'u32[144,128]{1,0:T(1,128)}', space=vmem, size = 0x12000, scoped, tag = 'internal scratch']
  %s0 = inlined_call_operand.vmem [shape: bf16[64,784], index: 0, kind: input, shape index: {}]
  %s1 = inlined_call_operand.vmem [shape: f32[64,128], index: 1, kind: input, shape index: {}]
  %s2 = inlined_call_operand.vmem [shape: bf16[784,400], index: 2, kind: input, shape index: {}]
  %s3 = inlined_call_operand.vmem [shape: f32[1,400], index: 3, kind: input, shape index: {}]
  %s4 = inlined_call_operand.vmem [shape: bf16[400,256], index: 4, kind: input, shape index: {}]
  %s5 = inlined_call_operand.vmem [shape: f32[1,256], index: 5, kind: input, shape index: {}]
  %s6 = inlined_call_operand.vmem [shape: bf16[128,400], index: 6, kind: input, shape index: {}]
  %s7 = inlined_call_operand.vmem [shape: f32[1,400], index: 7, kind: input, shape index: {}]
  %s8 = inlined_call_operand.vmem [shape: bf16[400,784], index: 8, kind: input, shape index: {}]
  %s9 = inlined_call_operand.vmem [shape: f32[1,784], index: 9, kind: input, shape index: {}]
  %s10 = inlined_call_operand.vmem [shape: bf16[64,784], index: 10, kind: output, shape index: {0}]
  %s11 = inlined_call_operand.vmem [shape: f32[64,256], index: 11, kind: output, shape index: {1}]
  %12 = xla_tuple %s10, %s11
  %s13 = sld [smem:[#allocation0]]
  $region81: #{vae_forward.1} parent=0
    _
  %s15 = ssub.s32 1, %s13
  %s16 = scalar_select 0, %s15, %s13
  loop: start=0, step=1, limit=4
  $region2: #{vae_forward.1} parent=0 // loop_pre_header
    _
  $region3: #{vae_forward.1} parent=0 // loop_header
    %s18 = sphi 0, %s22
    %p19 = scmp.ge.s32.totalorder %s18, 4
    %s28 = sphi 0, %s30
    %s31 = sphi 0, %s28
    %s32 = sphi 0, %s31
    %s48 = sphi 0, %s32
    %s54 = sphi 0, %s56
    %s57 = sphi 0, %s54
    %s58 = sphi 0, %s57
    %s74 = sphi 0, %s58
    %s78 = sphi 0, %s78
    %s80 = sphi 0, %s78
    %s81 = sphi 0, %s80
    %s95 = sphi 0, %s81
    %s99 = sphi 0, %s99
    %s101 = sphi 0, %s99
    %s102 = sphi 0, %s101
    %s116 = sphi 0, %s102
    %s120 = sphi 0, %s120
    %s122 = sphi 0, %s120
    %s123 = sphi 0, %s122
    %s137 = sphi 0, %s123
    %s141 = sphi 0, %s141
    %s143 = sphi 0, %s141
    %s144 = sphi 0, %s143
    %s158 = sphi 0, %s144
    %s162 = sphi 0, %s162
    %s164 = sphi 0, %s162
    %s165 = sphi 0, %s164
    %s179 = sphi 0, %s165
    %s183 = sphi 0, %s183
    %s185 = sphi 0, %s183
    %s186 = sphi 0, %s185
    %s200 = sphi 0, %s186
    %s204 = sphi 0, %s204
    %s206 = sphi 0, %s204
    %s207 = sphi 0, %s206
    %s221 = sphi 0, %s207
    %s225 = sphi 0, %s225
    %s227 = sphi 0, %s225
    %s228 = sphi 0, %s227
    %s242 = sphi 0, %s228
    %s248 = sphi 0, %s250
    %s251 = sphi 0, %s248
    %s252 = sphi 0, %s251
    %s268 = sphi 0, %s252
    %s274 = sphi 0, %s276
    %s277 = sphi 0, %s274
    %s278 = sphi 0, %s277
    %s294 = sphi 0, %s278
  $region4: #{vae_forward.1} parent=0 // loop_header_branch
    %21 = sbr.rel (%p19) target = $region8
  $region5: #{vae_forward.1} parent=0 // loop_body
    %s23 = ssub.s32 %s18, 1
    %s24 = ssub.s32 %s18, 2
    %s25 = sadd.s32 %s18, 1
    %s26 = ssub.s32 %s18, %s25
    %p27 = scmp.eq.s32.totalorder %s26, 0
    %s29 = sadd.s32 %s28, 1
    %s30 = scalar_select %p27, %s28, %s29
    %p33 = pneg %p27
    %p34 = scmp.eq.s32.totalorder %s18, 1
    %p35 = por %p33, %p34
    %p36 = scmp.ne.s32.totalorder %s28, %s31
    %p37 = scmp.eq.s32.totalorder %s18, 0
    %p38 = por %p36, %p37
    %p39 = scmp.ne.s32.totalorder %s28, %s31
    %p40 = scmp.eq.s32.totalorder %s23, 1
    %p41 = por %p39, %p40
    %p42 = scmp.ne.s32.totalorder %s31, %s32
    %p43 = scmp.eq.s32.totalorder %s23, 0
    %p44 = por %p42, %p43
    %p45 = scmp.ne.s32.totalorder %s31, %s32
    %p46 = scmp.eq.s32.totalorder %s24, 1
    %p47 = por %p45, %p46
    %p49 = scmp.ne.s32.totalorder %s32, %s48
    %p50 = scmp.eq.s32.totalorder %s24, 0
    %p51 = por %p49, %p50
    %s52 = ssub.s32 %s18, %s25
    %p53 = scmp.eq.s32.totalorder %s52, 0
    %s55 = sadd.s32 %s54, 1
    %s56 = scalar_select %p53, %s54, %s55
    %p59 = pneg %p53
    %p60 = scmp.eq.s32.totalorder %s18, 1
    %p61 = por %p59, %p60
    %p62 = scmp.ne.s32.totalorder %s54, %s57
    %p63 = scmp.eq.s32.totalorder %s18, 0
    %p64 = por %p62, %p63
    %p65 = scmp.ne.s32.totalorder %s54, %s57
    %p66 = scmp.eq.s32.totalorder %s23, 1
    %p67 = por %p65, %p66
    %p68 = scmp.ne.s32.totalorder %s57, %s58
    %p69 = scmp.eq.s32.totalorder %s23, 0
    %p70 = por %p68, %p69
    %p71 = scmp.ne.s32.totalorder %s57, %s58
    %p72 = scmp.eq.s32.totalorder %s24, 1
    %p73 = por %p71, %p72
    %p75 = scmp.ne.s32.totalorder %s58, %s74
    %p76 = scmp.eq.s32.totalorder %s24, 0
    %p77 = por %p75, %p76
    %s79 = sadd.s32 %s78, 1
    %p82 = scmp.eq.s32.totalorder %s18, 1
    %p83 = scmp.ne.s32.totalorder %s78, %s80
    %p84 = scmp.eq.s32.totalorder %s18, 0
    %p85 = por %p83, %p84
    %p86 = scmp.ne.s32.totalorder %s78, %s80
    %p87 = scmp.eq.s32.totalorder %s23, 1
    %p88 = por %p86, %p87
    %p89 = scmp.ne.s32.totalorder %s80, %s81
    %p90 = scmp.eq.s32.totalorder %s23, 0
    %p91 = por %p89, %p90
    %p92 = scmp.ne.s32.totalorder %s80, %s81
    %p93 = scmp.eq.s32.totalorder %s24, 1
    %p94 = por %p92, %p93
    %p96 = scmp.ne.s32.totalorder %s81, %s95
    %p97 = scmp.eq.s32.totalorder %s24, 0
    %p98 = por %p96, %p97
    %s100 = sadd.s32 %s99, 1
    %p103 = scmp.eq.s32.totalorder %s18, 1
    %p104 = scmp.ne.s32.totalorder %s99, %s101
    %p105 = scmp.eq.s32.totalorder %s18, 0
    %p106 = por %p104, %p105
    %p107 = scmp.ne.s32.totalorder %s99, %s101
    %p108 = scmp.eq.s32.totalorder %s23, 1
    %p109 = por %p107, %p108
    %p110 = scmp.ne.s32.totalorder %s101, %s102
    %p111 = scmp.eq.s32.totalorder %s23, 0
    %p112 = por %p110, %p111
    %p113 = scmp.ne.s32.totalorder %s101, %s102
    %p114 = scmp.eq.s32.totalorder %s24, 1
    %p115 = por %p113, %p114
    %p117 = scmp.ne.s32.totalorder %s102, %s116
    %p118 = scmp.eq.s32.totalorder %s24, 0
    %p119 = por %p117, %p118
    %s121 = sadd.s32 %s120, 1
    %p124 = scmp.eq.s32.totalorder %s18, 1
    %p125 = scmp.ne.s32.totalorder %s120, %s122
    %p126 = scmp.eq.s32.totalorder %s18, 0
    %p127 = por %p125, %p126
    %p128 = scmp.ne.s32.totalorder %s120, %s122
    %p129 = scmp.eq.s32.totalorder %s23, 1
    %p130 = por %p128, %p129
    %p131 = scmp.ne.s32.totalorder %s122, %s123
    %p132 = scmp.eq.s32.totalorder %s23, 0
    %p133 = por %p131, %p132
    %p134 = scmp.ne.s32.totalorder %s122, %s123
    %p135 = scmp.eq.s32.totalorder %s24, 1
    %p136 = por %p134, %p135
    %p138 = scmp.ne.s32.totalorder %s123, %s137
    %p139 = scmp.eq.s32.totalorder %s24, 0
    %p140 = por %p138, %p139
    %s142 = sadd.s32 %s141, 1
    %p145 = scmp.eq.s32.totalorder %s18, 1
    %p146 = scmp.ne.s32.totalorder %s141, %s143
    %p147 = scmp.eq.s32.totalorder %s18, 0
    %p148 = por %p146, %p147
    %p149 = scmp.ne.s32.totalorder %s141, %s143
    %p150 = scmp.eq.s32.totalorder %s23, 1
    %p151 = por %p149, %p150
    %p152 = scmp.ne.s32.totalorder %s143, %s144
    %p153 = scmp.eq.s32.totalorder %s23, 0
    %p154 = por %p152, %p153
    %p155 = scmp.ne.s32.totalorder %s143, %s144
    %p156 = scmp.eq.s32.totalorder %s24, 1
    %p157 = por %p155, %p156
    %p159 = scmp.ne.s32.totalorder %s144, %s158
    %p160 = scmp.eq.s32.totalorder %s24, 0
    %p161 = por %p159, %p160
    %s163 = sadd.s32 %s162, 1
    %p166 = scmp.eq.s32.totalorder %s18, 1
    %p167 = scmp.ne.s32.totalorder %s162, %s164
    %p168 = scmp.eq.s32.totalorder %s18, 0
    %p169 = por %p167, %p168
    %p170 = scmp.ne.s32.totalorder %s162, %s164
    %p171 = scmp.eq.s32.totalorder %s23, 1
    %p172 = por %p170, %p171
    %p173 = scmp.ne.s32.totalorder %s164, %s165
    %p174 = scmp.eq.s32.totalorder %s23, 0
    %p175 = por %p173, %p174
    %p176 = scmp.ne.s32.totalorder %s164, %s165
    %p177 = scmp.eq.s32.totalorder %s24, 1
    %p178 = por %p176, %p177
    %p180 = scmp.ne.s32.totalorder %s165, %s179
    %p181 = scmp.eq.s32.totalorder %s24, 0
    %p182 = por %p180, %p181
    %s184 = sadd.s32 %s183, 1
    %p187 = scmp.eq.s32.totalorder %s18, 1
    %p188 = scmp.ne.s32.totalorder %s183, %s185
    %p189 = scmp.eq.s32.totalorder %s18, 0
    %p190 = por %p188, %p189
    %p191 = scmp.ne.s32.totalorder %s183, %s185
    %p192 = scmp.eq.s32.totalorder %s23, 1
    %p193 = por %p191, %p192
    %p194 = scmp.ne.s32.totalorder %s185, %s186
    %p195 = scmp.eq.s32.totalorder %s23, 0
    %p196 = por %p194, %p195
    %p197 = scmp.ne.s32.totalorder %s185, %s186
    %p198 = scmp.eq.s32.totalorder %s24, 1
    %p199 = por %p197, %p198
    %p201 = scmp.ne.s32.totalorder %s186, %s200
    %p202 = scmp.eq.s32.totalorder %s24, 0
    %p203 = por %p201, %p202
    %s205 = sadd.s32 %s204, 1
    %p208 = scmp.eq.s32.totalorder %s18, 1
    %p209 = scmp.ne.s32.totalorder %s204, %s206
    %p210 = scmp.eq.s32.totalorder %s18, 0
    %p211 = por %p209, %p210
    %p212 = scmp.ne.s32.totalorder %s204, %s206
    %p213 = scmp.eq.s32.totalorder %s23, 1
    %p214 = por %p212, %p213
    %p215 = scmp.ne.s32.totalorder %s206, %s207
    %p216 = scmp.eq.s32.totalorder %s23, 0
    %p217 = por %p215, %p216
    %p218 = scmp.ne.s32.totalorder %s206, %s207
    %p219 = scmp.eq.s32.totalorder %s24, 1
    %p220 = por %p218, %p219
    %p222 = scmp.ne.s32.totalorder %s207, %s221
    %p223 = scmp.eq.s32.totalorder %s24, 0
    %p224 = por %p222, %p223
    %s226 = sadd.s32 %s225, 1
    %p229 = scmp.eq.s32.totalorder %s18, 1
    %p230 = scmp.ne.s32.totalorder %s225, %s227
    %p231 = scmp.eq.s32.totalorder %s18, 0
    %p232 = por %p230, %p231
    %p233 = scmp.ne.s32.totalorder %s225, %s227
    %p234 = scmp.eq.s32.totalorder %s23, 1
    %p235 = por %p233, %p234
    %p236 = scmp.ne.s32.totalorder %s227, %s228
    %p237 = scmp.eq.s32.totalorder %s23, 0
    %p238 = por %p236, %p237
    %p239 = scmp.ne.s32.totalorder %s227, %s228
    %p240 = scmp.eq.s32.totalorder %s24, 1
    %p241 = por %p239, %p240
    %p243 = scmp.ne.s32.totalorder %s228, %s242
    %p244 = scmp.eq.s32.totalorder %s24, 0
    %p245 = por %p243, %p244
    %s246 = ssub.s32 %s18, %s25
    %p247 = scmp.eq.s32.totalorder %s246, 0
    %s249 = sadd.s32 %s248, 1
    %s250 = scalar_select %p247, %s248, %s249
    %p253 = pneg %p247
    %p254 = scmp.eq.s32.totalorder %s18, 1
    %p255 = por %p253, %p254
    %p256 = scmp.ne.s32.totalorder %s248, %s251
    %p257 = scmp.eq.s32.totalorder %s18, 0
    %p258 = por %p256, %p257
    %p259 = scmp.ne.s32.totalorder %s248, %s251
    %p260 = scmp.eq.s32.totalorder %s23, 1
    %p261 = por %p259, %p260
    %p262 = scmp.ne.s32.totalorder %s251, %s252
    %p263 = scmp.eq.s32.totalorder %s23, 0
    %p264 = por %p262, %p263
    %p265 = scmp.ne.s32.totalorder %s251, %s252
    %p266 = scmp.eq.s32.totalorder %s24, 1
    %p267 = por %p265, %p266
    %p269 = scmp.ne.s32.totalorder %s252, %s268
    %p270 = scmp.eq.s32.totalorder %s24, 0
    %p271 = por %p269, %p270
    %s272 = ssub.s32 %s18, %s25
    %p273 = scmp.eq.s32.totalorder %s272, 0
    %s275 = sadd.s32 %s274, 1
    %s276 = scalar_select %p273, %s274, %s275
    %p279 = pneg %p273
    %p280 = scmp.eq.s32.totalorder %s18, 1
    %p281 = por %p279, %p280
    %p282 = scmp.ne.s32.totalorder %s274, %s277
    %p283 = scmp.eq.s32.totalorder %s18, 0
    %p284 = por %p282, %p283
    %p285 = scmp.ne.s32.totalorder %s274, %s277
    %p286 = scmp.eq.s32.totalorder %s23, 1
    %p287 = por %p285, %p286
    %p288 = scmp.ne.s32.totalorder %s277, %s278
    %p289 = scmp.eq.s32.totalorder %s23, 0
    %p290 = por %p288, %p289
    %p291 = scmp.ne.s32.totalorder %s277, %s278
    %p292 = scmp.eq.s32.totalorder %s24, 1
    %p293 = por %p291, %p292
    %p295 = scmp.ne.s32.totalorder %s278, %s294
    %p296 = scmp.eq.s32.totalorder %s24, 0
    %p297 = por %p295, %p296
    %p298 = scmp.le.s32.totalorder 1, %s18
    %p299 = scmp.lt.s32.totalorder %s18, 3
    %p300 = pnand %p298, %p299
    %p301 = pneg %p300
    // Predicated region
    $region9: #{vae_forward.1} parent=5 // pred_check
      _
    $region10: #{vae_forward.1} parent=5 // pred_check_branch
      %303 = sbr.rel (%p300) target = $region12
    $region11: #{vae_forward.1} parent=5 // pred_region
      %s304 = ssub.s32 %s18, 1
      // Predicated region
      $region13: #{vae_forward.1} parent=11 // pred_check
        %p305 = pneg %p91
      $region14: #{vae_forward.1} parent=11 // pred_check_branch
        %307 = sbr.rel (%p305) target = $region16
      $region15: #{vae_forward.1} parent=11 // pred_region
        _
      $region16: #{vae_forward.1} parent=11 // pred_fallthru
        _
      // Predicated region
      $region17: #{vae_forward.1} parent=11 // pred_check
        %p308 = pneg %p112
      $region18: #{vae_forward.1} parent=11 // pred_check_branch
        %310 = sbr.rel (%p308) target = $region20
      $region19: #{vae_forward.1} parent=11 // pred_region
        _
      $region20: #{vae_forward.1} parent=11 // pred_fallthru
        _
      // Predicated region
      $region21: #{vae_forward.1} parent=11 // pred_check
        %p311 = pneg %p133
      $region22: #{vae_forward.1} parent=11 // pred_check_branch
        %313 = sbr.rel (%p311) target = $region24
      $region23: #{vae_forward.1} parent=11 // pred_region
        _
      $region24: #{vae_forward.1} parent=11 // pred_fallthru
        _
      // Predicated region
      $region25: #{vae_forward.1} parent=11 // pred_check
        %p314 = pneg %p154
      $region26: #{vae_forward.1} parent=11 // pred_check_branch
        %316 = sbr.rel (%p314) target = $region28
      $region27: #{vae_forward.1} parent=11 // pred_region
        _
      $region28: #{vae_forward.1} parent=11 // pred_fallthru
        _
      // Predicated region
      $region29: #{vae_forward.1} parent=11 // pred_check
        %p317 = pneg %p175
      $region30: #{vae_forward.1} parent=11 // pred_check_branch
        %319 = sbr.rel (%p317) target = $region32
      $region31: #{vae_forward.1} parent=11 // pred_region
        _
      $region32: #{vae_forward.1} parent=11 // pred_fallthru
        _
      // Predicated region
      $region33: #{vae_forward.1} parent=11 // pred_check
        %p320 = pneg %p196
      $region34: #{vae_forward.1} parent=11 // pred_check_branch
        %322 = sbr.rel (%p320) target = $region36
      $region35: #{vae_forward.1} parent=11 // pred_region
        _
      $region36: #{vae_forward.1} parent=11 // pred_fallthru
        _
      // Predicated region
      $region37: #{vae_forward.1} parent=11 // pred_check
        %p323 = pneg %p217
      $region38: #{vae_forward.1} parent=11 // pred_check_branch
        %325 = sbr.rel (%p323) target = $region40
      $region39: #{vae_forward.1} parent=11 // pred_region
        _
      $region40: #{vae_forward.1} parent=11 // pred_fallthru
        _
      // Predicated region
      $region41: #{vae_forward.1} parent=11 // pred_check
        %p326 = pneg %p238
      $region42: #{vae_forward.1} parent=11 // pred_check_branch
        %328 = sbr.rel (%p326) target = $region44
      $region43: #{vae_forward.1} parent=11 // pred_region
        _
      $region44: #{vae_forward.1} parent=11 // pred_fallthru
        _
    $region12: #{vae_forward.1} parent=5 // pred_fallthru
      _
    %p329 = scmp.lt.s32.totalorder %s18, 2
    // Predicated region
    $region45: #{vae_forward.1} parent=5 // pred_check
      %p330 = pneg %p329
    $region46: #{vae_forward.1} parent=5 // pred_check_branch
      %332 = sbr.rel (%p330) target = $region48
    $region47: #{vae_forward.1} parent=5 // pred_region
      // Predicated region
      $region49: #{vae_forward.1} parent=47 // pred_check
        %p333 = pneg %p38
      $region50: #{vae_forward.1} parent=47 // pred_check_branch
        %335 = sbr.rel (%p333) target = $region52
      $region51: #{vae_forward.1} parent=47 // pred_region
        %s336 = smul.u32 4, %s18
        %p337 = scmp.lt.s32.totalorder %s336, 7
        %s338 = scalar_select %p337, %s336, 7
        %s339 = smul.addr %s338, 7
        %s340 = smul.addr %s339, 4
        %s341 = scalar_lea.vmem %s0, %s340
        %s342 = smul.u32 4, %s18
      $region52: #{vae_forward.1} parent=47 // pred_fallthru
        _
      // Predicated region
      $region53: #{vae_forward.1} parent=47 // pred_check
        %p343 = pneg %p64
      $region54: #{vae_forward.1} parent=47 // pred_check_branch
        %345 = sbr.rel (%p343) target = $region56
      $region55: #{vae_forward.1} parent=47 // pred_region
        %s346 = smul.u32 4, %s18
        %p347 = scmp.lt.s32.totalorder %s346, 7
        %s348 = scalar_select %p347, %s346, 7
        %s349 = smul.addr %s348, 8
        %s350 = scalar_lea.vmem %s1, %s349
        %s351 = smul.u32 4, %s18
      $region56: #{vae_forward.1} parent=47 // pred_fallthru
        _
    $region48: #{vae_forward.1} parent=5 // pred_fallthru
      _
    %p352 = scmp.le.s32.totalorder 1, %s18
    %p353 = scmp.lt.s32.totalorder %s18, 3
    %p354 = pnand %p352, %p353
    %p355 = pneg %p354
    // Predicated region
    $region57: #{vae_forward.1} parent=5 // pred_check
      _
    $region58: #{vae_forward.1} parent=5 // pred_check_branch
      %357 = sbr.rel (%p354) target = $region60
    $region59: #{vae_forward.1} parent=5 // pred_region
      %s358 = ssub.s32 %s18, 1
      %s359 = smul.u32 4, %s23
      %p360 = scmp.lt.s32.totalorder %s359, 7
      %s361 = scalar_select %p360, %s359, 7
      %s362 = smul.addr %s361, 7
      %s363 = smul.addr %s362, 4
      %s364 = scalar_lea.vmem %s0, %s363
      %p365 = pneg %p44
      %p366 = pneg %p41
      %s367 = smul.u32 4, %s23
      %p368 = scmp.lt.s32.totalorder %s367, 7
      %s369 = scalar_select %p368, %s367, 7
      %s370 = smul.addr %s369, 8
      %s371 = scalar_lea.vmem %s1, %s370
      %p372 = pneg %p70
      %p373 = pneg %p67
      %p374 = pneg %p91
      %p375 = pneg %p88
      %p376 = pneg %p112
      %p377 = pneg %p109
      %p378 = pneg %p133
      %p379 = pneg %p130
      %p380 = pneg %p154
      %p381 = pneg %p151
      %p382 = pneg %p175
      %p383 = pneg %p172
      %p384 = pneg %p196
      %p385 = pneg %p193
      %p386 = pneg %p217
      %p387 = pneg %p214
      %p388 = pneg %p238
      %p389 = pneg %p235
      %p390 = pneg %p264
      %p391 = pneg %p261
      %s392 = smul.u32 4, %s23
      %p393 = scmp.lt.s32.totalorder %s392, 7
      %s394 = scalar_select %p393, %s392, 7
      %s395 = smul.addr %s394, 7
      %s396 = smul.addr %s395, 4
      %s397 = scalar_lea.vmem %s10, %s396
      %p398 = pneg %p290
      %p399 = pneg %p287
      %s400 = smul.u32 4, %s23
      %p401 = scmp.lt.s32.totalorder %s400, 7
      %s402 = scalar_select %p401, %s400, 7
      %s403 = smul.addr %s402, 2
      %s404 = smul.addr %s403, 8
      %s405 = scalar_lea.vmem %s11, %s404
      %s406 = smul.u32 4, %s23
      %p407 = scmp.lt.s32.totalorder %s406, 7
      %s408 = scalar_select %p407, %s406, 7
      %s409 = smul.addr %s408, 7
      %s410 = smul.addr %s409, 4
      %s411 = scalar_lea.vmem %s0, %s410
      %s412 = smul.u32 4, %s23
      %s413 = smul.u32 4, %s23
      %p414 = scmp.lt.s32.totalorder %s413, 7
      %s415 = scalar_select %p414, %s413, 7
      %s416 = smul.addr %s415, 8
      %s417 = scalar_lea.vmem %s1, %s416
      %s418 = smul.u32 4, %s23
      %s419 = smul.u32 4, %s23
      %p420 = scmp.lt.s32.totalorder %s419, 7
      %s421 = scalar_select %p420, %s419, 7
      %s422 = smul.addr %s421, 7
      %s423 = smul.addr %s422, 4
      %s424 = scalar_lea.vmem %s10, %s423
      %s425 = smul.u32 4, %s23
      %s426 = smul.u32 4, %s23
      %p427 = scmp.lt.s32.totalorder %s426, 7
      %s428 = scalar_select %p427, %s426, 7
      %s429 = smul.addr %s428, 2
      %s430 = smul.addr %s429, 8
      %s431 = scalar_lea.vmem %s11, %s430
      %s432 = smul.u32 4, %s23
      %v434 = vld [vmem:[%s411] sm:$0xff]
      %v435 = vld [vmem:[%s411 + $0x8] sm:$0xff]
      %v436 = vld [vmem:[%s411 + $0x10] sm:$0xff]
      %v437 = vld [vmem:[%s411 + $0x18] sm:$0xf]
      %v438 = vld [vmem:[%s411 + $0x1c] sm:$0xff]
      %v439 = vld [vmem:[%s411 + $0x24] sm:$0xff]
      %v440 = vld [vmem:[%s411 + $0x2c] sm:$0xff]
      %v441 = vld [vmem:[%s411 + $0x34] sm:$0xf]
      %v442 = vld [vmem:[%s411 + $0x38] sm:$0xff]
      %v443 = vld [vmem:[%s411 + $0x40] sm:$0xff]
      %v444 = vld [vmem:[%s411 + $0x48] sm:$0xff]
      %v445 = vld [vmem:[%s411 + $0x50] sm:$0xf]
      %v446 = vld [vmem:[%s411 + $0x54] sm:$0xff]
      %v447 = vld [vmem:[%s411 + $0x5c] sm:$0xff]
      %v448 = vld [vmem:[%s411 + $0x64] sm:$0xff]
      %v449 = vld [vmem:[%s411 + $0x6c] sm:$0xf]
      %v450 = vld [vmem:[%s2] sm:$0xff]
      %v451 = vld [vmem:[%s2 + $0x8] sm:$0xff]
      %v452 = vld [vmem:[%s2 + $0x10] sm:$0xff]
      %v453 = vld [vmem:[%s2 + $0x18] sm:$0xff]
      %v454 = vld [vmem:[%s2 + $0x20] sm:$0xff]
      %v455 = vld [vmem:[%s2 + $0x28] sm:$0xff]
      %v456 = vld [vmem:[%s2 + $0x30] sm:$0xff]
      %v457 = vld [vmem:[%s2 + $0x38] sm:$0xff]
      %v458 = vld [vmem:[%s2 + $0x40] sm:$0xff]
      %v459 = vld [vmem:[%s2 + $0x48] sm:$0xff]
      %v460 = vld [vmem:[%s2 + $0x50] sm:$0xff]
      %v461 = vld [vmem:[%s2 + $0x58] sm:$0xff]
      %v462 = vld [vmem:[%s2 + $0x60] sm:$0xff]
      %v463 = vld [vmem:[%s2 + $0x68] sm:$0xff]
      %v464 = vld [vmem:[%s2 + $0x70] sm:$0xff]
      %v465 = vld [vmem:[%s2 + $0x78] sm:$0xff]
      %v466 = vld [vmem:[%s2 + $0x80] sm:$0xff]
      %v467 = vld [vmem:[%s2 + $0x88] sm:$0xff]
      %v468 = vld [vmem:[%s2 + $0x90] sm:$0xff]
      %v469 = vld [vmem:[%s2 + $0x98] sm:$0xff]
      %v470 = vld [vmem:[%s2 + $0xa0] sm:$0xff]
      %v471 = vld [vmem:[%s2 + $0xa8] sm:$0xff]
      %v472 = vld [vmem:[%s2 + $0xb0] sm:$0xff]
      %v473 = vld [vmem:[%s2 + $0xb8] sm:$0xff]
      %v474 = vld [vmem:[%s2 + $0xc0] sm:$0xff]
      %v475 = vld [vmem:[%s2 + $0xc8] sm:$0xff]
      %v476 = vld [vmem:[%s2 + $0xd0] sm:$0xff]
      %v477 = vld [vmem:[%s2 + $0xd8] sm:$0xff]
      %v478 = vld [vmem:[%s2 + $0xe0] sm:$0xff]
      %v479 = vld [vmem:[%s2 + $0xe8] sm:$0xff]
      %v480 = vld [vmem:[%s2 + $0xf0] sm:$0xff]
      %v481 = vld [vmem:[%s2 + $0xf8] sm:$0xff]
      %v482 = vld [vmem:[%s2 + $0x100] sm:$0xff]
      %v483 = vld [vmem:[%s2 + $0x108] sm:$0xff]
      %v484 = vld [vmem:[%s2 + $0x110] sm:$0xff]
      %v485 = vld [vmem:[%s2 + $0x118] sm:$0xff]
      %v486 = vld [vmem:[%s2 + $0x120] sm:$0xff]
      %v487 = vld [vmem:[%s2 + $0x128] sm:$0xff]
      %v488 = vld [vmem:[%s2 + $0x130] sm:$0xff]
      %v489 = vld [vmem:[%s2 + $0x138] sm:$0xff]
      %v490 = vld [vmem:[%s2 + $0x140] sm:$0xff]
      %v491 = vld [vmem:[%s2 + $0x148] sm:$0xff]
      %v492 = vld [vmem:[%s2 + $0x150] sm:$0xff]
      %v493 = vld [vmem:[%s2 + $0x158] sm:$0xff]
      %v494 = vld [vmem:[%s2 + $0x160] sm:$0xff]
      %v495 = vld [vmem:[%s2 + $0x168] sm:$0xff]
      %v496 = vld [vmem:[%s2 + $0x170] sm:$0xff]
      %v497 = vld [vmem:[%s2 + $0x178] sm:$0xff]
      %v498 = vld [vmem:[%s2 + $0x180] sm:$0xff]
      %v499 = vld [vmem:[%s2 + $0x188] sm:$0xff]
      %v500 = vld [vmem:[%s2 + $0x190] sm:$0xff]
      %v501 = vld [vmem:[%s2 + $0x198] sm:$0xff]
      %v502 = vld [vmem:[%s2 + $0x1a0] sm:$0xff]
      %v503 = vld [vmem:[%s2 + $0x1a8] sm:$0xff]
      %v504 = vld [vmem:[%s2 + $0x1b0] sm:$0xff]
      %v505 = vld [vmem:[%s2 + $0x1b8] sm:$0xff]
      %v506 = vld [vmem:[%s2 + $0x1c0] sm:$0xff]
      %v507 = vld [vmem:[%s2 + $0x1c8] sm:$0xff]
      %v508 = vld [vmem:[%s2 + $0x1d0] sm:$0xff]
      %v509 = vld [vmem:[%s2 + $0x1d8] sm:$0xff]
      %v510 = vld [vmem:[%s2 + $0x1e0] sm:$0xff]
      %v511 = vld [vmem:[%s2 + $0x1e8] sm:$0xff]
      %v512 = vld [vmem:[%s2 + $0x1f0] sm:$0xff]
      %v513 = vld [vmem:[%s2 + $0x1f8] sm:$0xff]
      %v514 = vld [vmem:[%s2 + $0x200] sm:$0xff]
      %v515 = vld [vmem:[%s2 + $0x208] sm:$0xff]
      %v516 = vld [vmem:[%s2 + $0x210] sm:$0xff]
      %v517 = vld [vmem:[%s2 + $0x218] sm:$0xff]
      %v518 = vld [vmem:[%s2 + $0x220] sm:$0xff]
      %v519 = vld [vmem:[%s2 + $0x228] sm:$0xff]
      %v520 = vld [vmem:[%s2 + $0x230] sm:$0xff]
      %v521 = vld [vmem:[%s2 + $0x238] sm:$0xff]
      %v522 = vld [vmem:[%s2 + $0x240] sm:$0xff]
      %v523 = vld [vmem:[%s2 + $0x248] sm:$0xff]
      %v524 = vld [vmem:[%s2 + $0x250] sm:$0xff]
      %v525 = vld [vmem:[%s2 + $0x258] sm:$0xff]
      %v526 = vld [vmem:[%s2 + $0x260] sm:$0xff]
      %v527 = vld [vmem:[%s2 + $0x268] sm:$0xff]
      %v528 = vld [vmem:[%s2 + $0x270] sm:$0xff]
      %v529 = vld [vmem:[%s2 + $0x278] sm:$0xff]
      %v530 = vld [vmem:[%s2 + $0x280] sm:$0xff]
      %v531 = vld [vmem:[%s2 + $0x288] sm:$0xff]
      %v532 = vld [vmem:[%s2 + $0x290] sm:$0xff]
      %v533 = vld [vmem:[%s2 + $0x298] sm:$0xff]
      %v534 = vld [vmem:[%s2 + $0x2a0] sm:$0xff]
      %v535 = vld [vmem:[%s2 + $0x2a8] sm:$0xff]
      %v536 = vld [vmem:[%s2 + $0x2b0] sm:$0xff]
      %v537 = vld [vmem:[%s2 + $0x2b8] sm:$0xff]
      %v538 = vld [vmem:[%s2 + $0x2c0] sm:$0xff]
      %v539 = vld [vmem:[%s2 + $0x2c8] sm:$0xff]
      %v540 = vld [vmem:[%s2 + $0x2d0] sm:$0xff]
      %v541 = vld [vmem:[%s2 + $0x2d8] sm:$0xff]
      %v542 = vld [vmem:[%s2 + $0x2e0] sm:$0xff]
      %v543 = vld [vmem:[%s2 + $0x2e8] sm:$0xff]
      %v544 = vld [vmem:[%s2 + $0x2f0] sm:$0xff]
      %v545 = vld [vmem:[%s2 + $0x2f8] sm:$0xff]
      %v546 = vld [vmem:[%s2 + $0x300] sm:$0xff]
      %v547 = vld [vmem:[%s2 + $0x308] sm:$0xff]
      %v548 = vld [vmem:[%s2 + $0x310] sm:$0xff]
      %v549 = vld [vmem:[%s2 + $0x318] sm:$0xff]
      %v550 = vld [vmem:[%s2 + $0x320] sm:$0xff]
      %v551 = vld [vmem:[%s2 + $0x328] sm:$0xff]
      %v552 = vld [vmem:[%s2 + $0x330] sm:$0xff]
      %v553 = vld [vmem:[%s2 + $0x338] sm:$0xff]
      %v554 = vld [vmem:[%s2 + $0x340] sm:$0xff]
      %v555 = vld [vmem:[%s2 + $0x348] sm:$0xff]
      %v556 = vld [vmem:[%s2 + $0x350] sm:$0xff]
      %v557 = vld [vmem:[%s2 + $0x358] sm:$0xff]
      %v558 = vld [vmem:[%s2 + $0x360] sm:$0xff]
      %v559 = vld [vmem:[%s2 + $0x368] sm:$0xff]
      %v560 = vld [vmem:[%s2 + $0x370] sm:$0xff]
      %v561 = vld [vmem:[%s2 + $0x378] sm:$0xff]
      %v562 = vld [vmem:[%s2 + $0x380] sm:$0xff]
      %v563 = vld [vmem:[%s2 + $0x388] sm:$0xff]
      %v564 = vld [vmem:[%s2 + $0x390] sm:$0xff]
      %v565 = vld [vmem:[%s2 + $0x398] sm:$0xff]
      %v566 = vld [vmem:[%s2 + $0x3a0] sm:$0xff]
      %v567 = vld [vmem:[%s2 + $0x3a8] sm:$0xff]
      %v568 = vld [vmem:[%s2 + $0x3b0] sm:$0xff]
      %v569 = vld [vmem:[%s2 + $0x3b8] sm:$0xff]
      %v570 = vld [vmem:[%s2 + $0x3c0] sm:$0xff]
      %v571 = vld [vmem:[%s2 + $0x3c8] sm:$0xff]
      %v572 = vld [vmem:[%s2 + $0x3d0] sm:$0xff]
      %v573 = vld [vmem:[%s2 + $0x3d8] sm:$0xff]
      %v574 = vld [vmem:[%s2 + $0x3e0] sm:$0xff]
      %v575 = vld [vmem:[%s2 + $0x3e8] sm:$0xff]
      %v576 = vld [vmem:[%s2 + $0x3f0] sm:$0xff]
      %v577 = vld [vmem:[%s2 + $0x3f8] sm:$0xff]
      %v578 = vld [vmem:[%s2 + $0x400] sm:$0xff]
      %v579 = vld [vmem:[%s2 + $0x408] sm:$0xff]
      %v580 = vld [vmem:[%s2 + $0x410] sm:$0xff]
      %v581 = vld [vmem:[%s2 + $0x418] sm:$0xff]
      %v582 = vld [vmem:[%s2 + $0x420] sm:$0xff]
      %v583 = vld [vmem:[%s2 + $0x428] sm:$0xff]
      %v584 = vld [vmem:[%s2 + $0x430] sm:$0xff]
      %v585 = vld [vmem:[%s2 + $0x438] sm:$0xff]
      %v586 = vld [vmem:[%s2 + $0x440] sm:$0xff]
      %v587 = vld [vmem:[%s2 + $0x448] sm:$0xff]
      %v588 = vld [vmem:[%s2 + $0x450] sm:$0xff]
      %v589 = vld [vmem:[%s2 + $0x458] sm:$0xff]
      %v590 = vld [vmem:[%s2 + $0x460] sm:$0xff]
      %v591 = vld [vmem:[%s2 + $0x468] sm:$0xff]
      %v592 = vld [vmem:[%s2 + $0x470] sm:$0xff]
      %v593 = vld [vmem:[%s2 + $0x478] sm:$0xff]
      %v594 = vld [vmem:[%s2 + $0x480] sm:$0xff]
      %v595 = vld [vmem:[%s2 + $0x488] sm:$0xff]
      %v596 = vld [vmem:[%s2 + $0x490] sm:$0xff]
      %v597 = vld [vmem:[%s2 + $0x498] sm:$0xff]
      %v598 = vld [vmem:[%s2 + $0x4a0] sm:$0xff]
      %v599 = vld [vmem:[%s2 + $0x4a8] sm:$0xff]
      %v600 = vld [vmem:[%s2 + $0x4b0] sm:$0xff]
      %v601 = vld [vmem:[%s2 + $0x4b8] sm:$0xff]
      %v602 = vld [vmem:[%s2 + $0x4c0] sm:$0xff]
      %v603 = vld [vmem:[%s2 + $0x4c8] sm:$0xff]
      %v604 = vld [vmem:[%s2 + $0x4d0] sm:$0xff]
      %v605 = vld [vmem:[%s2 + $0x4d8] sm:$0xff]
      %v606 = vld [vmem:[%s2 + $0x4e0] sm:$0xff]
      %v607 = vld [vmem:[%s2 + $0x4e8] sm:$0xff]
      %v608 = vld [vmem:[%s2 + $0x4f0] sm:$0xff]
      %v609 = vld [vmem:[%s2 + $0x4f8] sm:$0xff]
      %v610 = vld [vmem:[%s2 + $0x500] sm:$0xff]
      %v611 = vld [vmem:[%s2 + $0x508] sm:$0xff]
      %v612 = vld [vmem:[%s2 + $0x510] sm:$0xff]
      %v613 = vld [vmem:[%s2 + $0x518] sm:$0xff]
      %v614 = vld [vmem:[%s2 + $0x520] sm:$0xff]
      %v615 = vld [vmem:[%s2 + $0x528] sm:$0xff]
      %v616 = vld [vmem:[%s2 + $0x530] sm:$0xff]
      %v617 = vld [vmem:[%s2 + $0x538] sm:$0xff]
      %v618 = vld [vmem:[%s2 + $0x540] sm:$0xff]
      %v619 = vld [vmem:[%s2 + $0x548] sm:$0xff]
      %v620 = vld [vmem:[%s2 + $0x550] sm:$0xff]
      %v621 = vld [vmem:[%s2 + $0x558] sm:$0xff]
      %v622 = vld [vmem:[%s2 + $0x560] sm:$0xff]
      %v623 = vld [vmem:[%s2 + $0x568] sm:$0xff]
      %v624 = vld [vmem:[%s2 + $0x570] sm:$0xff]
      %v625 = vld [vmem:[%s2 + $0x578] sm:$0xff]
      %v626 = vld [vmem:[%s2 + $0x580] sm:$0xff]
      %v627 = vld [vmem:[%s2 + $0x588] sm:$0xff]
      %v628 = vld [vmem:[%s2 + $0x590] sm:$0xff]
      %v629 = vld [vmem:[%s2 + $0x598] sm:$0xff]
      %v630 = vld [vmem:[%s2 + $0x5a0] sm:$0xff]
      %v631 = vld [vmem:[%s2 + $0x5a8] sm:$0xff]
      %v632 = vld [vmem:[%s2 + $0x5b0] sm:$0xff]
      %v633 = vld [vmem:[%s2 + $0x5b8] sm:$0xff]
      %v634 = vld [vmem:[%s2 + $0x5c0] sm:$0xff]
      %v635 = vld [vmem:[%s2 + $0x5c8] sm:$0xff]
      %v636 = vld [vmem:[%s2 + $0x5d0] sm:$0xff]
      %v637 = vld [vmem:[%s2 + $0x5d8] sm:$0xff]
      %v638 = vld [vmem:[%s2 + $0x5e0] sm:$0xff]
      %v639 = vld [vmem:[%s2 + $0x5e8] sm:$0xff]
      %v640 = vld [vmem:[%s2 + $0x5f0] sm:$0xff]
      %v641 = vld [vmem:[%s2 + $0x5f8] sm:$0xff]
      %v642 = vld [vmem:[%s2 + $0x600] sm:$0xff]
      %v643 = vld [vmem:[%s2 + $0x608] sm:$0xff]
      %v644 = vld [vmem:[%s2 + $0x610] sm:$0xff]
      %v645 = vld [vmem:[%s2 + $0x618] sm:$0xff]
      %v646 = vld [vmem:[%s3] sm:$0xf]
      %v648 = vlaneseq
      %v649 = vshrl.u32 %v648, 7
      %v650 = vsub.s32 0, %v649
      %v651 = vrot.slane %v646, %v650
      %v652 = vlaneseq
      %v653 = vshrl.u32 %v652, 7
      %v654 = vsub.s32 1, %v653
      %v655 = vrot.slane %v646, %v654
      %v656 = vlaneseq
      %v657 = vshrl.u32 %v656, 7
      %v658 = vsub.s32 2, %v657
      %v659 = vrot.slane %v646, %v658
      %v660 = vlaneseq
      %v661 = vshrl.u32 %v660, 7
      %v662 = vsub.s32 3, %v661
      %v663 = vrot.slane %v646, %v662
      %v684 = vunpack.c.l.b16 %v434
      %v685 = vunpack.c.h.b16 %v434
      %v686 = vunpack.c.l.b16 %v435
      %v687 = vunpack.c.h.b16 %v435
      %v688 = vunpack.c.l.b16 %v436
      %v689 = vunpack.c.h.b16 %v436
      %v690 = vunpack.c.l.b16 %v437
      %v691 = vunpack.c.l.b16 %v438
      %v692 = vunpack.c.h.b16 %v438
      %v693 = vunpack.c.l.b16 %v439
      %v694 = vunpack.c.h.b16 %v439
      %v695 = vunpack.c.l.b16 %v440
      %v696 = vunpack.c.h.b16 %v440
      %v697 = vunpack.c.l.b16 %v441
      %v698 = vunpack.c.l.b16 %v442
      %v699 = vunpack.c.h.b16 %v442
      %v700 = vunpack.c.l.b16 %v443
      %v701 = vunpack.c.h.b16 %v443
      %v702 = vunpack.c.l.b16 %v444
      %v703 = vunpack.c.h.b16 %v444
      %v704 = vunpack.c.l.b16 %v445
      %v705 = vunpack.c.l.b16 %v446
      %v706 = vunpack.c.h.b16 %v446
      %v707 = vunpack.c.l.b16 %v447
      %v708 = vunpack.c.h.b16 %v447
      %v709 = vunpack.c.l.b16 %v448
      %v710 = vunpack.c.h.b16 %v448
      %v711 = vunpack.c.l.b16 %v449
      %v712 = vpack.c.b16 %v691, %v684
      %v713 = vpack.c.b16 %v692, %v685
      %v714 = vpack.c.b16 %v693, %v686
      %v715 = vpack.c.b16 %v694, %v687
      %v716 = vpack.c.b16 %v695, %v688
      %v717 = vpack.c.b16 %v696, %v689
      %v718 = vpack.c.b16 %v697, %v690
      %v719 = vpack.c.b16 %v705, %v698
      %v720 = vpack.c.b16 %v706, %v699
      %v721 = vpack.c.b16 %v707, %v700
      %v722 = vpack.c.b16 %v708, %v701
      %v723 = vpack.c.b16 %v709, %v702
      %v724 = vpack.c.b16 %v710, %v703
      %v725 = vpack.c.b16 %v711, %v704
      %v934 = vunpack.c.l.b16 %v450
      %v935 = vunpack.c.h.b16 %v450
      %v936 = vunpack.c.l.b16 %v451
      %v937 = vunpack.c.h.b16 %v451
      %v938 = vunpack.c.l.b16 %v452
      %v939 = vunpack.c.h.b16 %v452
      %v940 = vunpack.c.l.b16 %v453
      %v941 = vunpack.c.h.b16 %v453
      %v942 = vunpack.c.l.b16 %v454
      %v943 = vunpack.c.h.b16 %v454
      %v944 = vunpack.c.l.b16 %v455
      %v945 = vunpack.c.h.b16 %v455
      %v946 = vunpack.c.l.b16 %v456
      %v947 = vunpack.c.h.b16 %v456
      %v948 = vunpack.c.l.b16 %v457
      %v949 = vunpack.c.h.b16 %v457
      %v950 = vunpack.c.l.b16 %v458
      %v951 = vunpack.c.h.b16 %v458
      %v952 = vunpack.c.l.b16 %v459
      %v953 = vunpack.c.h.b16 %v459
      %v954 = vunpack.c.l.b16 %v460
      %v955 = vunpack.c.h.b16 %v460
      %v956 = vunpack.c.l.b16 %v461
      %v957 = vunpack.c.h.b16 %v461
      %v958 = vunpack.c.l.b16 %v462
      %v959 = vunpack.c.h.b16 %v462
      %v960 = vunpack.c.l.b16 %v463
      %v961 = vunpack.c.h.b16 %v463
      %v962 = vunpack.c.l.b16 %v464
      %v963 = vunpack.c.h.b16 %v464
      %v964 = vunpack.c.l.b16 %v465
      %v965 = vunpack.c.h.b16 %v465
      %v966 = vunpack.c.l.b16 %v466
      %v967 = vunpack.c.h.b16 %v466
      %v968 = vunpack.c.l.b16 %v467
      %v969 = vunpack.c.h.b16 %v467
      %v970 = vunpack.c.l.b16 %v468
      %v971 = vunpack.c.h.b16 %v468
      %v972 = vunpack.c.l.b16 %v469
      %v973 = vunpack.c.h.b16 %v469
      %v974 = vunpack.c.l.b16 %v470
      %v975 = vunpack.c.h.b16 %v470
      %v976 = vunpack.c.l.b16 %v471
      %v977 = vunpack.c.h.b16 %v471
      %v978 = vunpack.c.l.b16 %v472
      %v979 = vunpack.c.h.b16 %v472
      %v980 = vunpack.c.l.b16 %v473
      %v981 = vunpack.c.h.b16 %v473
      %v982 = vunpack.c.l.b16 %v474
      %v983 = vunpack.c.h.b16 %v474
      %v984 = vunpack.c.l.b16 %v475
      %v985 = vunpack.c.h.b16 %v475
      %v986 = vunpack.c.l.b16 %v476
      %v987 = vunpack.c.h.b16 %v476
      %v988 = vunpack.c.l.b16 %v477
      %v989 = vunpack.c.h.b16 %v477
      %v990 = vunpack.c.l.b16 %v478
      %v991 = vunpack.c.h.b16 %v478
      %v992 = vunpack.c.l.b16 %v479
      %v993 = vunpack.c.h.b16 %v479
      %v994 = vunpack.c.l.b16 %v480
      %v995 = vunpack.c.h.b16 %v480
      %v996 = vunpack.c.l.b16 %v481
      %v997 = vunpack.c.h.b16 %v481
      %v998 = vunpack.c.l.b16 %v482
      %v999 = vunpack.c.h.b16 %v482
      %v1000 = vunpack.c.l.b16 %v483
      %v1001 = vunpack.c.h.b16 %v483
      %v1002 = vunpack.c.l.b16 %v484
      %v1003 = vunpack.c.h.b16 %v484
      %v1004 = vunpack.c.l.b16 %v485
      %v1005 = vunpack.c.h.b16 %v485
      %v1006 = vunpack.c.l.b16 %v486
      %v1007 = vunpack.c.h.b16 %v486
      %v1008 = vunpack.c.l.b16 %v487
      %v1009 = vunpack.c.h.b16 %v487
      %v1010 = vunpack.c.l.b16 %v488
      %v1011 = vunpack.c.h.b16 %v488
      %v1012 = vunpack.c.l.b16 %v489
      %v1013 = vunpack.c.h.b16 %v489
      %v1014 = vunpack.c.l.b16 %v490
      %v1015 = vunpack.c.h.b16 %v490
      %v1016 = vunpack.c.l.b16 %v491
      %v1017 = vunpack.c.h.b16 %v491
      %v1018 = vunpack.c.l.b16 %v492
      %v1019 = vunpack.c.h.b16 %v492
      %v1020 = vunpack.c.l.b16 %v493
      %v1021 = vunpack.c.h.b16 %v493
      %v1022 = vunpack.c.l.b16 %v494
      %v1023 = vunpack.c.h.b16 %v494
      %v1024 = vunpack.c.l.b16 %v495
      %v1025 = vunpack.c.h.b16 %v495
      %v1026 = vunpack.c.l.b16 %v496
      %v1027 = vunpack.c.h.b16 %v496
      %v1028 = vunpack.c.l.b16 %v497
      %v1029 = vunpack.c.h.b16 %v497
      %v1030 = vunpack.c.l.b16 %v498
      %v1031 = vunpack.c.h.b16 %v498
      %v1032 = vunpack.c.l.b16 %v499
      %v1033 = vunpack.c.h.b16 %v499
      %v1034 = vunpack.c.l.b16 %v500
      %v1035 = vunpack.c.h.b16 %v500
      %v1036 = vunpack.c.l.b16 %v501
      %v1037 = vunpack.c.h.b16 %v501
      %v1038 = vunpack.c.l.b16 %v502
      %v1039 = vunpack.c.h.b16 %v502
      %v1040 = vunpack.c.l.b16 %v503
      %v1041 = vunpack.c.h.b16 %v503
      %v1042 = vunpack.c.l.b16 %v504
      %v1043 = vunpack.c.h.b16 %v504
      %v1044 = vunpack.c.l.b16 %v505
      %v1045 = vunpack.c.h.b16 %v505
      %v1046 = vunpack.c.l.b16 %v506
      %v1047 = vunpack.c.h.b16 %v506
      %v1048 = vunpack.c.l.b16 %v507
      %v1049 = vunpack.c.h.b16 %v507
      %v1050 = vunpack.c.l.b16 %v508
      %v1051 = vunpack.c.h.b16 %v508
      %v1052 = vunpack.c.l.b16 %v509
      %v1053 = vunpack.c.h.b16 %v509
      %v1054 = vunpack.c.l.b16 %v510
      %v1055 = vunpack.c.h.b16 %v510
      %v1056 = vunpack.c.l.b16 %v511
      %v1057 = vunpack.c.h.b16 %v511
      %v1058 = vunpack.c.l.b16 %v512
      %v1059 = vunpack.c.h.b16 %v512
      %v1060 = vunpack.c.l.b16 %v513
      %v1061 = vunpack.c.h.b16 %v513
      %v1062 = vunpack.c.l.b16 %v514
      %v1063 = vunpack.c.h.b16 %v514
      %v1064 = vunpack.c.l.b16 %v515
      %v1065 = vunpack.c.h.b16 %v515
      %v1066 = vunpack.c.l.b16 %v516
      %v1067 = vunpack.c.h.b16 %v516
      %v1068 = vunpack.c.l.b16 %v517
      %v1069 = vunpack.c.h.b16 %v517
      %v1070 = vunpack.c.l.b16 %v518
      %v1071 = vunpack.c.h.b16 %v518
      %v1072 = vunpack.c.l.b16 %v519
      %v1073 = vunpack.c.h.b16 %v519
      %v1074 = vunpack.c.l.b16 %v520
      %v1075 = vunpack.c.h.b16 %v520
      %v1076 = vunpack.c.l.b16 %v521
      %v1077 = vunpack.c.h.b16 %v521
      %v1078 = vunpack.c.l.b16 %v522
      %v1079 = vunpack.c.h.b16 %v522
      %v1080 = vunpack.c.l.b16 %v523
      %v1081 = vunpack.c.h.b16 %v523
      %v1082 = vunpack.c.l.b16 %v524
      %v1083 = vunpack.c.h.b16 %v524
      %v1084 = vunpack.c.l.b16 %v525
      %v1085 = vunpack.c.h.b16 %v525
      %v1086 = vunpack.c.l.b16 %v526
      %v1087 = vunpack.c.h.b16 %v526
      %v1088 = vunpack.c.l.b16 %v527
      %v1089 = vunpack.c.h.b16 %v527
      %v1090 = vunpack.c.l.b16 %v528
      %v1091 = vunpack.c.h.b16 %v528
      %v1092 = vunpack.c.l.b16 %v529
      %v1093 = vunpack.c.h.b16 %v529
      %v1094 = vunpack.c.l.b16 %v530
      %v1095 = vunpack.c.h.b16 %v530
      %v1096 = vunpack.c.l.b16 %v531
      %v1097 = vunpack.c.h.b16 %v531
      %v1098 = vunpack.c.l.b16 %v532
      %v1099 = vunpack.c.h.b16 %v532
      %v1100 = vunpack.c.l.b16 %v533
      %v1101 = vunpack.c.h.b16 %v533
      %v1102 = vunpack.c.l.b16 %v534
      %v1103 = vunpack.c.h.b16 %v534
      %v1104 = vunpack.c.l.b16 %v535
      %v1105 = vunpack.c.h.b16 %v535
      %v1106 = vunpack.c.l.b16 %v536
      %v1107 = vunpack.c.h.b16 %v536
      %v1108 = vunpack.c.l.b16 %v537
      %v1109 = vunpack.c.h.b16 %v537
      %v1110 = vunpack.c.l.b16 %v538
      %v1111 = vunpack.c.h.b16 %v538
      %v1112 = vunpack.c.l.b16 %v539
      %v1113 = vunpack.c.h.b16 %v539
      %v1114 = vunpack.c.l.b16 %v540
      %v1115 = vunpack.c.h.b16 %v540
      %v1116 = vunpack.c.l.b16 %v541
      %v1117 = vunpack.c.h.b16 %v541
      %v1118 = vunpack.c.l.b16 %v542
      %v1119 = vunpack.c.h.b16 %v542
      %v1120 = vunpack.c.l.b16 %v543
      %v1121 = vunpack.c.h.b16 %v543
      %v1122 = vunpack.c.l.b16 %v544
      %v1123 = vunpack.c.h.b16 %v544
      %v1124 = vunpack.c.l.b16 %v545
      %v1125 = vunpack.c.h.b16 %v545
      %v1126 = vunpack.c.l.b16 %v546
      %v1127 = vunpack.c.h.b16 %v546
      %v1128 = vunpack.c.l.b16 %v547
      %v1129 = vunpack.c.h.b16 %v547
      %v1130 = vunpack.c.l.b16 %v548
      %v1131 = vunpack.c.h.b16 %v548
      %v1132 = vunpack.c.l.b16 %v549
      %v1133 = vunpack.c.h.b16 %v549
      %v1134 = vunpack.c.l.b16 %v550
      %v1135 = vunpack.c.h.b16 %v550
      %v1136 = vunpack.c.l.b16 %v551
      %v1137 = vunpack.c.h.b16 %v551
      %v1138 = vunpack.c.l.b16 %v552
      %v1139 = vunpack.c.h.b16 %v552
      %v1140 = vunpack.c.l.b16 %v553
      %v1141 = vunpack.c.h.b16 %v553
      %v1142 = vunpack.c.l.b16 %v554
      %v1143 = vunpack.c.h.b16 %v554
      %v1144 = vunpack.c.l.b16 %v555
      %v1145 = vunpack.c.h.b16 %v555
      %v1146 = vunpack.c.l.b16 %v556
      %v1147 = vunpack.c.h.b16 %v556
      %v1148 = vunpack.c.l.b16 %v557
      %v1149 = vunpack.c.h.b16 %v557
      %v1150 = vunpack.c.l.b16 %v558
      %v1151 = vunpack.c.h.b16 %v558
      %v1152 = vunpack.c.l.b16 %v559
      %v1153 = vunpack.c.h.b16 %v559
      %v1154 = vunpack.c.l.b16 %v560
      %v1155 = vunpack.c.h.b16 %v560
      %v1156 = vunpack.c.l.b16 %v561
      %v1157 = vunpack.c.h.b16 %v561
      %v1158 = vunpack.c.l.b16 %v562
      %v1159 = vunpack.c.h.b16 %v562
      %v1160 = vunpack.c.l.b16 %v563
      %v1161 = vunpack.c.h.b16 %v563
      %v1162 = vunpack.c.l.b16 %v564
      %v1163 = vunpack.c.h.b16 %v564
      %v1164 = vunpack.c.l.b16 %v565
      %v1165 = vunpack.c.h.b16 %v565
      %v1166 = vunpack.c.l.b16 %v566
      %v1167 = vunpack.c.h.b16 %v566
      %v1168 = vunpack.c.l.b16 %v567
      %v1169 = vunpack.c.h.b16 %v567
      %v1170 = vunpack.c.l.b16 %v568
      %v1171 = vunpack.c.h.b16 %v568
      %v1172 = vunpack.c.l.b16 %v569
      %v1173 = vunpack.c.h.b16 %v569
      %v1174 = vunpack.c.l.b16 %v570
      %v1175 = vunpack.c.h.b16 %v570
      %v1176 = vunpack.c.l.b16 %v571
      %v1177 = vunpack.c.h.b16 %v571
      %v1178 = vunpack.c.l.b16 %v572
      %v1179 = vunpack.c.h.b16 %v572
      %v1180 = vunpack.c.l.b16 %v573
      %v1181 = vunpack.c.h.b16 %v573
      %v1182 = vunpack.c.l.b16 %v574
      %v1183 = vunpack.c.h.b16 %v574
      %v1184 = vunpack.c.l.b16 %v575
      %v1185 = vunpack.c.h.b16 %v575
      %v1186 = vunpack.c.l.b16 %v576
      %v1187 = vunpack.c.h.b16 %v576
      %v1188 = vunpack.c.l.b16 %v577
      %v1189 = vunpack.c.h.b16 %v577
      %v1190 = vunpack.c.l.b16 %v578
      %v1191 = vunpack.c.h.b16 %v578
      %v1192 = vunpack.c.l.b16 %v579
      %v1193 = vunpack.c.h.b16 %v579
      %v1194 = vunpack.c.l.b16 %v580
      %v1195 = vunpack.c.h.b16 %v580
      %v1196 = vunpack.c.l.b16 %v581
      %v1197 = vunpack.c.h.b16 %v581
      %v1198 = vunpack.c.l.b16 %v582
      %v1199 = vunpack.c.h.b16 %v582
      %v1200 = vunpack.c.l.b16 %v583
      %v1201 = vunpack.c.h.b16 %v583
      %v1202 = vunpack.c.l.b16 %v584
      %v1203 = vunpack.c.h.b16 %v584
      %v1204 = vunpack.c.l.b16 %v585
      %v1205 = vunpack.c.h.b16 %v585
      %v1206 = vunpack.c.l.b16 %v586
      %v1207 = vunpack.c.h.b16 %v586
      %v1208 = vunpack.c.l.b16 %v587
      %v1209 = vunpack.c.h.b16 %v587
      %v1210 = vunpack.c.l.b16 %v588
      %v1211 = vunpack.c.h.b16 %v588
      %v1212 = vunpack.c.l.b16 %v589
      %v1213 = vunpack.c.h.b16 %v589
      %v1214 = vunpack.c.l.b16 %v590
      %v1215 = vunpack.c.h.b16 %v590
      %v1216 = vunpack.c.l.b16 %v591
      %v1217 = vunpack.c.h.b16 %v591
      %v1218 = vunpack.c.l.b16 %v592
      %v1219 = vunpack.c.h.b16 %v592
      %v1220 = vunpack.c.l.b16 %v593
      %v1221 = vunpack.c.h.b16 %v593
      %v1222 = vunpack.c.l.b16 %v594
      %v1223 = vunpack.c.h.b16 %v594
      %v1224 = vunpack.c.l.b16 %v595
      %v1225 = vunpack.c.h.b16 %v595
      %v1226 = vunpack.c.l.b16 %v596
      %v1227 = vunpack.c.h.b16 %v596
      %v1228 = vunpack.c.l.b16 %v597
      %v1229 = vunpack.c.h.b16 %v597
      %v1230 = vunpack.c.l.b16 %v598
      %v1231 = vunpack.c.h.b16 %v598
      %v1232 = vunpack.c.l.b16 %v599
      %v1233 = vunpack.c.h.b16 %v599
      %v1234 = vunpack.c.l.b16 %v600
      %v1235 = vunpack.c.h.b16 %v600
      %v1236 = vunpack.c.l.b16 %v601
      %v1237 = vunpack.c.h.b16 %v601
      %v1238 = vunpack.c.l.b16 %v602
      %v1239 = vunpack.c.h.b16 %v602
      %v1240 = vunpack.c.l.b16 %v603
      %v1241 = vunpack.c.h.b16 %v603
      %v1242 = vunpack.c.l.b16 %v604
      %v1243 = vunpack.c.h.b16 %v604
      %v1244 = vunpack.c.l.b16 %v605
      %v1245 = vunpack.c.h.b16 %v605
      %v1246 = vunpack.c.l.b16 %v606
      %v1247 = vunpack.c.h.b16 %v606
      %v1248 = vunpack.c.l.b16 %v607
      %v1249 = vunpack.c.h.b16 %v607
      %v1250 = vunpack.c.l.b16 %v608
      %v1251 = vunpack.c.h.b16 %v608
      %v1252 = vunpack.c.l.b16 %v609
      %v1253 = vunpack.c.h.b16 %v609
      %v1254 = vunpack.c.l.b16 %v610
      %v1255 = vunpack.c.h.b16 %v610
      %v1256 = vunpack.c.l.b16 %v611
      %v1257 = vunpack.c.h.b16 %v611
      %v1258 = vunpack.c.l.b16 %v612
      %v1259 = vunpack.c.h.b16 %v612
      %v1260 = vunpack.c.l.b16 %v613
      %v1261 = vunpack.c.h.b16 %v613
      %v1262 = vunpack.c.l.b16 %v614
      %v1263 = vunpack.c.h.b16 %v614
      %v1264 = vunpack.c.l.b16 %v615
      %v1265 = vunpack.c.h.b16 %v615
      %v1266 = vunpack.c.l.b16 %v616
      %v1267 = vunpack.c.h.b16 %v616
      %v1268 = vunpack.c.l.b16 %v617
      %v1269 = vunpack.c.h.b16 %v617
      %v1270 = vunpack.c.l.b16 %v618
      %v1271 = vunpack.c.h.b16 %v618
      %v1272 = vunpack.c.l.b16 %v619
      %v1273 = vunpack.c.h.b16 %v619
      %v1274 = vunpack.c.l.b16 %v620
      %v1275 = vunpack.c.h.b16 %v620
      %v1276 = vunpack.c.l.b16 %v621
      %v1277 = vunpack.c.h.b16 %v621
      %v1278 = vunpack.c.l.b16 %v622
      %v1279 = vunpack.c.h.b16 %v622
      %v1280 = vunpack.c.l.b16 %v623
      %v1281 = vunpack.c.h.b16 %v623
      %v1282 = vunpack.c.l.b16 %v624
      %v1283 = vunpack.c.h.b16 %v624
      %v1284 = vunpack.c.l.b16 %v625
      %v1285 = vunpack.c.h.b16 %v625
      %v1286 = vunpack.c.l.b16 %v626
      %v1287 = vunpack.c.h.b16 %v626
      %v1288 = vunpack.c.l.b16 %v627
      %v1289 = vunpack.c.h.b16 %v627
      %v1290 = vunpack.c.l.b16 %v628
      %v1291 = vunpack.c.h.b16 %v628
      %v1292 = vunpack.c.l.b16 %v629
      %v1293 = vunpack.c.h.b16 %v629
      %v1294 = vunpack.c.l.b16 %v630
      %v1295 = vunpack.c.h.b16 %v630
      %v1296 = vunpack.c.l.b16 %v631
      %v1297 = vunpack.c.h.b16 %v631
      %v1298 = vunpack.c.l.b16 %v632
      %v1299 = vunpack.c.h.b16 %v632
      %v1300 = vunpack.c.l.b16 %v633
      %v1301 = vunpack.c.h.b16 %v633
      %v1302 = vunpack.c.l.b16 %v634
      %v1303 = vunpack.c.h.b16 %v634
      %v1304 = vunpack.c.l.b16 %v635
      %v1305 = vunpack.c.h.b16 %v635
      %v1306 = vunpack.c.l.b16 %v636
      %v1307 = vunpack.c.h.b16 %v636
      %v1308 = vunpack.c.l.b16 %v637
      %v1309 = vunpack.c.h.b16 %v637
      %v1310 = vunpack.c.l.b16 %v638
      %v1311 = vunpack.c.h.b16 %v638
      %v1312 = vunpack.c.l.b16 %v639
      %v1313 = vunpack.c.h.b16 %v639
      %v1314 = vunpack.c.l.b16 %v640
      %v1315 = vunpack.c.h.b16 %v640
      %v1316 = vunpack.c.l.b16 %v641
      %v1317 = vunpack.c.h.b16 %v641
      %v1318 = vunpack.c.l.b16 %v642
      %v1319 = vunpack.c.h.b16 %v642
      %v1320 = vunpack.c.l.b16 %v643
      %v1321 = vunpack.c.h.b16 %v643
      %v1322 = vunpack.c.l.b16 %v644
      %v1323 = vunpack.c.h.b16 %v644
      %v1324 = vunpack.c.l.b16 %v645
      %v1325 = vunpack.c.h.b16 %v645
      %v1326 = vpack.c.b16 %v938, %v934
      %v1327 = vpack.c.b16 %v939, %v935
      %v1328 = vpack.c.b16 %v940, %v936
      %v1329 = vpack.c.b16 %v941, %v937
      %v1330 = vpack.c.b16 %v946, %v942
      %v1331 = vpack.c.b16 %v947, %v943
      %v1332 = vpack.c.b16 %v948, %v944
      %v1333 = vpack.c.b16 %v949, %v945
      %v1334 = vpack.c.b16 %v954, %v950
      %v1335 = vpack.c.b16 %v955, %v951
      %v1336 = vpack.c.b16 %v956, %v952
      %v1337 = vpack.c.b16 %v957, %v953
      %v1338 = vpack.c.b16 %v962, %v958
      %v1339 = vpack.c.b16 %v963, %v959
      %v1340 = vpack.c.b16 %v964, %v960
      %v1341 = vpack.c.b16 %v965, %v961
      %v1342 = vpack.c.b16 %v970, %v966
      %v1343 = vpack.c.b16 %v971, %v967
      %v1344 = vpack.c.b16 %v972, %v968
      %v1345 = vpack.c.b16 %v973, %v969
      %v1346 = vpack.c.b16 %v978, %v974
      %v1347 = vpack.c.b16 %v979, %v975
      %v1348 = vpack.c.b16 %v980, %v976
      %v1349 = vpack.c.b16 %v981, %v977
      %v1350 = vpack.c.b16 %v986, %v982
      %v1351 = vpack.c.b16 %v987, %v983
      %v1352 = vpack.c.b16 %v988, %v984
      %v1353 = vpack.c.b16 %v989, %v985
      %v1354 = vpack.c.b16 %v994, %v990
      %v1355 = vpack.c.b16 %v995, %v991
      %v1356 = vpack.c.b16 %v996, %v992
      %v1357 = vpack.c.b16 %v997, %v993
      %v1358 = vpack.c.b16 %v1002, %v998
      %v1359 = vpack.c.b16 %v1003, %v999
      %v1360 = vpack.c.b16 %v1004, %v1000
      %v1361 = vpack.c.b16 %v1005, %v1001
      %v1362 = vpack.c.b16 %v1010, %v1006
      %v1363 = vpack.c.b16 %v1011, %v1007
      %v1364 = vpack.c.b16 %v1012, %v1008
      %v1365 = vpack.c.b16 %v1013, %v1009
      %v1366 = vpack.c.b16 %v1018, %v1014
      %v1367 = vpack.c.b16 %v1019, %v1015
      %v1368 = vpack.c.b16 %v1020, %v1016
      %v1369 = vpack.c.b16 %v1021, %v1017
      %v1370 = vpack.c.b16 %v1026, %v1022
      %v1371 = vpack.c.b16 %v1027, %v1023
      %v1372 = vpack.c.b16 %v1028, %v1024
      %v1373 = vpack.c.b16 %v1029, %v1025
      %v1374 = vpack.c.b16 %v1034, %v1030
      %v1375 = vpack.c.b16 %v1035, %v1031
      %v1376 = vpack.c.b16 %v1036, %v1032
      %v1377 = vpack.c.b16 %v1037, %v1033
      %v1378 = vpack.c.b16 %v1042, %v1038
      %v1379 = vpack.c.b16 %v1043, %v1039
      %v1380 = vpack.c.b16 %v1044, %v1040
      %v1381 = vpack.c.b16 %v1045, %v1041
      %v1382 = vpack.c.b16 %v1050, %v1046
      %v1383 = vpack.c.b16 %v1051, %v1047
      %v1384 = vpack.c.b16 %v1052, %v1048
      %v1385 = vpack.c.b16 %v1053, %v1049
      %v1386 = vpack.c.b16 %v1058, %v1054
      %v1387 = vpack.c.b16 %v1059, %v1055
      %v1388 = vpack.c.b16 %v1060, %v1056
      %v1389 = vpack.c.b16 %v1061, %v1057
      %v1390 = vpack.c.b16 %v1066, %v1062
      %v1391 = vpack.c.b16 %v1067, %v1063
      %v1392 = vpack.c.b16 %v1068, %v1064
      %v1393 = vpack.c.b16 %v1069, %v1065
      %v1394 = vpack.c.b16 %v1074, %v1070
      %v1395 = vpack.c.b16 %v1075, %v1071
      %v1396 = vpack.c.b16 %v1076, %v1072
      %v1397 = vpack.c.b16 %v1077, %v1073
      %v1398 = vpack.c.b16 %v1082, %v1078
      %v1399 = vpack.c.b16 %v1083, %v1079
      %v1400 = vpack.c.b16 %v1084, %v1080
      %v1401 = vpack.c.b16 %v1085, %v1081
      %v1402 = vpack.c.b16 %v1090, %v1086
      %v1403 = vpack.c.b16 %v1091, %v1087
      %v1404 = vpack.c.b16 %v1092, %v1088
      %v1405 = vpack.c.b16 %v1093, %v1089
      %v1406 = vpack.c.b16 %v1098, %v1094
      %v1407 = vpack.c.b16 %v1099, %v1095
      %v1408 = vpack.c.b16 %v1100, %v1096
      %v1409 = vpack.c.b16 %v1101, %v1097
      %v1410 = vpack.c.b16 %v1106, %v1102
      %v1411 = vpack.c.b16 %v1107, %v1103
      %v1412 = vpack.c.b16 %v1108, %v1104
      %v1413 = vpack.c.b16 %v1109, %v1105
      %v1414 = vpack.c.b16 %v1114, %v1110
      %v1415 = vpack.c.b16 %v1115, %v1111
      %v1416 = vpack.c.b16 %v1116, %v1112
      %v1417 = vpack.c.b16 %v1117, %v1113
      %v1418 = vpack.c.b16 %v1122, %v1118
      %v1419 = vpack.c.b16 %v1123, %v1119
      %v1420 = vpack.c.b16 %v1124, %v1120
      %v1421 = vpack.c.b16 %v1125, %v1121
      %v1422 = vpack.c.b16 %v1130, %v1126
      %v1423 = vpack.c.b16 %v1131, %v1127
      %v1424 = vpack.c.b16 %v1132, %v1128
      %v1425 = vpack.c.b16 %v1133, %v1129
      %v1426 = vpack.c.b16 %v1138, %v1134
      %v1427 = vpack.c.b16 %v1139, %v1135
      %v1428 = vpack.c.b16 %v1140, %v1136
      %v1429 = vpack.c.b16 %v1141, %v1137
      %v1430 = vpack.c.b16 %v1146, %v1142
      %v1431 = vpack.c.b16 %v1147, %v1143
      %v1432 = vpack.c.b16 %v1148, %v1144
      %v1433 = vpack.c.b16 %v1149, %v1145
      %v1434 = vpack.c.b16 %v1154, %v1150
      %v1435 = vpack.c.b16 %v1155, %v1151
      %v1436 = vpack.c.b16 %v1156, %v1152
      %v1437 = vpack.c.b16 %v1157, %v1153
      %v1438 = vpack.c.b16 %v1162, %v1158
      %v1439 = vpack.c.b16 %v1163, %v1159
      %v1440 = vpack.c.b16 %v1164, %v1160
      %v1441 = vpack.c.b16 %v1165, %v1161
      %v1442 = vpack.c.b16 %v1170, %v1166
      %v1443 = vpack.c.b16 %v1171, %v1167
      %v1444 = vpack.c.b16 %v1172, %v1168
      %v1445 = vpack.c.b16 %v1173, %v1169
      %v1446 = vpack.c.b16 %v1178, %v1174
      %v1447 = vpack.c.b16 %v1179, %v1175
      %v1448 = vpack.c.b16 %v1180, %v1176
      %v1449 = vpack.c.b16 %v1181, %v1177
      %v1450 = vpack.c.b16 %v1186, %v1182
      %v1451 = vpack.c.b16 %v1187, %v1183
      %v1452 = vpack.c.b16 %v1188, %v1184
      %v1453 = vpack.c.b16 %v1189, %v1185
      %v1454 = vpack.c.b16 %v1194, %v1190
      %v1455 = vpack.c.b16 %v1195, %v1191
      %v1456 = vpack.c.b16 %v1196, %v1192
      %v1457 = vpack.c.b16 %v1197, %v1193
      %v1458 = vpack.c.b16 %v1202, %v1198
      %v1459 = vpack.c.b16 %v1203, %v1199
      %v1460 = vpack.c.b16 %v1204, %v1200
      %v1461 = vpack.c.b16 %v1205, %v1201
      %v1462 = vpack.c.b16 %v1210, %v1206
      %v1463 = vpack.c.b16 %v1211, %v1207
      %v1464 = vpack.c.b16 %v1212, %v1208
      %v1465 = vpack.c.b16 %v1213, %v1209
      %v1466 = vpack.c.b16 %v1218, %v1214
      %v1467 = vpack.c.b16 %v1219, %v1215
      %v1468 = vpack.c.b16 %v1220, %v1216
      %v1469 = vpack.c.b16 %v1221, %v1217
      %v1470 = vpack.c.b16 %v1226, %v1222
      %v1471 = vpack.c.b16 %v1227, %v1223
      %v1472 = vpack.c.b16 %v1228, %v1224
      %v1473 = vpack.c.b16 %v1229, %v1225
      %v1474 = vpack.c.b16 %v1234, %v1230
      %v1475 = vpack.c.b16 %v1235, %v1231
      %v1476 = vpack.c.b16 %v1236, %v1232
      %v1477 = vpack.c.b16 %v1237, %v1233
      %v1478 = vpack.c.b16 %v1242, %v1238
      %v1479 = vpack.c.b16 %v1243, %v1239
      %v1480 = vpack.c.b16 %v1244, %v1240
      %v1481 = vpack.c.b16 %v1245, %v1241
      %v1482 = vpack.c.b16 %v1250, %v1246
      %v1483 = vpack.c.b16 %v1251, %v1247
      %v1484 = vpack.c.b16 %v1252, %v1248
      %v1485 = vpack.c.b16 %v1253, %v1249
      %v1486 = vpack.c.b16 %v1258, %v1254
      %v1487 = vpack.c.b16 %v1259, %v1255
      %v1488 = vpack.c.b16 %v1260, %v1256
      %v1489 = vpack.c.b16 %v1261, %v1257
      %v1490 = vpack.c.b16 %v1266, %v1262
      %v1491 = vpack.c.b16 %v1267, %v1263
      %v1492 = vpack.c.b16 %v1268, %v1264
      %v1493 = vpack.c.b16 %v1269, %v1265
      %v1494 = vpack.c.b16 %v1274, %v1270
      %v1495 = vpack.c.b16 %v1275, %v1271
      %v1496 = vpack.c.b16 %v1276, %v1272
      %v1497 = vpack.c.b16 %v1277, %v1273
      %v1498 = vpack.c.b16 %v1282, %v1278
      %v1499 = vpack.c.b16 %v1283, %v1279
      %v1500 = vpack.c.b16 %v1284, %v1280
      %v1501 = vpack.c.b16 %v1285, %v1281
      %v1502 = vpack.c.b16 %v1290, %v1286
      %v1503 = vpack.c.b16 %v1291, %v1287
      %v1504 = vpack.c.b16 %v1292, %v1288
      %v1505 = vpack.c.b16 %v1293, %v1289
      %v1506 = vpack.c.b16 %v1298, %v1294
      %v1507 = vpack.c.b16 %v1299, %v1295
      %v1508 = vpack.c.b16 %v1300, %v1296
      %v1509 = vpack.c.b16 %v1301, %v1297
      %v1510 = vpack.c.b16 %v1306, %v1302
      %v1511 = vpack.c.b16 %v1307, %v1303
      %v1512 = vpack.c.b16 %v1308, %v1304
      %v1513 = vpack.c.b16 %v1309, %v1305
      %v1514 = vpack.c.b16 %v1314, %v1310
      %v1515 = vpack.c.b16 %v1315, %v1311
      %v1516 = vpack.c.b16 %v1316, %v1312
      %v1517 = vpack.c.b16 %v1317, %v1313
      %v1518 = vpack.c.b16 %v1322, %v1318
      %v1519 = vpack.c.b16 %v1323, %v1319
      %v1520 = vpack.c.b16 %v1324, %v1320
      %v1521 = vpack.c.b16 %v1325, %v1321
      %vm1718 = vcmask 130048
      %v1720 = vsel %vm1718, %v718, 0
      %v1723 = vsel %vm1718, %v725, 0
      %1725 = vmatprep.subr.bf16.mxu0 %v1327
      %1726 = vmatpush1.bf16.msra.mxu0 %v1326
      %1727 = vmatprep.subr.bf16.mxu0 %v1331
      %1728 = vmatpush1.bf16.msra.mxu0 %v1330
      %1729 = vmatprep.subr.bf16.mxu0 %v1335
      %1730 = vmatpush1.bf16.msra.mxu0 %v1334
      %1731 = vmatprep.subr.bf16.mxu0 %v1339
      %1732 = vmatpush1.bf16.msra.mxu0 %v1338
      %1733 = vmatprep.subr.bf16.mxu0 %v1343
      %1734 = vmatpush1.bf16.msra.mxu0 %v1342
      %1735 = vmatprep.subr.bf16.mxu0 %v1347
      %1736 = vmatpush1.bf16.msra.mxu0 %v1346
      %1737 = vmatprep.subr.bf16.mxu0 %v1351
      %1738 = vmatpush1.bf16.msra.mxu0 %v1350
      %1739 = vmatprep.subr.bf16.mxu0 %v1355
      %1740 = vmatpush1.bf16.msra.mxu0 %v1354
      %1741 = vmatprep.subr.bf16.mxu0 %v1359
      %1742 = vmatpush1.bf16.msra.mxu0 %v1358
      %1743 = vmatprep.subr.bf16.mxu0 %v1363
      %1744 = vmatpush1.bf16.msra.mxu0 %v1362
      %1745 = vmatprep.subr.bf16.mxu0 %v1367
      %1746 = vmatpush1.bf16.msra.mxu0 %v1366
      %1747 = vmatprep.subr.bf16.mxu0 %v1371
      %1748 = vmatpush1.bf16.msra.mxu0 %v1370
      %1749 = vmatprep.subr.bf16.mxu0 %v1375
      %1750 = vmatpush1.bf16.msra.mxu0 %v1374
      %1751 = vmatprep.subr.bf16.mxu0 %v1379
      %1752 = vmatpush1.bf16.msra.mxu0 %v1378
      %1753 = vmatprep.subr.bf16.mxu0 %v1383
      %1754 = vmatpush1.bf16.msra.mxu0 %v1382
      %1755 = vmatprep.subr.bf16.mxu0 %v1387
      %1756 = vmatpush1.bf16.msra.mxu0 %v1386
      %1757 = vmatprep.mubr.bf16.mxu0 %v713
      %1758 = vmatmul.mubr.bf16.gmra.mrb[0].mxu0 %v712
      %v1759 = vpop.f32.mrb[0].mxu0
      %v1760 = vadd.f32 %v651, %v1759
      %v1761 = vpop.f32.mrb[0].mxu0
      %v1762 = vadd.f32 %v655, %v1761
      %v1763 = vpop.f32.mrb[0].mxu0
      %v1764 = vadd.f32 %v651, %v1763
      %v1765 = vpop.f32.mrb[0].mxu0
      %v1766 = vadd.f32 %v655, %v1765
      %1767 = vmatprep.mubr.bf16.mxu0 %v720
      %1768 = vmatmul.mubr.bf16.gmra.mrb[0].mxu0 %v719
      %v1769 = vpop.f32.mrb[0].mxu0
      %v1770 = vadd.f32 %v651, %v1769
      %v1771 = vpop.f32.mrb[0].mxu0
      %v1772 = vadd.f32 %v655, %v1771
      %v1773 = vpop.f32.mrb[0].mxu0
      %v1774 = vadd.f32 %v651, %v1773
      %v1775 = vpop.f32.mrb[0].mxu0
      %v1776 = vadd.f32 %v655, %v1775
      %1777 = vdwg.mxu0
      %1778 = vmatprep.subr.bf16.mxu0 %v1391
      %1779 = vmatpush1.bf16.msra.mxu0 %v1390
      %1780 = vmatprep.subr.bf16.mxu0 %v1395
      %1781 = vmatpush1.bf16.msra.mxu0 %v1394
      %1782 = vmatprep.subr.bf16.mxu0 %v1399
      %1783 = vmatpush1.bf16.msra.mxu0 %v1398
      %1784 = vmatprep.subr.bf16.mxu0 %v1403
      %1785 = vmatpush1.bf16.msra.mxu0 %v1402
      %1786 = vmatprep.subr.bf16.mxu0 %v1407
      %1787 = vmatpush1.bf16.msra.mxu0 %v1406
      %1788 = vmatprep.subr.bf16.mxu0 %v1411
      %1789 = vmatpush1.bf16.msra.mxu0 %v1410
      %1790 = vmatprep.subr.bf16.mxu0 %v1415
      %1791 = vmatpush1.bf16.msra.mxu0 %v1414
      %1792 = vmatprep.subr.bf16.mxu0 %v1419
      %1793 = vmatpush1.bf16.msra.mxu0 %v1418
      %1794 = vmatprep.subr.bf16.mxu0 %v1423
      %1795 = vmatpush1.bf16.msra.mxu0 %v1422
      %1796 = vmatprep.subr.bf16.mxu0 %v1427
      %1797 = vmatpush1.bf16.msra.mxu0 %v1426
      %1798 = vmatprep.subr.bf16.mxu0 %v1431
      %1799 = vmatpush1.bf16.msra.mxu0 %v1430
      %1800 = vmatprep.subr.bf16.mxu0 %v1435
      %1801 = vmatpush1.bf16.msra.mxu0 %v1434
      %1802 = vmatprep.subr.bf16.mxu0 %v1439
      %1803 = vmatpush1.bf16.msra.mxu0 %v1438
      %1804 = vmatprep.subr.bf16.mxu0 %v1443
      %1805 = vmatpush1.bf16.msra.mxu0 %v1442
      %1806 = vmatprep.subr.bf16.mxu0 %v1447
      %1807 = vmatpush1.bf16.msra.mxu0 %v1446
      %1808 = vmatprep.subr.bf16.mxu0 %v1451
      %1809 = vmatpush1.bf16.msra.mxu0 %v1450
      %1810 = vmatprep.mubr.bf16.mxu0 %v715
      %1811 = vmatmul.mubr.bf16.gmra.mrb[0].mxu0 %v714
      %v1812 = vpop.f32.mrb[0].mxu0
      %v1813 = vadd.f32 %v1760, %v1812
      %v1814 = vpop.f32.mrb[0].mxu0
      %v1815 = vadd.f32 %v1762, %v1814
      %v1816 = vpop.f32.mrb[0].mxu0
      %v1817 = vadd.f32 %v1764, %v1816
      %v1818 = vpop.f32.mrb[0].mxu0
      %v1819 = vadd.f32 %v1766, %v1818
      %1820 = vmatprep.mubr.bf16.mxu0 %v722
      %1821 = vmatmul.mubr.bf16.gmra.mrb[0].mxu0 %v721
      %v1822 = vpop.f32.mrb[0].mxu0
      %v1823 = vadd.f32 %v1770, %v1822
      %v1824 = vpop.f32.mrb[0].mxu0
      %v1825 = vadd.f32 %v1772, %v1824
      %v1826 = vpop.f32.mrb[0].mxu0
      %v1827 = vadd.f32 %v1774, %v1826
      %v1828 = vpop.f32.mrb[0].mxu0
      %v1829 = vadd.f32 %v1776, %v1828
      %1830 = vdwg.mxu0
      %1831 = vmatprep.subr.bf16.mxu0 %v1455
      %1832 = vmatpush1.bf16.msra.mxu0 %v1454
      %1833 = vmatprep.subr.bf16.mxu0 %v1459
      %1834 = vmatpush1.bf16.msra.mxu0 %v1458
      %1835 = vmatprep.subr.bf16.mxu0 %v1463
      %1836 = vmatpush1.bf16.msra.mxu0 %v1462
      %1837 = vmatprep.subr.bf16.mxu0 %v1467
      %1838 = vmatpush1.bf16.msra.mxu0 %v1466
      %1839 = vmatprep.subr.bf16.mxu0 %v1471
      %1840 = vmatpush1.bf16.msra.mxu0 %v1470
      %1841 = vmatprep.subr.bf16.mxu0 %v1475
      %1842 = vmatpush1.bf16.msra.mxu0 %v1474
      %1843 = vmatprep.subr.bf16.mxu0 %v1479
      %1844 = vmatpush1.bf16.msra.mxu0 %v1478
      %1845 = vmatprep.subr.bf16.mxu0 %v1483
      %1846 = vmatpush1.bf16.msra.mxu0 %v1482
      %1847 = vmatprep.subr.bf16.mxu0 %v1487
      %1848 = vmatpush1.bf16.msra.mxu0 %v1486
      %1849 = vmatprep.subr.bf16.mxu0 %v1491
      %1850 = vmatpush1.bf16.msra.mxu0 %v1490
      %1851 = vmatprep.subr.bf16.mxu0 %v1495
      %1852 = vmatpush1.bf16.msra.mxu0 %v1494
      %1853 = vmatprep.subr.bf16.mxu0 %v1499
      %1854 = vmatpush1.bf16.msra.mxu0 %v1498
      %1855 = vmatprep.subr.bf16.mxu0 %v1503
      %1856 = vmatpush1.bf16.msra.mxu0 %v1502
      %1857 = vmatprep.subr.bf16.mxu0 %v1507
      %1858 = vmatpush1.bf16.msra.mxu0 %v1506
      %1859 = vmatprep.subr.bf16.mxu0 %v1511
      %1860 = vmatpush1.bf16.msra.mxu0 %v1510
      %1861 = vmatprep.subr.bf16.mxu0 %v1515
      %1862 = vmatpush1.bf16.msra.mxu0 %v1514
      %1863 = vmatprep.mubr.bf16.mxu0 %v717
      %1864 = vmatmul.mubr.bf16.gmra.mrb[0].mxu0 %v716
      %v1865 = vpop.f32.mrb[0].mxu0
      %v1866 = vadd.f32 %v1813, %v1865
      %v1867 = vpop.f32.mrb[0].mxu0
      %v1868 = vadd.f32 %v1815, %v1867
      %v1869 = vpop.f32.mrb[0].mxu0
      %v1870 = vadd.f32 %v1817, %v1869
      %v1871 = vpop.f32.mrb[0].mxu0
      %v1872 = vadd.f32 %v1819, %v1871
      %1873 = vmatprep.mubr.bf16.mxu0 %v724
      %1874 = vmatmul.mubr.bf16.gmra.mrb[0].mxu0 %v723
      %v1875 = vpop.f32.mrb[0].mxu0
      %v1876 = vadd.f32 %v1823, %v1875
      %v1877 = vpop.f32.mrb[0].mxu0
      %v1878 = vadd.f32 %v1825, %v1877
      %v1879 = vpop.f32.mrb[0].mxu0
      %v1880 = vadd.f32 %v1827, %v1879
      %v1881 = vpop.f32.mrb[0].mxu0
      %v1882 = vadd.f32 %v1829, %v1881
      %1883 = vdwg.mxu0
      %1884 = vmatprep.subr.bf16.mxu0 %v1519
      %1885 = vmatpush1.bf16.msra.mxu0 %v1518
      %1886 = vmatprep.subr.bf16.mxu0 0
      %1887 = vmatpush1.bf16.msra.mxu0 0
      %1888 = vmatprep.subr.bf16.mxu0 0
      %1889 = vmatpush1.bf16.msra.mxu0 0
      %1890 = vmatprep.subr.bf16.mxu0 0
      %1891 = vmatpush1.bf16.msra.mxu0 0
      %1892 = vmatprep.subr.bf16.mxu0 0
      %1893 = vmatpush1.bf16.msra.mxu0 0
      %1894 = vmatprep.subr.bf16.mxu0 0
      %1895 = vmatpush1.bf16.msra.mxu0 0
      %1896 = vmatprep.subr.bf16.mxu0 0
      %1897 = vmatpush1.bf16.msra.mxu0 0
      %1898 = vmatprep.subr.bf16.mxu0 0
      %1899 = vmatpush1.bf16.msra.mxu0 0
      %1900 = vmatprep.subr.bf16.mxu0 0
      %1901 = vmatpush1.bf16.msra.mxu0 0
      %1902 = vmatprep.subr.bf16.mxu0 0
      %1903 = vmatpush1.bf16.msra.mxu0 0
      %1904 = vmatprep.subr.bf16.mxu0 0
      %1905 = vmatpush1.bf16.msra.mxu0 0
      %1906 = vmatprep.subr.bf16.mxu0 0
      %1907 = vmatpush1.bf16.msra.mxu0 0
      %1908 = vmatprep.subr.bf16.mxu0 0
      %1909 = vmatpush1.bf16.msra.mxu0 0
      %1910 = vmatprep.subr.bf16.mxu0 0
      %1911 = vmatpush1.bf16.msra.mxu0 0
      %1912 = vmatprep.subr.bf16.mxu0 0
      %1913 = vmatpush1.bf16.msra.mxu0 0
      %1914 = vmatprep.subr.bf16.mxu0 0
      %1915 = vmatpush1.bf16.msra.mxu0 0
      %1916 = vmatprep.mubr.bf16.mxu0 0
      %1917 = vmatmul.mubr.bf16.gmra.mrb[0].mxu0 %v1720
      %v1918 = vpop.f32.mrb[0].mxu0
      %v1919 = vadd.f32 %v1866, %v1918
      %v1920 = vpop.f32.mrb[0].mxu0
      %v1921 = vadd.f32 %v1868, %v1920
      %v1922 = vpop.f32.mrb[0].mxu0
      %v1923 = vadd.f32 %v1870, %v1922
      %v1924 = vpop.f32.mrb[0].mxu0
      %v1925 = vadd.f32 %v1872, %v1924
      %1926 = vmatprep.mubr.bf16.mxu0 0
      %1927 = vmatmul.mubr.bf16.gmra.mrb[0].mxu0 %v1723
      %v1928 = vpop.f32.mrb[0].mxu0
      %v1929 = vadd.f32 %v1876, %v1928
      %v1930 = vpop.f32.mrb[0].mxu0
      %v1931 = vadd.f32 %v1878, %v1930
      %v1932 = vpop.f32.mrb[0].mxu0
      %v1933 = vadd.f32 %v1880, %v1932
      %v1934 = vpop.f32.mrb[0].mxu0
      %v1935 = vadd.f32 %v1882, %v1934
      %1936 = vdwg.mxu0
      %1937 = vmatprep.subr.bf16.mxu0 %v1329
      %1938 = vmatpush1.bf16.msra.mxu0 %v1328
      %1939 = vmatprep.subr.bf16.mxu0 %v1333
      %1940 = vmatpush1.bf16.msra.mxu0 %v1332
      %1941 = vmatprep.subr.bf16.mxu0 %v1337
      %1942 = vmatpush1.bf16.msra.mxu0 %v1336
      %1943 = vmatprep.subr.bf16.mxu0 %v1341
      %1944 = vmatpush1.bf16.msra.mxu0 %v1340
      %1945 = vmatprep.subr.bf16.mxu0 %v1345
      %1946 = vmatpush1.bf16.msra.mxu0 %v1344
      %1947 = vmatprep.subr.bf16.mxu0 %v1349
      %1948 = vmatpush1.bf16.msra.mxu0 %v1348
      %1949 = vmatprep.subr.bf16.mxu0 %v1353
      %1950 = vmatpush1.bf16.msra.mxu0 %v1352
      %1951 = vmatprep.subr.bf16.mxu0 %v1357
      %1952 = vmatpush1.bf16.msra.mxu0 %v1356
      %1953 = vmatprep.subr.bf16.mxu0 %v1361
      %1954 = vmatpush1.bf16.msra.mxu0 %v1360
      %1955 = vmatprep.subr.bf16.mxu0 %v1365
      %1956 = vmatpush1.bf16.msra.mxu0 %v1364
      %1957 = vmatprep.subr.bf16.mxu0 %v1369
      %1958 = vmatpush1.bf16.msra.mxu0 %v1368
      %1959 = vmatprep.subr.bf16.mxu0 %v1373
      %1960 = vmatpush1.bf16.msra.mxu0 %v1372
      %1961 = vmatprep.subr.bf16.mxu0 %v1377
      %1962 = vmatpush1.bf16.msra.mxu0 %v1376
      %1963 = vmatprep.subr.bf16.mxu0 %v1381
      %1964 = vmatpush1.bf16.msra.mxu0 %v1380
      %1965 = vmatprep.subr.bf16.mxu0 %v1385
      %1966 = vmatpush1.bf16.msra.mxu0 %v1384
      %1967 = vmatprep.subr.bf16.mxu0 %v1389
      %1968 = vmatpush1.bf16.msra.mxu0 %v1388
      %1969 = vmatprep.mubr.bf16.mxu0 %v713
      %1970 = vmatmul.mubr.bf16.gmra.mrb[0].mxu0 %v712
      %v1971 = vpop.f32.mrb[0].mxu0
      %v1972 = vadd.f32 %v659, %v1971
      %v1973 = vpop.f32.mrb[0].mxu0
      %v1974 = vadd.f32 %v663, %v1973
      %v1975 = vpop.f32.mrb[0].mxu0
      %v1976 = vadd.f32 %v659, %v1975
      %v1977 = vpop.f32.mrb[0].mxu0
      %v1978 = vadd.f32 %v663, %v1977
      %1979 = vmatprep.mubr.bf16.mxu0 %v720
      %1980 = vmatmul.mubr.bf16.gmra.mrb[0].mxu0 %v719
      %v1981 = vpop.f32.mrb[0].mxu0
      %v1982 = vadd.f32 %v659, %v1981
      %v1983 = vpop.f32.mrb[0].mxu0
      %v1984 = vadd.f32 %v663, %v1983
      %v1985 = vpop.f32.mrb[0].mxu0
      %v1986 = vadd.f32 %v659, %v1985
      %v1987 = vpop.f32.mrb[0].mxu0
      %v1988 = vadd.f32 %v663, %v1987
      %1989 = vdwg.mxu0
      %1990 = vmatprep.subr.bf16.mxu0 %v1393
      %1991 = vmatpush1.bf16.msra.mxu0 %v1392
      %1992 = vmatprep.subr.bf16.mxu0 %v1397
      %1993 = vmatpush1.bf16.msra.mxu0 %v1396
      %1994 = vmatprep.subr.bf16.mxu0 %v1401
      %1995 = vmatpush1.bf16.msra.mxu0 %v1400
      %1996 = vmatprep.subr.bf16.mxu0 %v1405
      %1997 = vmatpush1.bf16.msra.mxu0 %v1404
      %1998 = vmatprep.subr.bf16.mxu0 %v1409
      %1999 = vmatpush1.bf16.msra.mxu0 %v1408
      %2000 = vmatprep.subr.bf16.mxu0 %v1413
      %2001 = vmatpush1.bf16.msra.mxu0 %v1412
      %2002 = vmatprep.subr.bf16.mxu0 %v1417
      %2003 = vmatpush1.bf16.msra.mxu0 %v1416
      %2004 = vmatprep.subr.bf16.mxu0 %v1421
      %2005 = vmatpush1.bf16.msra.mxu0 %v1420
      %2006 = vmatprep.subr.bf16.mxu0 %v1425
      %2007 = vmatpush1.bf16.msra.mxu0 %v1424
      %2008 = vmatprep.subr.bf16.mxu0 %v1429
      %2009 = vmatpush1.bf16.msra.mxu0 %v1428
      %2010 = vmatprep.subr.bf16.mxu0 %v1433
      %2011 = vmatpush1.bf16.msra.mxu0 %v1432
      %2012 = vmatprep.subr.bf16.mxu0 %v1437
      %2013 = vmatpush1.bf16.msra.mxu0 %v1436
      %2014 = vmatprep.subr.bf16.mxu0 %v1441
      %2015 = vmatpush1.bf16.msra.mxu0 %v1440
      %2016 = vmatprep.subr.bf16.mxu0 %v1445
      %2017 = vmatpush1.bf16.msra.mxu0 %v1444
      %2018 = vmatprep.subr.bf16.mxu0 %v1449
      %2019 = vmatpush1.bf16.msra.mxu0 %v1448
      %2020 = vmatprep.subr.bf16.mxu0 %v1453
      %2021 = vmatpush1.bf16.msra.mxu0 %v1452
      %2022 = vmatprep.mubr.bf16.mxu0 %v715
      %2023 = vmatmul.mubr.bf16.gmra.mrb[0].mxu0 %v714
      %v2024 = vpop.f32.mrb[0].mxu0
      %v2025 = vadd.f32 %v1972, %v2024
      %v2026 = vpop.f32.mrb[0].mxu0
      %v2027 = vadd.f32 %v1974, %v2026
      %v2028 = vpop.f32.mrb[0].mxu0
      %v2029 = vadd.f32 %v1976, %v2028
      %v2030 = vpop.f32.mrb[0].mxu0
      %v2031 = vadd.f32 %v1978, %v2030
      %2032 = vmatprep.mubr.bf16.mxu0 %v722
      %2033 = vmatmul.mubr.bf16.gmra.mrb[0].mxu0 %v721
      %v2034 = vpop.f32.mrb[0].mxu0
      %v2035 = vadd.f32 %v1982, %v2034
      %v2036 = vpop.f32.mrb[0].mxu0
      %v2037 = vadd.f32 %v1984, %v2036
      %v2038 = vpop.f32.mrb[0].mxu0
      %v2039 = vadd.f32 %v1986, %v2038
      %v2040 = vpop.f32.mrb[0].mxu0
      %v2041 = vadd.f32 %v1988, %v2040
      %2042 = vdwg.mxu0
      %2043 = vmatprep.subr.bf16.mxu0 %v1457
      %2044 = vmatpush1.bf16.msra.mxu0 %v1456
      %2045 = vmatprep.subr.bf16.mxu0 %v1461
      %2046 = vmatpush1.bf16.msra.mxu0 %v1460
      %2047 = vmatprep.subr.bf16.mxu0 %v1465
      %2048 = vmatpush1.bf16.msra.mxu0 %v1464
      %2049 = vmatprep.subr.bf16.mxu0 %v1469
      %2050 = vmatpush1.bf16.msra.mxu0 %v1468
      %2051 = vmatprep.subr.bf16.mxu0 %v1473
      %2052 = vmatpush1.bf16.msra.mxu0 %v1472
      %2053 = vmatprep.subr.bf16.mxu0 %v1477
      %2054 = vmatpush1.bf16.msra.mxu0 %v1476
      %2055 = vmatprep.subr.bf16.mxu0 %v1481
      %2056 = vmatpush1.bf16.msra.mxu0 %v1480
      %2057 = vmatprep.subr.bf16.mxu0 %v1485
      %2058 = vmatpush1.bf16.msra.mxu0 %v1484
      %2059 = vmatprep.subr.bf16.mxu0 %v1489
      %2060 = vmatpush1.bf16.msra.mxu0 %v1488
      %2061 = vmatprep.subr.bf16.mxu0 %v1493
      %2062 = vmatpush1.bf16.msra.mxu0 %v1492
      %2063 = vmatprep.subr.bf16.mxu0 %v1497
      %2064 = vmatpush1.bf16.msra.mxu0 %v1496
      %2065 = vmatprep.subr.bf16.mxu0 %v1501
      %2066 = vmatpush1.bf16.msra.mxu0 %v1500
      %2067 = vmatprep.subr.bf16.mxu0 %v1505
      %2068 = vmatpush1.bf16.msra.mxu0 %v1504
      %2069 = vmatprep.subr.bf16.mxu0 %v1509
      %2070 = vmatpush1.bf16.msra.mxu0 %v1508
      %2071 = vmatprep.subr.bf16.mxu0 %v1513
      %2072 = vmatpush1.bf16.msra.mxu0 %v1512
      %2073 = vmatprep.subr.bf16.mxu0 %v1517
      %2074 = vmatpush1.bf16.msra.mxu0 %v1516
      %2075 = vmatprep.mubr.bf16.mxu0 %v717
      %2076 = vmatmul.mubr.bf16.gmra.mrb[0].mxu0 %v716
      %v2077 = vpop.f32.mrb[0].mxu0
      %v2078 = vadd.f32 %v2025, %v2077
      %v2079 = vpop.f32.mrb[0].mxu0
      %v2080 = vadd.f32 %v2027, %v2079
      %v2081 = vpop.f32.mrb[0].mxu0
      %v2082 = vadd.f32 %v2029, %v2081
      %v2083 = vpop.f32.mrb[0].mxu0
      %v2084 = vadd.f32 %v2031, %v2083
      %2085 = vmatprep.mubr.bf16.mxu0 %v724
      %2086 = vmatmul.mubr.bf16.gmra.mrb[0].mxu0 %v723
      %v2087 = vpop.f32.mrb[0].mxu0
      %v2088 = vadd.f32 %v2035, %v2087
      %v2089 = vpop.f32.mrb[0].mxu0
      %v2090 = vadd.f32 %v2037, %v2089
      %v2091 = vpop.f32.mrb[0].mxu0
      %v2092 = vadd.f32 %v2039, %v2091
      %v2093 = vpop.f32.mrb[0].mxu0
      %v2094 = vadd.f32 %v2041, %v2093
      %2095 = vdwg.mxu0
      %2096 = vmatprep.subr.bf16.mxu0 %v1521
      %2097 = vmatpush1.bf16.msra.mxu0 %v1520
      %2098 = vmatprep.subr.bf16.mxu0 0
      %2099 = vmatpush1.bf16.msra.mxu0 0
      %2100 = vmatprep.subr.bf16.mxu0 0
      %2101 = vmatpush1.bf16.msra.mxu0 0
      %2102 = vmatprep.subr.bf16.mxu0 0
      %2103 = vmatpush1.bf16.msra.mxu0 0
      %2104 = vmatprep.subr.bf16.mxu0 0
      %2105 = vmatpush1.bf16.msra.mxu0 0
      %2106 = vmatprep.subr.bf16.mxu0 0
      %2107 = vmatpush1.bf16.msra.mxu0 0
      %2108 = vmatprep.subr.bf16.mxu0 0
      %2109 = vmatpush1.bf16.msra.mxu0 0
      %2110 = vmatprep.subr.bf16.mxu0 0
      %2111 = vmatpush1.bf16.msra.mxu0 0
      %2112 = vmatprep.subr.bf16.mxu0 0
      %2113 = vmatpush1.bf16.msra.mxu0 0
      %2114 = vmatprep.subr.bf16.mxu0 0
      %2115 = vmatpush1.bf16.msra.mxu0 0
      %2116 = vmatprep.subr.bf16.mxu0 0
      %2117 = vmatpush1.bf16.msra.mxu0 0
      %2118 = vmatprep.subr.bf16.mxu0 0
      %2119 = vmatpush1.bf16.msra.mxu0 0
      %2120 = vmatprep.subr.bf16.mxu0 0
      %2121 = vmatpush1.bf16.msra.mxu0 0
      %2122 = vmatprep.subr.bf16.mxu0 0
      %2123 = vmatpush1.bf16.msra.mxu0 0
      %2124 = vmatprep.subr.bf16.mxu0 0
      %2125 = vmatpush1.bf16.msra.mxu0 0
      %2126 = vmatprep.subr.bf16.mxu0 0
      %2127 = vmatpush1.bf16.msra.mxu0 0
      %2128 = vmatprep.mubr.bf16.mxu0 0
      %2129 = vmatmul.mubr.bf16.gmra.mrb[0].mxu0 %v1720
      %v2130 = vpop.f32.mrb[0].mxu0
      %v2131 = vadd.f32 %v2078, %v2130
      %v2132 = vpop.f32.mrb[0].mxu0
      %v2133 = vadd.f32 %v2080, %v2132
      %v2134 = vpop.f32.mrb[0].mxu0
      %v2135 = vadd.f32 %v2082, %v2134
      %v2136 = vpop.f32.mrb[0].mxu0
      %v2137 = vadd.f32 %v2084, %v2136
      %2138 = vmatprep.mubr.bf16.mxu0 0
      %2139 = vmatmul.mubr.bf16.gmra.mrb[0].mxu0 %v1723
      %v2140 = vpop.f32.mrb[0].mxu0
      %v2141 = vadd.f32 %v2088, %v2140
      %v2142 = vpop.f32.mrb[0].mxu0
      %v2143 = vadd.f32 %v2090, %v2142
      %v2144 = vpop.f32.mrb[0].mxu0
      %v2145 = vadd.f32 %v2092, %v2144
      %v2146 = vpop.f32.mrb[0].mxu0
      %v2147 = vadd.f32 %v2094, %v2146
      %2148 = vdwg.mxu0
      %v2149 = vmax.f32 %v1919, 0.0
      %v2150 = vmax.f32 %v1921, 0.0
      %v2151 = vmax.f32 %v2131, 0.0
      %v2152 = vmax.f32 %v2133, 0.0
      %v2153 = vmax.f32 %v1923, 0.0
      %v2154 = vmax.f32 %v1925, 0.0
      %v2155 = vmax.f32 %v2135, 0.0
      %v2156 = vmax.f32 %v2137, 0.0
      %v2157 = vmax.f32 %v1929, 0.0
      %v2158 = vmax.f32 %v1931, 0.0
      %v2159 = vmax.f32 %v2141, 0.0
      %v2160 = vmax.f32 %v2143, 0.0
      %v2161 = vmax.f32 %v1933, 0.0
      %v2162 = vmax.f32 %v1935, 0.0
      %v2163 = vmax.f32 %v2145, 0.0
      %v2164 = vmax.f32 %v2147, 0.0
      %v2165 = vpack.c.bf16 %v2153, %v2149
      %v2166 = vpack.c.bf16 %v2154, %v2150
      %v2167 = vpack.c.bf16 %v2155, %v2151
      %v2168 = vpack.c.bf16 %v2156, %v2152
      %v2169 = vpack.c.bf16 %v2161, %v2157
      %v2170 = vpack.c.bf16 %v2162, %v2158
      %v2171 = vpack.c.bf16 %v2163, %v2159
      %v2172 = vpack.c.bf16 %v2164, %v2160
      %v2173 = vld [vmem:[%s4] sm:$0xff]
      %v2174 = vld [vmem:[%s4 + $0x8] sm:$0xff]
      %v2175 = vld [vmem:[%s4 + $0x10] sm:$0xff]
      %v2176 = vld [vmem:[%s4 + $0x18] sm:$0xff]
      %v2177 = vld [vmem:[%s4 + $0x20] sm:$0xff]
      %v2178 = vld [vmem:[%s4 + $0x28] sm:$0xff]
      %v2179 = vld [vmem:[%s4 + $0x30] sm:$0xff]
      %v2180 = vld [vmem:[%s4 + $0x38] sm:$0xff]
      %v2181 = vld [vmem:[%s4 + $0x40] sm:$0xff]
      %v2182 = vld [vmem:[%s4 + $0x48] sm:$0xff]
      %v2183 = vld [vmem:[%s4 + $0x50] sm:$0xff]
      %v2184 = vld [vmem:[%s4 + $0x58] sm:$0xff]
      %v2185 = vld [vmem:[%s4 + $0x60] sm:$0xff]
      %v2186 = vld [vmem:[%s4 + $0x68] sm:$0xff]
      %v2187 = vld [vmem:[%s4 + $0x70] sm:$0xff]
      %v2188 = vld [vmem:[%s4 + $0x78] sm:$0xff]
      %v2189 = vld [vmem:[%s4 + $0x80] sm:$0xff]
      %v2190 = vld [vmem:[%s4 + $0x88] sm:$0xff]
      %v2191 = vld [vmem:[%s4 + $0x90] sm:$0xff]
      %v2192 = vld [vmem:[%s4 + $0x98] sm:$0xff]
      %v2193 = vld [vmem:[%s4 + $0xa0] sm:$0xff]
      %v2194 = vld [vmem:[%s4 + $0xa8] sm:$0xff]
      %v2195 = vld [vmem:[%s4 + $0xb0] sm:$0xff]
      %v2196 = vld [vmem:[%s4 + $0xb8] sm:$0xff]
      %v2197 = vld [vmem:[%s4 + $0xc0] sm:$0xff]
      %v2198 = vld [vmem:[%s4 + $0xc8] sm:$0xff]
      %v2199 = vld [vmem:[%s4 + $0xd0] sm:$0xff]
      %v2200 = vld [vmem:[%s4 + $0xd8] sm:$0xff]
      %v2201 = vld [vmem:[%s4 + $0xe0] sm:$0xff]
      %v2202 = vld [vmem:[%s4 + $0xe8] sm:$0xff]
      %v2203 = vld [vmem:[%s4 + $0xf0] sm:$0xff]
      %v2204 = vld [vmem:[%s4 + $0xf8] sm:$0xff]
      %v2205 = vld [vmem:[%s4 + $0x100] sm:$0xff]
      %v2206 = vld [vmem:[%s4 + $0x108] sm:$0xff]
      %v2207 = vld [vmem:[%s4 + $0x110] sm:$0xff]
      %v2208 = vld [vmem:[%s4 + $0x118] sm:$0xff]
      %v2209 = vld [vmem:[%s4 + $0x120] sm:$0xff]
      %v2210 = vld [vmem:[%s4 + $0x128] sm:$0xff]
      %v2211 = vld [vmem:[%s4 + $0x130] sm:$0xff]
      %v2212 = vld [vmem:[%s4 + $0x138] sm:$0xff]
      %v2213 = vld [vmem:[%s4 + $0x140] sm:$0xff]
      %v2214 = vld [vmem:[%s4 + $0x148] sm:$0xff]
      %v2215 = vld [vmem:[%s4 + $0x150] sm:$0xff]
      %v2216 = vld [vmem:[%s4 + $0x158] sm:$0xff]
      %v2217 = vld [vmem:[%s4 + $0x160] sm:$0xff]
      %v2218 = vld [vmem:[%s4 + $0x168] sm:$0xff]
      %v2219 = vld [vmem:[%s4 + $0x170] sm:$0xff]
      %v2220 = vld [vmem:[%s4 + $0x178] sm:$0xff]
      %v2221 = vld [vmem:[%s4 + $0x180] sm:$0xff]
      %v2222 = vld [vmem:[%s4 + $0x188] sm:$0xff]
      %v2223 = vld [vmem:[%s5] sm:$0x3]
      %v2225 = vlaneseq
      %v2226 = vshrl.u32 %v2225, 7
      %v2227 = vsub.s32 0, %v2226
      %v2228 = vrot.slane %v2223, %v2227
      %v2229 = vlaneseq
      %v2230 = vshrl.u32 %v2229, 7
      %v2231 = vsub.s32 1, %v2230
      %v2232 = vrot.slane %v2223, %v2231
      %v2285 = vunpack.c.l.b16 %v2173
      %v2286 = vunpack.c.h.b16 %v2173
      %v2287 = vunpack.c.l.b16 %v2174
      %v2288 = vunpack.c.h.b16 %v2174
      %v2289 = vunpack.c.l.b16 %v2175
      %v2290 = vunpack.c.h.b16 %v2175
      %v2291 = vunpack.c.l.b16 %v2176
      %v2292 = vunpack.c.h.b16 %v2176
      %v2293 = vunpack.c.l.b16 %v2177
      %v2294 = vunpack.c.h.b16 %v2177
      %v2295 = vunpack.c.l.b16 %v2178
      %v2296 = vunpack.c.h.b16 %v2178
      %v2297 = vunpack.c.l.b16 %v2179
      %v2298 = vunpack.c.h.b16 %v2179
      %v2299 = vunpack.c.l.b16 %v2180
      %v2300 = vunpack.c.h.b16 %v2180
      %v2301 = vunpack.c.l.b16 %v2181
      %v2302 = vunpack.c.h.b16 %v2181
      %v2303 = vunpack.c.l.b16 %v2182
      %v2304 = vunpack.c.h.b16 %v2182
      %v2305 = vunpack.c.l.b16 %v2183
      %v2306 = vunpack.c.h.b16 %v2183
      %v2307 = vunpack.c.l.b16 %v2184
      %v2308 = vunpack.c.h.b16 %v2184
      %v2309 = vunpack.c.l.b16 %v2185
      %v2310 = vunpack.c.h.b16 %v2185
      %v2311 = vunpack.c.l.b16 %v2186
      %v2312 = vunpack.c.h.b16 %v2186
      %v2313 = vunpack.c.l.b16 %v2187
      %v2314 = vunpack.c.h.b16 %v2187
      %v2315 = vunpack.c.l.b16 %v2188
      %v2316 = vunpack.c.h.b16 %v2188
      %v2317 = vunpack.c.l.b16 %v2189
      %v2318 = vunpack.c.h.b16 %v2189
      %v2319 = vunpack.c.l.b16 %v2190
      %v2320 = vunpack.c.h.b16 %v2190
      %v2321 = vunpack.c.l.b16 %v2191
      %v2322 = vunpack.c.h.b16 %v2191
      %v2323 = vunpack.c.l.b16 %v2192
      %v2324 = vunpack.c.h.b16 %v2192
      %v2325 = vunpack.c.l.b16 %v2193
      %v2326 = vunpack.c.h.b16 %v2193
      %v2327 = vunpack.c.l.b16 %v2194
      %v2328 = vunpack.c.h.b16 %v2194
      %v2329 = vunpack.c.l.b16 %v2195
      %v2330 = vunpack.c.h.b16 %v2195
      %v2331 = vunpack.c.l.b16 %v2196
      %v2332 = vunpack.c.h.b16 %v2196
      %v2333 = vunpack.c.l.b16 %v2197
      %v2334 = vunpack.c.h.b16 %v2197
      %v2335 = vunpack.c.l.b16 %v2198
      %v2336 = vunpack.c.h.b16 %v2198
      %v2337 = vunpack.c.l.b16 %v2199
      %v2338 = vunpack.c.h.b16 %v2199
      %v2339 = vunpack.c.l.b16 %v2200
      %v2340 = vunpack.c.h.b16 %v2200
      %v2341 = vunpack.c.l.b16 %v2201
      %v2342 = vunpack.c.h.b16 %v2201
      %v2343 = vunpack.c.l.b16 %v2202
      %v2344 = vunpack.c.h.b16 %v2202
      %v2345 = vunpack.c.l.b16 %v2203
      %v2346 = vunpack.c.h.b16 %v2203
      %v2347 = vunpack.c.l.b16 %v2204
      %v2348 = vunpack.c.h.b16 %v2204
      %v2349 = vunpack.c.l.b16 %v2205
      %v2350 = vunpack.c.h.b16 %v2205
      %v2351 = vunpack.c.l.b16 %v2206
      %v2352 = vunpack.c.h.b16 %v2206
      %v2353 = vunpack.c.l.b16 %v2207
      %v2354 = vunpack.c.h.b16 %v2207
      %v2355 = vunpack.c.l.b16 %v2208
      %v2356 = vunpack.c.h.b16 %v2208
      %v2357 = vunpack.c.l.b16 %v2209
      %v2358 = vunpack.c.h.b16 %v2209
      %v2359 = vunpack.c.l.b16 %v2210
      %v2360 = vunpack.c.h.b16 %v2210
      %v2361 = vunpack.c.l.b16 %v2211
      %v2362 = vunpack.c.h.b16 %v2211
      %v2363 = vunpack.c.l.b16 %v2212
      %v2364 = vunpack.c.h.b16 %v2212
      %v2365 = vunpack.c.l.b16 %v2213
      %v2366 = vunpack.c.h.b16 %v2213
      %v2367 = vunpack.c.l.b16 %v2214
      %v2368 = vunpack.c.h.b16 %v2214
      %v2369 = vunpack.c.l.b16 %v2215
      %v2370 = vunpack.c.h.b16 %v2215
      %v2371 = vunpack.c.l.b16 %v2216
      %v2372 = vunpack.c.h.b16 %v2216
      %v2373 = vunpack.c.l.b16 %v2217
      %v2374 = vunpack.c.h.b16 %v2217
      %v2375 = vunpack.c.l.b16 %v2218
      %v2376 = vunpack.c.h.b16 %v2218
      %v2377 = vunpack.c.l.b16 %v2219
      %v2378 = vunpack.c.h.b16 %v2219
      %v2379 = vunpack.c.l.b16 %v2220
      %v2380 = vunpack.c.h.b16 %v2220
      %v2381 = vunpack.c.l.b16 %v2221
      %v2382 = vunpack.c.h.b16 %v2221
      %v2383 = vunpack.c.l.b16 %v2222
      %v2384 = vunpack.c.h.b16 %v2222
      %v2385 = vpack.c.b16 %v2287, %v2285
      %v2386 = vpack.c.b16 %v2288, %v2286
      %v2387 = vpack.c.b16 %v2291, %v2289
      %v2388 = vpack.c.b16 %v2292, %v2290
      %v2389 = vpack.c.b16 %v2295, %v2293
      %v2390 = vpack.c.b16 %v2296, %v2294
      %v2391 = vpack.c.b16 %v2299, %v2297
      %v2392 = vpack.c.b16 %v2300, %v2298
      %v2393 = vpack.c.b16 %v2303, %v2301
      %v2394 = vpack.c.b16 %v2304, %v2302
      %v2395 = vpack.c.b16 %v2307, %v2305
      %v2396 = vpack.c.b16 %v2308, %v2306
      %v2397 = vpack.c.b16 %v2311, %v2309
      %v2398 = vpack.c.b16 %v2312, %v2310
      %v2399 = vpack.c.b16 %v2315, %v2313
      %v2400 = vpack.c.b16 %v2316, %v2314
      %v2401 = vpack.c.b16 %v2319, %v2317
      %v2402 = vpack.c.b16 %v2320, %v2318
      %v2403 = vpack.c.b16 %v2323, %v2321
      %v2404 = vpack.c.b16 %v2324, %v2322
      %v2405 = vpack.c.b16 %v2327, %v2325
      %v2406 = vpack.c.b16 %v2328, %v2326
      %v2407 = vpack.c.b16 %v2331, %v2329
      %v2408 = vpack.c.b16 %v2332, %v2330
      %v2409 = vpack.c.b16 %v2335, %v2333
      %v2410 = vpack.c.b16 %v2336, %v2334
      %v2411 = vpack.c.b16 %v2339, %v2337
      %v2412 = vpack.c.b16 %v2340, %v2338
      %v2413 = vpack.c.b16 %v2343, %v2341
      %v2414 = vpack.c.b16 %v2344, %v2342
      %v2415 = vpack.c.b16 %v2347, %v2345
      %v2416 = vpack.c.b16 %v2348, %v2346
      %v2417 = vpack.c.b16 %v2351, %v2349
      %v2418 = vpack.c.b16 %v2352, %v2350
      %v2419 = vpack.c.b16 %v2355, %v2353
      %v2420 = vpack.c.b16 %v2356, %v2354
      %v2421 = vpack.c.b16 %v2359, %v2357
      %v2422 = vpack.c.b16 %v2360, %v2358
      %v2423 = vpack.c.b16 %v2363, %v2361
      %v2424 = vpack.c.b16 %v2364, %v2362
      %v2425 = vpack.c.b16 %v2367, %v2365
      %v2426 = vpack.c.b16 %v2368, %v2366
      %v2427 = vpack.c.b16 %v2371, %v2369
      %v2428 = vpack.c.b16 %v2372, %v2370
      %v2429 = vpack.c.b16 %v2375, %v2373
      %v2430 = vpack.c.b16 %v2376, %v2374
      %v2431 = vpack.c.b16 %v2379, %v2377
      %v2432 = vpack.c.b16 %v2380, %v2378
      %v2433 = vpack.c.b16 %v2383, %v2381
      %v2434 = vpack.c.b16 %v2384, %v2382
      %v2486 = vsel %vm1718, %v2168, 0
      %v2489 = vsel %vm1718, %v2172, 0
      %2491 = vmatprep.subr.bf16.mxu0 %v2386
      %2492 = vmatpush1.bf16.msra.mxu0 %v2385
      %2493 = vmatprep.subr.bf16.mxu0 %v2388
      %2494 = vmatpush1.bf16.msra.mxu0 %v2387
      %2495 = vmatprep.subr.bf16.mxu0 %v2390
      %2496 = vmatpush1.bf16.msra.mxu0 %v2389
      %2497 = vmatprep.subr.bf16.mxu0 %v2392
      %2498 = vmatpush1.bf16.msra.mxu0 %v2391
      %2499 = vmatprep.subr.bf16.mxu0 %v2394
      %2500 = vmatpush1.bf16.msra.mxu0 %v2393
      %2501 = vmatprep.subr.bf16.mxu0 %v2396
      %2502 = vmatpush1.bf16.msra.mxu0 %v2395
      %2503 = vmatprep.subr.bf16.mxu0 %v2398
      %2504 = vmatpush1.bf16.msra.mxu0 %v2397
      %2505 = vmatprep.subr.bf16.mxu0 %v2400
      %2506 = vmatpush1.bf16.msra.mxu0 %v2399
      %2507 = vmatprep.subr.bf16.mxu0 %v2402
      %2508 = vmatpush1.bf16.msra.mxu0 %v2401
      %2509 = vmatprep.subr.bf16.mxu0 %v2404
      %2510 = vmatpush1.bf16.msra.mxu0 %v2403
      %2511 = vmatprep.subr.bf16.mxu0 %v2406
      %2512 = vmatpush1.bf16.msra.mxu0 %v2405
      %2513 = vmatprep.subr.bf16.mxu0 %v2408
      %2514 = vmatpush1.bf16.msra.mxu0 %v2407
      %2515 = vmatprep.subr.bf16.mxu0 %v2410
      %2516 = vmatpush1.bf16.msra.mxu0 %v2409
      %2517 = vmatprep.subr.bf16.mxu0 %v2412
      %2518 = vmatpush1.bf16.msra.mxu0 %v2411
      %2519 = vmatprep.subr.bf16.mxu0 %v2414
      %2520 = vmatpush1.bf16.msra.mxu0 %v2413
      %2521 = vmatprep.subr.bf16.mxu0 %v2416
      %2522 = vmatpush1.bf16.msra.mxu0 %v2415
      %2523 = vmatprep.mubr.bf16.mxu0 %v2166
      %2524 = vmatmul.mubr.bf16.gmra.mrb[0].mxu0 %v2165
      %v2525 = vpop.f32.mrb[0].mxu0
      %v2526 = vadd.f32 %v2228, %v2525
      %v2527 = vpop.f32.mrb[0].mxu0
      %v2528 = vadd.f32 %v2232, %v2527
      %v2529 = vpop.f32.mrb[0].mxu0
      %v2530 = vadd.f32 %v2228, %v2529
      %v2531 = vpop.f32.mrb[0].mxu0
      %v2532 = vadd.f32 %v2232, %v2531
      %2533 = vmatprep.mubr.bf16.mxu0 %v2170
      %2534 = vmatmul.mubr.bf16.gmra.mrb[0].mxu0 %v2169
      %v2535 = vpop.f32.mrb[0].mxu0
      %v2536 = vadd.f32 %v2228, %v2535
      %v2537 = vpop.f32.mrb[0].mxu0
      %v2538 = vadd.f32 %v2232, %v2537
      %v2539 = vpop.f32.mrb[0].mxu0
      %v2540 = vadd.f32 %v2228, %v2539
      %v2541 = vpop.f32.mrb[0].mxu0
      %v2542 = vadd.f32 %v2232, %v2541
      %2543 = vdwg.mxu0
      %2544 = vmatprep.subr.bf16.mxu0 %v2418
      %2545 = vmatpush1.bf16.msra.mxu0 %v2417
      %2546 = vmatprep.subr.bf16.mxu0 %v2420
      %2547 = vmatpush1.bf16.msra.mxu0 %v2419
      %2548 = vmatprep.subr.bf16.mxu0 %v2422
      %2549 = vmatpush1.bf16.msra.mxu0 %v2421
      %2550 = vmatprep.subr.bf16.mxu0 %v2424
      %2551 = vmatpush1.bf16.msra.mxu0 %v2423
      %2552 = vmatprep.subr.bf16.mxu0 %v2426
      %2553 = vmatpush1.bf16.msra.mxu0 %v2425
      %2554 = vmatprep.subr.bf16.mxu0 %v2428
      %2555 = vmatpush1.bf16.msra.mxu0 %v2427
      %2556 = vmatprep.subr.bf16.mxu0 %v2430
      %2557 = vmatpush1.bf16.msra.mxu0 %v2429
      %2558 = vmatprep.subr.bf16.mxu0 %v2432
      %2559 = vmatpush1.bf16.msra.mxu0 %v2431
      %2560 = vmatprep.subr.bf16.mxu0 %v2434
      %2561 = vmatpush1.bf16.msra.mxu0 %v2433
      %2562 = vmatprep.subr.bf16.mxu0 0
      %2563 = vmatpush1.bf16.msra.mxu0 0
      %2564 = vmatprep.subr.bf16.mxu0 0
      %2565 = vmatpush1.bf16.msra.mxu0 0
      %2566 = vmatprep.subr.bf16.mxu0 0
      %2567 = vmatpush1.bf16.msra.mxu0 0
      %2568 = vmatprep.subr.bf16.mxu0 0
      %2569 = vmatpush1.bf16.msra.mxu0 0
      %2570 = vmatprep.subr.bf16.mxu0 0
      %2571 = vmatpush1.bf16.msra.mxu0 0
      %2572 = vmatprep.subr.bf16.mxu0 0
      %2573 = vmatpush1.bf16.msra.mxu0 0
      %2574 = vmatprep.subr.bf16.mxu0 0
      %2575 = vmatpush1.bf16.msra.mxu0 0
      %2576 = vmatprep.mubr.bf16.mxu0 %v2486
      %2577 = vmatmul.mubr.bf16.gmra.mrb[0].mxu0 %v2167
      %v2578 = vpop.f32.mrb[0].mxu0
      %v2579 = vadd.f32 %v2526, %v2578
      %v2580 = vpop.f32.mrb[0].mxu0
      %v2581 = vadd.f32 %v2528, %v2580
      %v2582 = vpop.f32.mrb[0].mxu0
      %v2583 = vadd.f32 %v2530, %v2582
      %v2584 = vpop.f32.mrb[0].mxu0
      %v2585 = vadd.f32 %v2532, %v2584
      %2586 = vmatprep.mubr.bf16.mxu0 %v2489
      %2587 = vmatmul.mubr.bf16.gmra.mrb[0].mxu0 %v2171
      %v2588 = vpop.f32.mrb[0].mxu0
      %v2589 = vadd.f32 %v2536, %v2588
      %v2590 = vpop.f32.mrb[0].mxu0
      %v2591 = vadd.f32 %v2538, %v2590
      %v2592 = vpop.f32.mrb[0].mxu0
      %v2593 = vadd.f32 %v2540, %v2592
      %v2594 = vpop.f32.mrb[0].mxu0
      %v2595 = vadd.f32 %v2542, %v2594
      %2596 = vdwg.mxu0
      %v2597 = vld [vmem:[%s417] sm:$0xff]
      %v2598 = vld [vmem:[%s417 + $0x8] sm:$0xff]
      %v2599 = vld [vmem:[%s417 + $0x10] sm:$0xff]
      %v2600 = vld [vmem:[%s417 + $0x18] sm:$0xff]
      %v2601 = vmul.f32 %v2581, 0.5
      %v2602 = vmul.f32 %v2585, 0.5
      %v2603 = vmul.f32 %v2591, 0.5
      %v2604 = vmul.f32 %v2595, 0.5
      %v2605 = vmul.f32 %v2601, 1.442695
      %v2606 = vpow.pop %v2605
      %v2607 = vmul.f32 %v2602, 1.442695
      %v2608 = vpow.pop %v2607
      %v2609 = vmul.f32 %v2603, 1.442695
      %v2610 = vpow.pop %v2609
      %v2611 = vmul.f32 %v2604, 1.442695
      %v2612 = vpow.pop %v2611
      %v2613 = vmul.f32 %v2597, %v2606
      %v2614 = vmul.f32 %v2598, %v2608
      %v2615 = vmul.f32 %v2599, %v2610
      %v2616 = vmul.f32 %v2600, %v2612
      %v2617 = vadd.f32 %v2579, %v2613
      %v2618 = vadd.f32 %v2583, %v2614
      %v2619 = vadd.f32 %v2589, %v2615
      %v2620 = vadd.f32 %v2593, %v2616
      %v2621 = vpack.c.bf16 %v2618, %v2617
      %v2622 = vpack.c.bf16 %v2620, %v2619
      %v2623 = vld [vmem:[%s6] sm:$0xff]
      %v2624 = vld [vmem:[%s6 + $0x8] sm:$0xff]
      %v2625 = vld [vmem:[%s6 + $0x10] sm:$0xff]
      %v2626 = vld [vmem:[%s6 + $0x18] sm:$0xff]
      %v2627 = vld [vmem:[%s6 + $0x20] sm:$0xff]
      %v2628 = vld [vmem:[%s6 + $0x28] sm:$0xff]
      %v2629 = vld [vmem:[%s6 + $0x30] sm:$0xff]
      %v2630 = vld [vmem:[%s6 + $0x38] sm:$0xff]
      %v2631 = vld [vmem:[%s6 + $0x40] sm:$0xff]
      %v2632 = vld [vmem:[%s6 + $0x48] sm:$0xff]
      %v2633 = vld [vmem:[%s6 + $0x50] sm:$0xff]
      %v2634 = vld [vmem:[%s6 + $0x58] sm:$0xff]
      %v2635 = vld [vmem:[%s6 + $0x60] sm:$0xff]
      %v2636 = vld [vmem:[%s6 + $0x68] sm:$0xff]
      %v2637 = vld [vmem:[%s6 + $0x70] sm:$0xff]
      %v2638 = vld [vmem:[%s6 + $0x78] sm:$0xff]
      %v2639 = vld [vmem:[%s6 + $0x80] sm:$0xff]
      %v2640 = vld [vmem:[%s6 + $0x88] sm:$0xff]
      %v2641 = vld [vmem:[%s6 + $0x90] sm:$0xff]
      %v2642 = vld [vmem:[%s6 + $0x98] sm:$0xff]
      %v2643 = vld [vmem:[%s6 + $0xa0] sm:$0xff]
      %v2644 = vld [vmem:[%s6 + $0xa8] sm:$0xff]
      %v2645 = vld [vmem:[%s6 + $0xb0] sm:$0xff]
      %v2646 = vld [vmem:[%s6 + $0xb8] sm:$0xff]
      %v2647 = vld [vmem:[%s6 + $0xc0] sm:$0xff]
      %v2648 = vld [vmem:[%s6 + $0xc8] sm:$0xff]
      %v2649 = vld [vmem:[%s6 + $0xd0] sm:$0xff]
      %v2650 = vld [vmem:[%s6 + $0xd8] sm:$0xff]
      %v2651 = vld [vmem:[%s6 + $0xe0] sm:$0xff]
      %v2652 = vld [vmem:[%s6 + $0xe8] sm:$0xff]
      %v2653 = vld [vmem:[%s6 + $0xf0] sm:$0xff]
      %v2654 = vld [vmem:[%s6 + $0xf8] sm:$0xff]
      %v2655 = vld [vmem:[%s7] sm:$0xf]
      %v2657 = vlaneseq
      %v2658 = vshrl.u32 %v2657, 7
      %v2659 = vsub.s32 0, %v2658
      %v2660 = vrot.slane %v2655, %v2659
      %v2661 = vlaneseq
      %v2662 = vshrl.u32 %v2661, 7
      %v2663 = vsub.s32 1, %v2662
      %v2664 = vrot.slane %v2655, %v2663
      %v2665 = vlaneseq
      %v2666 = vshrl.u32 %v2665, 7
      %v2667 = vsub.s32 2, %v2666
      %v2668 = vrot.slane %v2655, %v2667
      %v2669 = vlaneseq
      %v2670 = vshrl.u32 %v2669, 7
      %v2671 = vsub.s32 3, %v2670
      %v2672 = vrot.slane %v2655, %v2671
      %v2709 = vunpack.c.l.b16 %v2623
      %v2710 = vunpack.c.h.b16 %v2623
      %v2711 = vunpack.c.l.b16 %v2624
      %v2712 = vunpack.c.h.b16 %v2624
      %v2713 = vunpack.c.l.b16 %v2625
      %v2714 = vunpack.c.h.b16 %v2625
      %v2715 = vunpack.c.l.b16 %v2626
      %v2716 = vunpack.c.h.b16 %v2626
      %v2717 = vunpack.c.l.b16 %v2627
      %v2718 = vunpack.c.h.b16 %v2627
      %v2719 = vunpack.c.l.b16 %v2628
      %v2720 = vunpack.c.h.b16 %v2628
      %v2721 = vunpack.c.l.b16 %v2629
      %v2722 = vunpack.c.h.b16 %v2629
      %v2723 = vunpack.c.l.b16 %v2630
      %v2724 = vunpack.c.h.b16 %v2630
      %v2725 = vunpack.c.l.b16 %v2631
      %v2726 = vunpack.c.h.b16 %v2631
      %v2727 = vunpack.c.l.b16 %v2632
      %v2728 = vunpack.c.h.b16 %v2632
      %v2729 = vunpack.c.l.b16 %v2633
      %v2730 = vunpack.c.h.b16 %v2633
      %v2731 = vunpack.c.l.b16 %v2634
      %v2732 = vunpack.c.h.b16 %v2634
      %v2733 = vunpack.c.l.b16 %v2635
      %v2734 = vunpack.c.h.b16 %v2635
      %v2735 = vunpack.c.l.b16 %v2636
      %v2736 = vunpack.c.h.b16 %v2636
      %v2737 = vunpack.c.l.b16 %v2637
      %v2738 = vunpack.c.h.b16 %v2637
      %v2739 = vunpack.c.l.b16 %v2638
      %v2740 = vunpack.c.h.b16 %v2638
      %v2741 = vunpack.c.l.b16 %v2639
      %v2742 = vunpack.c.h.b16 %v2639
      %v2743 = vunpack.c.l.b16 %v2640
      %v2744 = vunpack.c.h.b16 %v2640
      %v2745 = vunpack.c.l.b16 %v2641
      %v2746 = vunpack.c.h.b16 %v2641
      %v2747 = vunpack.c.l.b16 %v2642
      %v2748 = vunpack.c.h.b16 %v2642
      %v2749 = vunpack.c.l.b16 %v2643
      %v2750 = vunpack.c.h.b16 %v2643
      %v2751 = vunpack.c.l.b16 %v2644
      %v2752 = vunpack.c.h.b16 %v2644
      %v2753 = vunpack.c.l.b16 %v2645
      %v2754 = vunpack.c.h.b16 %v2645
      %v2755 = vunpack.c.l.b16 %v2646
      %v2756 = vunpack.c.h.b16 %v2646
      %v2757 = vunpack.c.l.b16 %v2647
      %v2758 = vunpack.c.h.b16 %v2647
      %v2759 = vunpack.c.l.b16 %v2648
      %v2760 = vunpack.c.h.b16 %v2648
      %v2761 = vunpack.c.l.b16 %v2649
      %v2762 = vunpack.c.h.b16 %v2649
      %v2763 = vunpack.c.l.b16 %v2650
      %v2764 = vunpack.c.h.b16 %v2650
      %v2765 = vunpack.c.l.b16 %v2651
      %v2766 = vunpack.c.h.b16 %v2651
      %v2767 = vunpack.c.l.b16 %v2652
      %v2768 = vunpack.c.h.b16 %v2652
      %v2769 = vunpack.c.l.b16 %v2653
      %v2770 = vunpack.c.h.b16 %v2653
      %v2771 = vunpack.c.l.b16 %v2654
      %v2772 = vunpack.c.h.b16 %v2654
      %v2773 = vpack.c.b16 %v2713, %v2709
      %v2774 = vpack.c.b16 %v2714, %v2710
      %v2775 = vpack.c.b16 %v2715, %v2711
      %v2776 = vpack.c.b16 %v2716, %v2712
      %v2777 = vpack.c.b16 %v2721, %v2717
      %v2778 = vpack.c.b16 %v2722, %v2718
      %v2779 = vpack.c.b16 %v2723, %v2719
      %v2780 = vpack.c.b16 %v2724, %v2720
      %v2781 = vpack.c.b16 %v2729, %v2725
      %v2782 = vpack.c.b16 %v2730, %v2726
      %v2783 = vpack.c.b16 %v2731, %v2727
      %v2784 = vpack.c.b16 %v2732, %v2728
      %v2785 = vpack.c.b16 %v2737, %v2733
      %v2786 = vpack.c.b16 %v2738, %v2734
      %v2787 = vpack.c.b16 %v2739, %v2735
      %v2788 = vpack.c.b16 %v2740, %v2736
      %v2789 = vpack.c.b16 %v2745, %v2741
      %v2790 = vpack.c.b16 %v2746, %v2742
      %v2791 = vpack.c.b16 %v2747, %v2743
      %v2792 = vpack.c.b16 %v2748, %v2744
      %v2793 = vpack.c.b16 %v2753, %v2749
      %v2794 = vpack.c.b16 %v2754, %v2750
      %v2795 = vpack.c.b16 %v2755, %v2751
      %v2796 = vpack.c.b16 %v2756, %v2752
      %v2797 = vpack.c.b16 %v2761, %v2757
      %v2798 = vpack.c.b16 %v2762, %v2758
      %v2799 = vpack.c.b16 %v2763, %v2759
      %v2800 = vpack.c.b16 %v2764, %v2760
      %v2801 = vpack.c.b16 %v2769, %v2765
      %v2802 = vpack.c.b16 %v2770, %v2766
      %v2803 = vpack.c.b16 %v2771, %v2767
      %v2804 = vpack.c.b16 %v2772, %v2768
      %2837 = vmatprep.subr.bf16.mxu0 %v2774
      %2838 = vmatpush1.bf16.msra.mxu0 %v2773
      %2839 = vmatprep.subr.bf16.mxu0 %v2778
      %2840 = vmatpush1.bf16.msra.mxu0 %v2777
      %2841 = vmatprep.subr.bf16.mxu0 %v2782
      %2842 = vmatpush1.bf16.msra.mxu0 %v2781
      %2843 = vmatprep.subr.bf16.mxu0 %v2786
      %2844 = vmatpush1.bf16.msra.mxu0 %v2785
      %2845 = vmatprep.subr.bf16.mxu0 %v2790
      %2846 = vmatpush1.bf16.msra.mxu0 %v2789
      %2847 = vmatprep.subr.bf16.mxu0 %v2794
      %2848 = vmatpush1.bf16.msra.mxu0 %v2793
      %2849 = vmatprep.subr.bf16.mxu0 %v2798
      %2850 = vmatpush1.bf16.msra.mxu0 %v2797
      %2851 = vmatprep.subr.bf16.mxu0 %v2802
      %2852 = vmatpush1.bf16.msra.mxu0 %v2801
      %2853 = vmatprep.subr.bf16.mxu0 0
      %2854 = vmatpush1.bf16.msra.mxu0 0
      %2855 = vmatprep.subr.bf16.mxu0 0
      %2856 = vmatpush1.bf16.msra.mxu0 0
      %2857 = vmatprep.subr.bf16.mxu0 0
      %2858 = vmatpush1.bf16.msra.mxu0 0
      %2859 = vmatprep.subr.bf16.mxu0 0
      %2860 = vmatpush1.bf16.msra.mxu0 0
      %2861 = vmatprep.subr.bf16.mxu0 0
      %2862 = vmatpush1.bf16.msra.mxu0 0
      %2863 = vmatprep.subr.bf16.mxu0 0
      %2864 = vmatpush1.bf16.msra.mxu0 0
      %2865 = vmatprep.subr.bf16.mxu0 0
      %2866 = vmatpush1.bf16.msra.mxu0 0
      %2867 = vmatprep.subr.bf16.mxu0 0
      %2868 = vmatpush1.bf16.msra.mxu0 0
      %2869 = vmatprep.mubr.bf16.mxu0 0
      %2870 = vmatmul.mubr.bf16.gmra.mrb[0].mxu0 %v2621
      %v2871 = vpop.f32.mrb[0].mxu0
      %v2872 = vadd.f32 %v2660, %v2871
      %v2873 = vpop.f32.mrb[0].mxu0
      %v2874 = vadd.f32 %v2664, %v2873
      %v2875 = vpop.f32.mrb[0].mxu0
      %v2876 = vadd.f32 %v2660, %v2875
      %v2877 = vpop.f32.mrb[0].mxu0
      %v2878 = vadd.f32 %v2664, %v2877
      %2879 = vmatprep.mubr.bf16.mxu0 0
      %2880 = vmatmul.mubr.bf16.gmra.mrb[0].mxu0 %v2622
      %v2881 = vpop.f32.mrb[0].mxu0
      %v2882 = vadd.f32 %v2660, %v2881
      %v2883 = vpop.f32.mrb[0].mxu0
      %v2884 = vadd.f32 %v2664, %v2883
      %v2885 = vpop.f32.mrb[0].mxu0
      %v2886 = vadd.f32 %v2660, %v2885
      %v2887 = vpop.f32.mrb[0].mxu0
      %v2888 = vadd.f32 %v2664, %v2887
      %2889 = vdwg.mxu0
      %2890 = vmatprep.subr.bf16.mxu0 %v2776
      %2891 = vmatpush1.bf16.msra.mxu0 %v2775
      %2892 = vmatprep.subr.bf16.mxu0 %v2780
      %2893 = vmatpush1.bf16.msra.mxu0 %v2779
      %2894 = vmatprep.subr.bf16.mxu0 %v2784
      %2895 = vmatpush1.bf16.msra.mxu0 %v2783
      %2896 = vmatprep.subr.bf16.mxu0 %v2788
      %2897 = vmatpush1.bf16.msra.mxu0 %v2787
      %2898 = vmatprep.subr.bf16.mxu0 %v2792
      %2899 = vmatpush1.bf16.msra.mxu0 %v2791
      %2900 = vmatprep.subr.bf16.mxu0 %v2796
      %2901 = vmatpush1.bf16.msra.mxu0 %v2795
      %2902 = vmatprep.subr.bf16.mxu0 %v2800
      %2903 = vmatpush1.bf16.msra.mxu0 %v2799
      %2904 = vmatprep.subr.bf16.mxu0 %v2804
      %2905 = vmatpush1.bf16.msra.mxu0 %v2803
      %2906 = vmatprep.subr.bf16.mxu0 0
      %2907 = vmatpush1.bf16.msra.mxu0 0
      %2908 = vmatprep.subr.bf16.mxu0 0
      %2909 = vmatpush1.bf16.msra.mxu0 0
      %2910 = vmatprep.subr.bf16.mxu0 0
      %2911 = vmatpush1.bf16.msra.mxu0 0
      %2912 = vmatprep.subr.bf16.mxu0 0
      %2913 = vmatpush1.bf16.msra.mxu0 0
      %2914 = vmatprep.subr.bf16.mxu0 0
      %2915 = vmatpush1.bf16.msra.mxu0 0
      %2916 = vmatprep.subr.bf16.mxu0 0
      %2917 = vmatpush1.bf16.msra.mxu0 0
      %2918 = vmatprep.subr.bf16.mxu0 0
      %2919 = vmatpush1.bf16.msra.mxu0 0
      %2920 = vmatprep.subr.bf16.mxu0 0
      %2921 = vmatpush1.bf16.msra.mxu0 0
      %2922 = vmatprep.mubr.bf16.mxu0 0
      %2923 = vmatmul.mubr.bf16.gmra.mrb[0].mxu0 %v2621
      %v2924 = vpop.f32.mrb[0].mxu0
      %v2925 = vadd.f32 %v2668, %v2924
      %v2926 = vpop.f32.mrb[0].mxu0
      %v2927 = vadd.f32 %v2672, %v2926
      %v2928 = vpop.f32.mrb[0].mxu0
      %v2929 = vadd.f32 %v2668, %v2928
      %v2930 = vpop.f32.mrb[0].mxu0
      %v2931 = vadd.f32 %v2672, %v2930
      %2932 = vmatprep.mubr.bf16.mxu0 0
      %2933 = vmatmul.mubr.bf16.gmra.mrb[0].mxu0 %v2622
      %v2934 = vpop.f32.mrb[0].mxu0
      %v2935 = vadd.f32 %v2668, %v2934
      %v2936 = vpop.f32.mrb[0].mxu0
      %v2937 = vadd.f32 %v2672, %v2936
      %v2938 = vpop.f32.mrb[0].mxu0
      %v2939 = vadd.f32 %v2668, %v2938
      %v2940 = vpop.f32.mrb[0].mxu0
      %v2941 = vadd.f32 %v2672, %v2940
      %2942 = vdwg.mxu0
      %v2943 = vmax.f32 %v2872, 0.0
      %v2944 = vmax.f32 %v2874, 0.0
      %v2945 = vmax.f32 %v2925, 0.0
      %v2946 = vmax.f32 %v2927, 0.0
      %v2947 = vmax.f32 %v2876, 0.0
      %v2948 = vmax.f32 %v2878, 0.0
      %v2949 = vmax.f32 %v2929, 0.0
      %v2950 = vmax.f32 %v2931, 0.0
      %v2951 = vmax.f32 %v2882, 0.0
      %v2952 = vmax.f32 %v2884, 0.0
      %v2953 = vmax.f32 %v2935, 0.0
      %v2954 = vmax.f32 %v2937, 0.0
      %v2955 = vmax.f32 %v2886, 0.0
      %v2956 = vmax.f32 %v2888, 0.0
      %v2957 = vmax.f32 %v2939, 0.0
      %v2958 = vmax.f32 %v2941, 0.0
      %v2959 = vpack.c.bf16 %v2947, %v2943
      %v2960 = vpack.c.bf16 %v2948, %v2944
      %v2961 = vpack.c.bf16 %v2949, %v2945
      %v2962 = vpack.c.bf16 %v2950, %v2946
      %v2963 = vpack.c.bf16 %v2955, %v2951
      %v2964 = vpack.c.bf16 %v2956, %v2952
      %v2965 = vpack.c.bf16 %v2957, %v2953
      %v2966 = vpack.c.bf16 %v2958, %v2954
      %v2967 = vld [vmem:[%s8] sm:$0xff]
      %v2968 = vld [vmem:[%s8 + $0x8] sm:$0xff]
      %v2969 = vld [vmem:[%s8 + $0x10] sm:$0xff]
      %v2970 = vld [vmem:[%s8 + $0x18] sm:$0xf]
      %v2971 = vld [vmem:[%s8 + $0x1c] sm:$0xff]
      %v2972 = vld [vmem:[%s8 + $0x24] sm:$0xff]
      %v2973 = vld [vmem:[%s8 + $0x2c] sm:$0xff]
      %v2974 = vld [vmem:[%s8 + $0x34] sm:$0xf]
      %v2975 = vld [vmem:[%s8 + $0x38] sm:$0xff]
      %v2976 = vld [vmem:[%s8 + $0x40] sm:$0xff]
      %v2977 = vld [vmem:[%s8 + $0x48] sm:$0xff]
      %v2978 = vld [vmem:[%s8 + $0x50] sm:$0xf]
      %v2979 = vld [vmem:[%s8 + $0x54] sm:$0xff]
      %v2980 = vld [vmem:[%s8 + $0x5c] sm:$0xff]
      %v2981 = vld [vmem:[%s8 + $0x64] sm:$0xff]
      %v2982 = vld [vmem:[%s8 + $0x6c] sm:$0xf]
      %v2983 = vld [vmem:[%s8 + $0x70] sm:$0xff]
      %v2984 = vld [vmem:[%s8 + $0x78] sm:$0xff]
      %v2985 = vld [vmem:[%s8 + $0x80] sm:$0xff]
      %v2986 = vld [vmem:[%s8 + $0x88] sm:$0xf]
      %v2987 = vld [vmem:[%s8 + $0x8c] sm:$0xff]
      %v2988 = vld [vmem:[%s8 + $0x94] sm:$0xff]
      %v2989 = vld [vmem:[%s8 + $0x9c] sm:$0xff]
      %v2990 = vld [vmem:[%s8 + $0xa4] sm:$0xf]
      %v2991 = vld [vmem:[%s8 + $0xa8] sm:$0xff]
      %v2992 = vld [vmem:[%s8 + $0xb0] sm:$0xff]
      %v2993 = vld [vmem:[%s8 + $0xb8] sm:$0xff]
      %v2994 = vld [vmem:[%s8 + $0xc0] sm:$0xf]
      %v2995 = vld [vmem:[%s8 + $0xc4] sm:$0xff]
      %v2996 = vld [vmem:[%s8 + $0xcc] sm:$0xff]
      %v2997 = vld [vmem:[%s8 + $0xd4] sm:$0xff]
      %v2998 = vld [vmem:[%s8 + $0xdc] sm:$0xf]
      %v2999 = vld [vmem:[%s8 + $0xe0] sm:$0xff]
      %v3000 = vld [vmem:[%s8 + $0xe8] sm:$0xff]
      %v3001 = vld [vmem:[%s8 + $0xf0] sm:$0xff]
      %v3002 = vld [vmem:[%s8 + $0xf8] sm:$0xf]
      %v3003 = vld [vmem:[%s8 + $0xfc] sm:$0xff]
      %v3004 = vld [vmem:[%s8 + $0x104] sm:$0xff]
      %v3005 = vld [vmem:[%s8 + $0x10c] sm:$0xff]
      %v3006 = vld [vmem:[%s8 + $0x114] sm:$0xf]
      %v3007 = vld [vmem:[%s8 + $0x118] sm:$0xff]
      %v3008 = vld [vmem:[%s8 + $0x120] sm:$0xff]
      %v3009 = vld [vmem:[%s8 + $0x128] sm:$0xff]
      %v3010 = vld [vmem:[%s8 + $0x130] sm:$0xf]
      %v3011 = vld [vmem:[%s8 + $0x134] sm:$0xff]
      %v3012 = vld [vmem:[%s8 + $0x13c] sm:$0xff]
      %v3013 = vld [vmem:[%s8 + $0x144] sm:$0xff]
      %v3014 = vld [vmem:[%s8 + $0x14c] sm:$0xf]
      %v3015 = vld [vmem:[%s8 + $0x150] sm:$0xff]
      %v3016 = vld [vmem:[%s8 + $0x158] sm:$0xff]
      %v3017 = vld [vmem:[%s8 + $0x160] sm:$0xff]
      %v3018 = vld [vmem:[%s8 + $0x168] sm:$0xf]
      %v3019 = vld [vmem:[%s8 + $0x16c] sm:$0xff]
      %v3020 = vld [vmem:[%s8 + $0x174] sm:$0xff]
      %v3021 = vld [vmem:[%s8 + $0x17c] sm:$0xff]
      %v3022 = vld [vmem:[%s8 + $0x184] sm:$0xf]
      %v3023 = vld [vmem:[%s8 + $0x188] sm:$0xff]
      %v3024 = vld [vmem:[%s8 + $0x190] sm:$0xff]
      %v3025 = vld [vmem:[%s8 + $0x198] sm:$0xff]
      %v3026 = vld [vmem:[%s8 + $0x1a0] sm:$0xf]
      %v3027 = vld [vmem:[%s8 + $0x1a4] sm:$0xff]
      %v3028 = vld [vmem:[%s8 + $0x1ac] sm:$0xff]
      %v3029 = vld [vmem:[%s8 + $0x1b4] sm:$0xff]
      %v3030 = vld [vmem:[%s8 + $0x1bc] sm:$0xf]
      %v3031 = vld [vmem:[%s8 + $0x1c0] sm:$0xff]
      %v3032 = vld [vmem:[%s8 + $0x1c8] sm:$0xff]
      %v3033 = vld [vmem:[%s8 + $0x1d0] sm:$0xff]
      %v3034 = vld [vmem:[%s8 + $0x1d8] sm:$0xf]
      %v3035 = vld [vmem:[%s8 + $0x1dc] sm:$0xff]
      %v3036 = vld [vmem:[%s8 + $0x1e4] sm:$0xff]
      %v3037 = vld [vmem:[%s8 + $0x1ec] sm:$0xff]
      %v3038 = vld [vmem:[%s8 + $0x1f4] sm:$0xf]
      %v3039 = vld [vmem:[%s8 + $0x1f8] sm:$0xff]
      %v3040 = vld [vmem:[%s8 + $0x200] sm:$0xff]
      %v3041 = vld [vmem:[%s8 + $0x208] sm:$0xff]
      %v3042 = vld [vmem:[%s8 + $0x210] sm:$0xf]
      %v3043 = vld [vmem:[%s8 + $0x214] sm:$0xff]
      %v3044 = vld [vmem:[%s8 + $0x21c] sm:$0xff]
      %v3045 = vld [vmem:[%s8 + $0x224] sm:$0xff]
      %v3046 = vld [vmem:[%s8 + $0x22c] sm:$0xf]
      %v3047 = vld [vmem:[%s8 + $0x230] sm:$0xff]
      %v3048 = vld [vmem:[%s8 + $0x238] sm:$0xff]
      %v3049 = vld [vmem:[%s8 + $0x240] sm:$0xff]
      %v3050 = vld [vmem:[%s8 + $0x248] sm:$0xf]
      %v3051 = vld [vmem:[%s8 + $0x24c] sm:$0xff]
      %v3052 = vld [vmem:[%s8 + $0x254] sm:$0xff]
      %v3053 = vld [vmem:[%s8 + $0x25c] sm:$0xff]
      %v3054 = vld [vmem:[%s8 + $0x264] sm:$0xf]
      %v3055 = vld [vmem:[%s8 + $0x268] sm:$0xff]
      %v3056 = vld [vmem:[%s8 + $0x270] sm:$0xff]
      %v3057 = vld [vmem:[%s8 + $0x278] sm:$0xff]
      %v3058 = vld [vmem:[%s8 + $0x280] sm:$0xf]
      %v3059 = vld [vmem:[%s8 + $0x284] sm:$0xff]
      %v3060 = vld [vmem:[%s8 + $0x28c] sm:$0xff]
      %v3061 = vld [vmem:[%s8 + $0x294] sm:$0xff]
      %v3062 = vld [vmem:[%s8 + $0x29c] sm:$0xf]
      %v3063 = vld [vmem:[%s8 + $0x2a0] sm:$0xff]
      %v3064 = vld [vmem:[%s8 + $0x2a8] sm:$0xff]
      %v3065 = vld [vmem:[%s8 + $0x2b0] sm:$0xff]
      %v3066 = vld [vmem:[%s8 + $0x2b8] sm:$0xf]
      %v3067 = vld [vmem:[%s8 + $0x2bc] sm:$0xff]
      %v3068 = vld [vmem:[%s8 + $0x2c4] sm:$0xff]
      %v3069 = vld [vmem:[%s8 + $0x2cc] sm:$0xff]
      %v3070 = vld [vmem:[%s8 + $0x2d4] sm:$0xf]
      %v3071 = vld [vmem:[%s8 + $0x2d8] sm:$0xff]
      %v3072 = vld [vmem:[%s8 + $0x2e0] sm:$0xff]
      %v3073 = vld [vmem:[%s8 + $0x2e8] sm:$0xff]
      %v3074 = vld [vmem:[%s8 + $0x2f0] sm:$0xf]
      %v3075 = vld [vmem:[%s8 + $0x2f4] sm:$0xff]
      %v3076 = vld [vmem:[%s8 + $0x2fc] sm:$0xff]
      %v3077 = vld [vmem:[%s8 + $0x304] sm:$0xff]
      %v3078 = vld [vmem:[%s8 + $0x30c] sm:$0xf]
      %v3079 = vld [vmem:[%s8 + $0x310] sm:$0xff]
      %v3080 = vld [vmem:[%s8 + $0x318] sm:$0xff]
      %v3081 = vld [vmem:[%s8 + $0x320] sm:$0xff]
      %v3082 = vld [vmem:[%s8 + $0x328] sm:$0xf]
      %v3083 = vld [vmem:[%s8 + $0x32c] sm:$0xff]
      %v3084 = vld [vmem:[%s8 + $0x334] sm:$0xff]
      %v3085 = vld [vmem:[%s8 + $0x33c] sm:$0xff]
      %v3086 = vld [vmem:[%s8 + $0x344] sm:$0xf]
      %v3087 = vld [vmem:[%s8 + $0x348] sm:$0xff]
      %v3088 = vld [vmem:[%s8 + $0x350] sm:$0xff]
      %v3089 = vld [vmem:[%s8 + $0x358] sm:$0xff]
      %v3090 = vld [vmem:[%s8 + $0x360] sm:$0xf]
      %v3091 = vld [vmem:[%s8 + $0x364] sm:$0xff]
      %v3092 = vld [vmem:[%s8 + $0x36c] sm:$0xff]
      %v3093 = vld [vmem:[%s8 + $0x374] sm:$0xff]
      %v3094 = vld [vmem:[%s8 + $0x37c] sm:$0xf]
      %v3095 = vld [vmem:[%s8 + $0x380] sm:$0xff]
      %v3096 = vld [vmem:[%s8 + $0x388] sm:$0xff]
      %v3097 = vld [vmem:[%s8 + $0x390] sm:$0xff]
      %v3098 = vld [vmem:[%s8 + $0x398] sm:$0xf]
      %v3099 = vld [vmem:[%s8 + $0x39c] sm:$0xff]
      %v3100 = vld [vmem:[%s8 + $0x3a4] sm:$0xff]
      %v3101 = vld [vmem:[%s8 + $0x3ac] sm:$0xff]
      %v3102 = vld [vmem:[%s8 + $0x3b4] sm:$0xf]
      %v3103 = vld [vmem:[%s8 + $0x3b8] sm:$0xff]
      %v3104 = vld [vmem:[%s8 + $0x3c0] sm:$0xff]
      %v3105 = vld [vmem:[%s8 + $0x3c8] sm:$0xff]
      %v3106 = vld [vmem:[%s8 + $0x3d0] sm:$0xf]
      %v3107 = vld [vmem:[%s8 + $0x3d4] sm:$0xff]
      %v3108 = vld [vmem:[%s8 + $0x3dc] sm:$0xff]
      %v3109 = vld [vmem:[%s8 + $0x3e4] sm:$0xff]
      %v3110 = vld [vmem:[%s8 + $0x3ec] sm:$0xf]
      %v3111 = vld [vmem:[%s8 + $0x3f0] sm:$0xff]
      %v3112 = vld [vmem:[%s8 + $0x3f8] sm:$0xff]
      %v3113 = vld [vmem:[%s8 + $0x400] sm:$0xff]
      %v3114 = vld [vmem:[%s8 + $0x408] sm:$0xf]
      %v3115 = vld [vmem:[%s8 + $0x40c] sm:$0xff]
      %v3116 = vld [vmem:[%s8 + $0x414] sm:$0xff]
      %v3117 = vld [vmem:[%s8 + $0x41c] sm:$0xff]
      %v3118 = vld [vmem:[%s8 + $0x424] sm:$0xf]
      %v3119 = vld [vmem:[%s8 + $0x428] sm:$0xff]
      %v3120 = vld [vmem:[%s8 + $0x430] sm:$0xff]
      %v3121 = vld [vmem:[%s8 + $0x438] sm:$0xff]
      %v3122 = vld [vmem:[%s8 + $0x440] sm:$0xf]
      %v3123 = vld [vmem:[%s8 + $0x444] sm:$0xff]
      %v3124 = vld [vmem:[%s8 + $0x44c] sm:$0xff]
      %v3125 = vld [vmem:[%s8 + $0x454] sm:$0xff]
      %v3126 = vld [vmem:[%s8 + $0x45c] sm:$0xf]
      %v3127 = vld [vmem:[%s8 + $0x460] sm:$0xff]
      %v3128 = vld [vmem:[%s8 + $0x468] sm:$0xff]
      %v3129 = vld [vmem:[%s8 + $0x470] sm:$0xff]
      %v3130 = vld [vmem:[%s8 + $0x478] sm:$0xf]
      %v3131 = vld [vmem:[%s8 + $0x47c] sm:$0xff]
      %v3132 = vld [vmem:[%s8 + $0x484] sm:$0xff]
      %v3133 = vld [vmem:[%s8 + $0x48c] sm:$0xff]
      %v3134 = vld [vmem:[%s8 + $0x494] sm:$0xf]
      %v3135 = vld [vmem:[%s8 + $0x498] sm:$0xff]
      %v3136 = vld [vmem:[%s8 + $0x4a0] sm:$0xff]
      %v3137 = vld [vmem:[%s8 + $0x4a8] sm:$0xff]
      %v3138 = vld [vmem:[%s8 + $0x4b0] sm:$0xf]
      %v3139 = vld [vmem:[%s8 + $0x4b4] sm:$0xff]
      %v3140 = vld [vmem:[%s8 + $0x4bc] sm:$0xff]
      %v3141 = vld [vmem:[%s8 + $0x4c4] sm:$0xff]
      %v3142 = vld [vmem:[%s8 + $0x4cc] sm:$0xf]
      %v3143 = vld [vmem:[%s8 + $0x4d0] sm:$0xff]
      %v3144 = vld [vmem:[%s8 + $0x4d8] sm:$0xff]
      %v3145 = vld [vmem:[%s8 + $0x4e0] sm:$0xff]
      %v3146 = vld [vmem:[%s8 + $0x4e8] sm:$0xf]
      %v3147 = vld [vmem:[%s8 + $0x4ec] sm:$0xff]
      %v3148 = vld [vmem:[%s8 + $0x4f4] sm:$0xff]
      %v3149 = vld [vmem:[%s8 + $0x4fc] sm:$0xff]
      %v3150 = vld [vmem:[%s8 + $0x504] sm:$0xf]
      %v3151 = vld [vmem:[%s8 + $0x508] sm:$0xff]
      %v3152 = vld [vmem:[%s8 + $0x510] sm:$0xff]
      %v3153 = vld [vmem:[%s8 + $0x518] sm:$0xff]
      %v3154 = vld [vmem:[%s8 + $0x520] sm:$0xf]
      %v3155 = vld [vmem:[%s8 + $0x524] sm:$0xff]
      %v3156 = vld [vmem:[%s8 + $0x52c] sm:$0xff]
      %v3157 = vld [vmem:[%s8 + $0x534] sm:$0xff]
      %v3158 = vld [vmem:[%s8 + $0x53c] sm:$0xf]
      %v3159 = vld [vmem:[%s8 + $0x540] sm:$0xff]
      %v3160 = vld [vmem:[%s8 + $0x548] sm:$0xff]
      %v3161 = vld [vmem:[%s8 + $0x550] sm:$0xff]
      %v3162 = vld [vmem:[%s8 + $0x558] sm:$0xf]
      %v3163 = vld [vmem:[%s8 + $0x55c] sm:$0xff]
      %v3164 = vld [vmem:[%s8 + $0x564] sm:$0xff]
      %v3165 = vld [vmem:[%s8 + $0x56c] sm:$0xff]
      %v3166 = vld [vmem:[%s8 + $0x574] sm:$0xf]
      %v3167 = vld [vmem:[%s9] sm:$0x7f]
      %v3169 = vlaneseq
      %v3170 = vshrl.u32 %v3169, 7
      %v3171 = vsub.s32 0, %v3170
      %v3172 = vrot.slane %v3167, %v3171
      %v3173 = vlaneseq
      %v3174 = vshrl.u32 %v3173, 7
      %v3175 = vsub.s32 1, %v3174
      %v3176 = vrot.slane %v3167, %v3175
      %v3177 = vlaneseq
      %v3178 = vshrl.u32 %v3177, 7
      %v3179 = vsub.s32 2, %v3178
      %v3180 = vrot.slane %v3167, %v3179
      %v3181 = vlaneseq
      %v3182 = vshrl.u32 %v3181, 7
      %v3183 = vsub.s32 3, %v3182
      %v3184 = vrot.slane %v3167, %v3183
      %v3185 = vlaneseq
      %v3186 = vshrl.u32 %v3185, 7
      %v3187 = vsub.s32 4, %v3186
      %v3188 = vrot.slane %v3167, %v3187
      %v3189 = vlaneseq
      %v3190 = vshrl.u32 %v3189, 7
      %v3191 = vsub.s32 5, %v3190
      %v3192 = vrot.slane %v3167, %v3191
      %v3193 = vlaneseq
      %v3194 = vshrl.u32 %v3193, 7
      %v3195 = vsub.s32 6, %v3194
      %v3196 = vrot.slane %v3167, %v3195
      %v3404 = vunpack.c.l.b16 %v2967
      %v3405 = vunpack.c.h.b16 %v2967
      %v3406 = vunpack.c.l.b16 %v2968
      %v3407 = vunpack.c.h.b16 %v2968
      %v3408 = vunpack.c.l.b16 %v2969
      %v3409 = vunpack.c.h.b16 %v2969
      %v3410 = vunpack.c.l.b16 %v2970
      %v3411 = vunpack.c.l.b16 %v2971
      %v3412 = vunpack.c.h.b16 %v2971
      %v3413 = vunpack.c.l.b16 %v2972
      %v3414 = vunpack.c.h.b16 %v2972
      %v3415 = vunpack.c.l.b16 %v2973
      %v3416 = vunpack.c.h.b16 %v2973
      %v3417 = vunpack.c.l.b16 %v2974
      %v3418 = vunpack.c.l.b16 %v2975
      %v3419 = vunpack.c.h.b16 %v2975
      %v3420 = vunpack.c.l.b16 %v2976
      %v3421 = vunpack.c.h.b16 %v2976
      %v3422 = vunpack.c.l.b16 %v2977
      %v3423 = vunpack.c.h.b16 %v2977
      %v3424 = vunpack.c.l.b16 %v2978
      %v3425 = vunpack.c.l.b16 %v2979
      %v3426 = vunpack.c.h.b16 %v2979
      %v3427 = vunpack.c.l.b16 %v2980
      %v3428 = vunpack.c.h.b16 %v2980
      %v3429 = vunpack.c.l.b16 %v2981
      %v3430 = vunpack.c.h.b16 %v2981
      %v3431 = vunpack.c.l.b16 %v2982
      %v3432 = vunpack.c.l.b16 %v2983
      %v3433 = vunpack.c.h.b16 %v2983
      %v3434 = vunpack.c.l.b16 %v2984
      %v3435 = vunpack.c.h.b16 %v2984
      %v3436 = vunpack.c.l.b16 %v2985
      %v3437 = vunpack.c.h.b16 %v2985
      %v3438 = vunpack.c.l.b16 %v2986
      %v3439 = vunpack.c.l.b16 %v2987
      %v3440 = vunpack.c.h.b16 %v2987
      %v3441 = vunpack.c.l.b16 %v2988
      %v3442 = vunpack.c.h.b16 %v2988
      %v3443 = vunpack.c.l.b16 %v2989
      %v3444 = vunpack.c.h.b16 %v2989
      %v3445 = vunpack.c.l.b16 %v2990
      %v3446 = vunpack.c.l.b16 %v2991
      %v3447 = vunpack.c.h.b16 %v2991
      %v3448 = vunpack.c.l.b16 %v2992
      %v3449 = vunpack.c.h.b16 %v2992
      %v3450 = vunpack.c.l.b16 %v2993
      %v3451 = vunpack.c.h.b16 %v2993
      %v3452 = vunpack.c.l.b16 %v2994
      %v3453 = vunpack.c.l.b16 %v2995
      %v3454 = vunpack.c.h.b16 %v2995
      %v3455 = vunpack.c.l.b16 %v2996
      %v3456 = vunpack.c.h.b16 %v2996
      %v3457 = vunpack.c.l.b16 %v2997
      %v3458 = vunpack.c.h.b16 %v2997
      %v3459 = vunpack.c.l.b16 %v2998
      %v3460 = vunpack.c.l.b16 %v2999
      %v3461 = vunpack.c.h.b16 %v2999
      %v3462 = vunpack.c.l.b16 %v3000
      %v3463 = vunpack.c.h.b16 %v3000
      %v3464 = vunpack.c.l.b16 %v3001
      %v3465 = vunpack.c.h.b16 %v3001
      %v3466 = vunpack.c.l.b16 %v3002
      %v3467 = vunpack.c.l.b16 %v3003
      %v3468 = vunpack.c.h.b16 %v3003
      %v3469 = vunpack.c.l.b16 %v3004
      %v3470 = vunpack.c.h.b16 %v3004
      %v3471 = vunpack.c.l.b16 %v3005
      %v3472 = vunpack.c.h.b16 %v3005
      %v3473 = vunpack.c.l.b16 %v3006
      %v3474 = vunpack.c.l.b16 %v3007
      %v3475 = vunpack.c.h.b16 %v3007
      %v3476 = vunpack.c.l.b16 %v3008
      %v3477 = vunpack.c.h.b16 %v3008
      %v3478 = vunpack.c.l.b16 %v3009
      %v3479 = vunpack.c.h.b16 %v3009
      %v3480 = vunpack.c.l.b16 %v3010
      %v3481 = vunpack.c.l.b16 %v3011
      %v3482 = vunpack.c.h.b16 %v3011
      %v3483 = vunpack.c.l.b16 %v3012
      %v3484 = vunpack.c.h.b16 %v3012
      %v3485 = vunpack.c.l.b16 %v3013
      %v3486 = vunpack.c.h.b16 %v3013
      %v3487 = vunpack.c.l.b16 %v3014
      %v3488 = vunpack.c.l.b16 %v3015
      %v3489 = vunpack.c.h.b16 %v3015
      %v3490 = vunpack.c.l.b16 %v3016
      %v3491 = vunpack.c.h.b16 %v3016
      %v3492 = vunpack.c.l.b16 %v3017
      %v3493 = vunpack.c.h.b16 %v3017
      %v3494 = vunpack.c.l.b16 %v3018
      %v3495 = vunpack.c.l.b16 %v3019
      %v3496 = vunpack.c.h.b16 %v3019
      %v3497 = vunpack.c.l.b16 %v3020
      %v3498 = vunpack.c.h.b16 %v3020
      %v3499 = vunpack.c.l.b16 %v3021
      %v3500 = vunpack.c.h.b16 %v3021
      %v3501 = vunpack.c.l.b16 %v3022
      %v3502 = vunpack.c.l.b16 %v3023
      %v3503 = vunpack.c.h.b16 %v3023
      %v3504 = vunpack.c.l.b16 %v3024
      %v3505 = vunpack.c.h.b16 %v3024
      %v3506 = vunpack.c.l.b16 %v3025
      %v3507 = vunpack.c.h.b16 %v3025
      %v3508 = vunpack.c.l.b16 %v3026
      %v3509 = vunpack.c.l.b16 %v3027
      %v3510 = vunpack.c.h.b16 %v3027
      %v3511 = vunpack.c.l.b16 %v3028
      %v3512 = vunpack.c.h.b16 %v3028
      %v3513 = vunpack.c.l.b16 %v3029
      %v3514 = vunpack.c.h.b16 %v3029
      %v3515 = vunpack.c.l.b16 %v3030
      %v3516 = vunpack.c.l.b16 %v3031
      %v3517 = vunpack.c.h.b16 %v3031
      %v3518 = vunpack.c.l.b16 %v3032
      %v3519 = vunpack.c.h.b16 %v3032
      %v3520 = vunpack.c.l.b16 %v3033
      %v3521 = vunpack.c.h.b16 %v3033
      %v3522 = vunpack.c.l.b16 %v3034
      %v3523 = vunpack.c.l.b16 %v3035
      %v3524 = vunpack.c.h.b16 %v3035
      %v3525 = vunpack.c.l.b16 %v3036
      %v3526 = vunpack.c.h.b16 %v3036
      %v3527 = vunpack.c.l.b16 %v3037
      %v3528 = vunpack.c.h.b16 %v3037
      %v3529 = vunpack.c.l.b16 %v3038
      %v3530 = vunpack.c.l.b16 %v3039
      %v3531 = vunpack.c.h.b16 %v3039
      %v3532 = vunpack.c.l.b16 %v3040
      %v3533 = vunpack.c.h.b16 %v3040
      %v3534 = vunpack.c.l.b16 %v3041
      %v3535 = vunpack.c.h.b16 %v3041
      %v3536 = vunpack.c.l.b16 %v3042
      %v3537 = vunpack.c.l.b16 %v3043
      %v3538 = vunpack.c.h.b16 %v3043
      %v3539 = vunpack.c.l.b16 %v3044
      %v3540 = vunpack.c.h.b16 %v3044
      %v3541 = vunpack.c.l.b16 %v3045
      %v3542 = vunpack.c.h.b16 %v3045
      %v3543 = vunpack.c.l.b16 %v3046
      %v3544 = vunpack.c.l.b16 %v3047
      %v3545 = vunpack.c.h.b16 %v3047
      %v3546 = vunpack.c.l.b16 %v3048
      %v3547 = vunpack.c.h.b16 %v3048
      %v3548 = vunpack.c.l.b16 %v3049
      %v3549 = vunpack.c.h.b16 %v3049
      %v3550 = vunpack.c.l.b16 %v3050
      %v3551 = vunpack.c.l.b16 %v3051
      %v3552 = vunpack.c.h.b16 %v3051
      %v3553 = vunpack.c.l.b16 %v3052
      %v3554 = vunpack.c.h.b16 %v3052
      %v3555 = vunpack.c.l.b16 %v3053
      %v3556 = vunpack.c.h.b16 %v3053
      %v3557 = vunpack.c.l.b16 %v3054
      %v3558 = vunpack.c.l.b16 %v3055
      %v3559 = vunpack.c.h.b16 %v3055
      %v3560 = vunpack.c.l.b16 %v3056
      %v3561 = vunpack.c.h.b16 %v3056
      %v3562 = vunpack.c.l.b16 %v3057
      %v3563 = vunpack.c.h.b16 %v3057
      %v3564 = vunpack.c.l.b16 %v3058
      %v3565 = vunpack.c.l.b16 %v3059
      %v3566 = vunpack.c.h.b16 %v3059
      %v3567 = vunpack.c.l.b16 %v3060
      %v3568 = vunpack.c.h.b16 %v3060
      %v3569 = vunpack.c.l.b16 %v3061
      %v3570 = vunpack.c.h.b16 %v3061
      %v3571 = vunpack.c.l.b16 %v3062
      %v3572 = vunpack.c.l.b16 %v3063
      %v3573 = vunpack.c.h.b16 %v3063
      %v3574 = vunpack.c.l.b16 %v3064
      %v3575 = vunpack.c.h.b16 %v3064
      %v3576 = vunpack.c.l.b16 %v3065
      %v3577 = vunpack.c.h.b16 %v3065
      %v3578 = vunpack.c.l.b16 %v3066
      %v3579 = vunpack.c.l.b16 %v3067
      %v3580 = vunpack.c.h.b16 %v3067
      %v3581 = vunpack.c.l.b16 %v3068
      %v3582 = vunpack.c.h.b16 %v3068
      %v3583 = vunpack.c.l.b16 %v3069
      %v3584 = vunpack.c.h.b16 %v3069
      %v3585 = vunpack.c.l.b16 %v3070
      %v3586 = vunpack.c.l.b16 %v3071
      %v3587 = vunpack.c.h.b16 %v3071
      %v3588 = vunpack.c.l.b16 %v3072
      %v3589 = vunpack.c.h.b16 %v3072
      %v3590 = vunpack.c.l.b16 %v3073
      %v3591 = vunpack.c.h.b16 %v3073
      %v3592 = vunpack.c.l.b16 %v3074
      %v3593 = vunpack.c.l.b16 %v3075
      %v3594 = vunpack.c.h.b16 %v3075
      %v3595 = vunpack.c.l.b16 %v3076
      %v3596 = vunpack.c.h.b16 %v3076
      %v3597 = vunpack.c.l.b16 %v3077
      %v3598 = vunpack.c.h.b16 %v3077
      %v3599 = vunpack.c.l.b16 %v3078
      %v3600 = vunpack.c.l.b16 %v3079
      %v3601 = vunpack.c.h.b16 %v3079
      %v3602 = vunpack.c.l.b16 %v3080
      %v3603 = vunpack.c.h.b16 %v3080
      %v3604 = vunpack.c.l.b16 %v3081
      %v3605 = vunpack.c.h.b16 %v3081
      %v3606 = vunpack.c.l.b16 %v3082
      %v3607 = vunpack.c.l.b16 %v3083
      %v3608 = vunpack.c.h.b16 %v3083
      %v3609 = vunpack.c.l.b16 %v3084
      %v3610 = vunpack.c.h.b16 %v3084
      %v3611 = vunpack.c.l.b16 %v3085
      %v3612 = vunpack.c.h.b16 %v3085
      %v3613 = vunpack.c.l.b16 %v3086
      %v3614 = vunpack.c.l.b16 %v3087
      %v3615 = vunpack.c.h.b16 %v3087
      %v3616 = vunpack.c.l.b16 %v3088
      %v3617 = vunpack.c.h.b16 %v3088
      %v3618 = vunpack.c.l.b16 %v3089
      %v3619 = vunpack.c.h.b16 %v3089
      %v3620 = vunpack.c.l.b16 %v3090
      %v3621 = vunpack.c.l.b16 %v3091
      %v3622 = vunpack.c.h.b16 %v3091
      %v3623 = vunpack.c.l.b16 %v3092
      %v3624 = vunpack.c.h.b16 %v3092
      %v3625 = vunpack.c.l.b16 %v3093
      %v3626 = vunpack.c.h.b16 %v3093
      %v3627 = vunpack.c.l.b16 %v3094
      %v3628 = vunpack.c.l.b16 %v3095
      %v3629 = vunpack.c.h.b16 %v3095
      %v3630 = vunpack.c.l.b16 %v3096
      %v3631 = vunpack.c.h.b16 %v3096
      %v3632 = vunpack.c.l.b16 %v3097
      %v3633 = vunpack.c.h.b16 %v3097
      %v3634 = vunpack.c.l.b16 %v3098
      %v3635 = vunpack.c.l.b16 %v3099
      %v3636 = vunpack.c.h.b16 %v3099
      %v3637 = vunpack.c.l.b16 %v3100
      %v3638 = vunpack.c.h.b16 %v3100
      %v3639 = vunpack.c.l.b16 %v3101
      %v3640 = vunpack.c.h.b16 %v3101
      %v3641 = vunpack.c.l.b16 %v3102
      %v3642 = vunpack.c.l.b16 %v3103
      %v3643 = vunpack.c.h.b16 %v3103
      %v3644 = vunpack.c.l.b16 %v3104
      %v3645 = vunpack.c.h.b16 %v3104
      %v3646 = vunpack.c.l.b16 %v3105
      %v3647 = vunpack.c.h.b16 %v3105
      %v3648 = vunpack.c.l.b16 %v3106
      %v3649 = vunpack.c.l.b16 %v3107
      %v3650 = vunpack.c.h.b16 %v3107
      %v3651 = vunpack.c.l.b16 %v3108
      %v3652 = vunpack.c.h.b16 %v3108
      %v3653 = vunpack.c.l.b16 %v3109
      %v3654 = vunpack.c.h.b16 %v3109
      %v3655 = vunpack.c.l.b16 %v3110
      %v3656 = vunpack.c.l.b16 %v3111
      %v3657 = vunpack.c.h.b16 %v3111
      %v3658 = vunpack.c.l.b16 %v3112
      %v3659 = vunpack.c.h.b16 %v3112
      %v3660 = vunpack.c.l.b16 %v3113
      %v3661 = vunpack.c.h.b16 %v3113
      %v3662 = vunpack.c.l.b16 %v3114
      %v3663 = vunpack.c.l.b16 %v3115
      %v3664 = vunpack.c.h.b16 %v3115
      %v3665 = vunpack.c.l.b16 %v3116
      %v3666 = vunpack.c.h.b16 %v3116
      %v3667 = vunpack.c.l.b16 %v3117
      %v3668 = vunpack.c.h.b16 %v3117
      %v3669 = vunpack.c.l.b16 %v3118
      %v3670 = vunpack.c.l.b16 %v3119
      %v3671 = vunpack.c.h.b16 %v3119
      %v3672 = vunpack.c.l.b16 %v3120
      %v3673 = vunpack.c.h.b16 %v3120
      %v3674 = vunpack.c.l.b16 %v3121
      %v3675 = vunpack.c.h.b16 %v3121
      %v3676 = vunpack.c.l.b16 %v3122
      %v3677 = vunpack.c.l.b16 %v3123
      %v3678 = vunpack.c.h.b16 %v3123
      %v3679 = vunpack.c.l.b16 %v3124
      %v3680 = vunpack.c.h.b16 %v3124
      %v3681 = vunpack.c.l.b16 %v3125
      %v3682 = vunpack.c.h.b16 %v3125
      %v3683 = vunpack.c.l.b16 %v3126
      %v3684 = vunpack.c.l.b16 %v3127
      %v3685 = vunpack.c.h.b16 %v3127
      %v3686 = vunpack.c.l.b16 %v3128
      %v3687 = vunpack.c.h.b16 %v3128
      %v3688 = vunpack.c.l.b16 %v3129
      %v3689 = vunpack.c.h.b16 %v3129
      %v3690 = vunpack.c.l.b16 %v3130
      %v3691 = vunpack.c.l.b16 %v3131
      %v3692 = vunpack.c.h.b16 %v3131
      %v3693 = vunpack.c.l.b16 %v3132
      %v3694 = vunpack.c.h.b16 %v3132
      %v3695 = vunpack.c.l.b16 %v3133
      %v3696 = vunpack.c.h.b16 %v3133
      %v3697 = vunpack.c.l.b16 %v3134
      %v3698 = vunpack.c.l.b16 %v3135
      %v3699 = vunpack.c.h.b16 %v3135
      %v3700 = vunpack.c.l.b16 %v3136
      %v3701 = vunpack.c.h.b16 %v3136
      %v3702 = vunpack.c.l.b16 %v3137
      %v3703 = vunpack.c.h.b16 %v3137
      %v3704 = vunpack.c.l.b16 %v3138
      %v3705 = vunpack.c.l.b16 %v3139
      %v3706 = vunpack.c.h.b16 %v3139
      %v3707 = vunpack.c.l.b16 %v3140
      %v3708 = vunpack.c.h.b16 %v3140
      %v3709 = vunpack.c.l.b16 %v3141
      %v3710 = vunpack.c.h.b16 %v3141
      %v3711 = vunpack.c.l.b16 %v3142
      %v3712 = vunpack.c.l.b16 %v3143
      %v3713 = vunpack.c.h.b16 %v3143
      %v3714 = vunpack.c.l.b16 %v3144
      %v3715 = vunpack.c.h.b16 %v3144
      %v3716 = vunpack.c.l.b16 %v3145
      %v3717 = vunpack.c.h.b16 %v3145
      %v3718 = vunpack.c.l.b16 %v3146
      %v3719 = vunpack.c.l.b16 %v3147
      %v3720 = vunpack.c.h.b16 %v3147
      %v3721 = vunpack.c.l.b16 %v3148
      %v3722 = vunpack.c.h.b16 %v3148
      %v3723 = vunpack.c.l.b16 %v3149
      %v3724 = vunpack.c.h.b16 %v3149
      %v3725 = vunpack.c.l.b16 %v3150
      %v3726 = vunpack.c.l.b16 %v3151
      %v3727 = vunpack.c.h.b16 %v3151
      %v3728 = vunpack.c.l.b16 %v3152
      %v3729 = vunpack.c.h.b16 %v3152
      %v3730 = vunpack.c.l.b16 %v3153
      %v3731 = vunpack.c.h.b16 %v3153
      %v3732 = vunpack.c.l.b16 %v3154
      %v3733 = vunpack.c.l.b16 %v3155
      %v3734 = vunpack.c.h.b16 %v3155
      %v3735 = vunpack.c.l.b16 %v3156
      %v3736 = vunpack.c.h.b16 %v3156
      %v3737 = vunpack.c.l.b16 %v3157
      %v3738 = vunpack.c.h.b16 %v3157
      %v3739 = vunpack.c.l.b16 %v3158
      %v3740 = vunpack.c.l.b16 %v3159
      %v3741 = vunpack.c.h.b16 %v3159
      %v3742 = vunpack.c.l.b16 %v3160
      %v3743 = vunpack.c.h.b16 %v3160
      %v3744 = vunpack.c.l.b16 %v3161
      %v3745 = vunpack.c.h.b16 %v3161
      %v3746 = vunpack.c.l.b16 %v3162
      %v3747 = vunpack.c.l.b16 %v3163
      %v3748 = vunpack.c.h.b16 %v3163
      %v3749 = vunpack.c.l.b16 %v3164
      %v3750 = vunpack.c.h.b16 %v3164
      %v3751 = vunpack.c.l.b16 %v3165
      %v3752 = vunpack.c.h.b16 %v3165
      %v3753 = vunpack.c.l.b16 %v3166
      %v3754 = vpack.c.b16 %v3411, %v3404
      %v3755 = vpack.c.b16 %v3412, %v3405
      %v3756 = vpack.c.b16 %v3413, %v3406
      %v3757 = vpack.c.b16 %v3414, %v3407
      %v3758 = vpack.c.b16 %v3415, %v3408
      %v3759 = vpack.c.b16 %v3416, %v3409
      %v3760 = vpack.c.b16 %v3417, %v3410
      %v3761 = vpack.c.b16 %v3425, %v3418
      %v3762 = vpack.c.b16 %v3426, %v3419
      %v3763 = vpack.c.b16 %v3427, %v3420
      %v3764 = vpack.c.b16 %v3428, %v3421
      %v3765 = vpack.c.b16 %v3429, %v3422
      %v3766 = vpack.c.b16 %v3430, %v3423
      %v3767 = vpack.c.b16 %v3431, %v3424
      %v3768 = vpack.c.b16 %v3439, %v3432
      %v3769 = vpack.c.b16 %v3440, %v3433
      %v3770 = vpack.c.b16 %v3441, %v3434
      %v3771 = vpack.c.b16 %v3442, %v3435
      %v3772 = vpack.c.b16 %v3443, %v3436
      %v3773 = vpack.c.b16 %v3444, %v3437
      %v3774 = vpack.c.b16 %v3445, %v3438
      %v3775 = vpack.c.b16 %v3453, %v3446
      %v3776 = vpack.c.b16 %v3454, %v3447
      %v3777 = vpack.c.b16 %v3455, %v3448
      %v3778 = vpack.c.b16 %v3456, %v3449
      %v3779 = vpack.c.b16 %v3457, %v3450
      %v3780 = vpack.c.b16 %v3458, %v3451
      %v3781 = vpack.c.b16 %v3459, %v3452
      %v3782 = vpack.c.b16 %v3467, %v3460
      %v3783 = vpack.c.b16 %v3468, %v3461
      %v3784 = vpack.c.b16 %v3469, %v3462
      %v3785 = vpack.c.b16 %v3470, %v3463
      %v3786 = vpack.c.b16 %v3471, %v3464
      %v3787 = vpack.c.b16 %v3472, %v3465
      %v3788 = vpack.c.b16 %v3473, %v3466
      %v3789 = vpack.c.b16 %v3481, %v3474
      %v3790 = vpack.c.b16 %v3482, %v3475
      %v3791 = vpack.c.b16 %v3483, %v3476
      %v3792 = vpack.c.b16 %v3484, %v3477
      %v3793 = vpack.c.b16 %v3485, %v3478
      %v3794 = vpack.c.b16 %v3486, %v3479
      %v3795 = vpack.c.b16 %v3487, %v3480
      %v3796 = vpack.c.b16 %v3495, %v3488
      %v3797 = vpack.c.b16 %v3496, %v3489
      %v3798 = vpack.c.b16 %v3497, %v3490
      %v3799 = vpack.c.b16 %v3498, %v3491
      %v3800 = vpack.c.b16 %v3499, %v3492
      %v3801 = vpack.c.b16 %v3500, %v3493
      %v3802 = vpack.c.b16 %v3501, %v3494
      %v3803 = vpack.c.b16 %v3509, %v3502
      %v3804 = vpack.c.b16 %v3510, %v3503
      %v3805 = vpack.c.b16 %v3511, %v3504
      %v3806 = vpack.c.b16 %v3512, %v3505
      %v3807 = vpack.c.b16 %v3513, %v3506
      %v3808 = vpack.c.b16 %v3514, %v3507
      %v3809 = vpack.c.b16 %v3515, %v3508
      %v3810 = vpack.c.b16 %v3523, %v3516
      %v3811 = vpack.c.b16 %v3524, %v3517
      %v3812 = vpack.c.b16 %v3525, %v3518
      %v3813 = vpack.c.b16 %v3526, %v3519
      %v3814 = vpack.c.b16 %v3527, %v3520
      %v3815 = vpack.c.b16 %v3528, %v3521
      %v3816 = vpack.c.b16 %v3529, %v3522
      %v3817 = vpack.c.b16 %v3537, %v3530
      %v3818 = vpack.c.b16 %v3538, %v3531
      %v3819 = vpack.c.b16 %v3539, %v3532
      %v3820 = vpack.c.b16 %v3540, %v3533
      %v3821 = vpack.c.b16 %v3541, %v3534
      %v3822 = vpack.c.b16 %v3542, %v3535
      %v3823 = vpack.c.b16 %v3543, %v3536
      %v3824 = vpack.c.b16 %v3551, %v3544
      %v3825 = vpack.c.b16 %v3552, %v3545
      %v3826 = vpack.c.b16 %v3553, %v3546
      %v3827 = vpack.c.b16 %v3554, %v3547
      %v3828 = vpack.c.b16 %v3555, %v3548
      %v3829 = vpack.c.b16 %v3556, %v3549
      %v3830 = vpack.c.b16 %v3557, %v3550
      %v3831 = vpack.c.b16 %v3565, %v3558
      %v3832 = vpack.c.b16 %v3566, %v3559
      %v3833 = vpack.c.b16 %v3567, %v3560
      %v3834 = vpack.c.b16 %v3568, %v3561
      %v3835 = vpack.c.b16 %v3569, %v3562
      %v3836 = vpack.c.b16 %v3570, %v3563
      %v3837 = vpack.c.b16 %v3571, %v3564
      %v3838 = vpack.c.b16 %v3579, %v3572
      %v3839 = vpack.c.b16 %v3580, %v3573
      %v3840 = vpack.c.b16 %v3581, %v3574
      %v3841 = vpack.c.b16 %v3582, %v3575
      %v3842 = vpack.c.b16 %v3583, %v3576
      %v3843 = vpack.c.b16 %v3584, %v3577
      %v3844 = vpack.c.b16 %v3585, %v3578
      %v3845 = vpack.c.b16 %v3593, %v3586
      %v3846 = vpack.c.b16 %v3594, %v3587
      %v3847 = vpack.c.b16 %v3595, %v3588
      %v3848 = vpack.c.b16 %v3596, %v3589
      %v3849 = vpack.c.b16 %v3597, %v3590
      %v3850 = vpack.c.b16 %v3598, %v3591
      %v3851 = vpack.c.b16 %v3599, %v3592
      %v3852 = vpack.c.b16 %v3607, %v3600
      %v3853 = vpack.c.b16 %v3608, %v3601
      %v3854 = vpack.c.b16 %v3609, %v3602
      %v3855 = vpack.c.b16 %v3610, %v3603
      %v3856 = vpack.c.b16 %v3611, %v3604
      %v3857 = vpack.c.b16 %v3612, %v3605
      %v3858 = vpack.c.b16 %v3613, %v3606
      %v3859 = vpack.c.b16 %v3621, %v3614
      %v3860 = vpack.c.b16 %v3622, %v3615
      %v3861 = vpack.c.b16 %v3623, %v3616
      %v3862 = vpack.c.b16 %v3624, %v3617
      %v3863 = vpack.c.b16 %v3625, %v3618
      %v3864 = vpack.c.b16 %v3626, %v3619
      %v3865 = vpack.c.b16 %v3627, %v3620
      %v3866 = vpack.c.b16 %v3635, %v3628
      %v3867 = vpack.c.b16 %v3636, %v3629
      %v3868 = vpack.c.b16 %v3637, %v3630
      %v3869 = vpack.c.b16 %v3638, %v3631
      %v3870 = vpack.c.b16 %v3639, %v3632
      %v3871 = vpack.c.b16 %v3640, %v3633
      %v3872 = vpack.c.b16 %v3641, %v3634
      %v3873 = vpack.c.b16 %v3649, %v3642
      %v3874 = vpack.c.b16 %v3650, %v3643
      %v3875 = vpack.c.b16 %v3651, %v3644
      %v3876 = vpack.c.b16 %v3652, %v3645
      %v3877 = vpack.c.b16 %v3653, %v3646
      %v3878 = vpack.c.b16 %v3654, %v3647
      %v3879 = vpack.c.b16 %v3655, %v3648
      %v3880 = vpack.c.b16 %v3663, %v3656
      %v3881 = vpack.c.b16 %v3664, %v3657
      %v3882 = vpack.c.b16 %v3665, %v3658
      %v3883 = vpack.c.b16 %v3666, %v3659
      %v3884 = vpack.c.b16 %v3667, %v3660
      %v3885 = vpack.c.b16 %v3668, %v3661
      %v3886 = vpack.c.b16 %v3669, %v3662
      %v3887 = vpack.c.b16 %v3677, %v3670
      %v3888 = vpack.c.b16 %v3678, %v3671
      %v3889 = vpack.c.b16 %v3679, %v3672
      %v3890 = vpack.c.b16 %v3680, %v3673
      %v3891 = vpack.c.b16 %v3681, %v3674
      %v3892 = vpack.c.b16 %v3682, %v3675
      %v3893 = vpack.c.b16 %v3683, %v3676
      %v3894 = vpack.c.b16 %v3691, %v3684
      %v3895 = vpack.c.b16 %v3692, %v3685
      %v3896 = vpack.c.b16 %v3693, %v3686
      %v3897 = vpack.c.b16 %v3694, %v3687
      %v3898 = vpack.c.b16 %v3695, %v3688
      %v3899 = vpack.c.b16 %v3696, %v3689
      %v3900 = vpack.c.b16 %v3697, %v3690
      %v3901 = vpack.c.b16 %v3705, %v3698
      %v3902 = vpack.c.b16 %v3706, %v3699
      %v3903 = vpack.c.b16 %v3707, %v3700
      %v3904 = vpack.c.b16 %v3708, %v3701
      %v3905 = vpack.c.b16 %v3709, %v3702
      %v3906 = vpack.c.b16 %v3710, %v3703
      %v3907 = vpack.c.b16 %v3711, %v3704
      %v3908 = vpack.c.b16 %v3719, %v3712
      %v3909 = vpack.c.b16 %v3720, %v3713
      %v3910 = vpack.c.b16 %v3721, %v3714
      %v3911 = vpack.c.b16 %v3722, %v3715
      %v3912 = vpack.c.b16 %v3723, %v3716
      %v3913 = vpack.c.b16 %v3724, %v3717
      %v3914 = vpack.c.b16 %v3725, %v3718
      %v3915 = vpack.c.b16 %v3733, %v3726
      %v3916 = vpack.c.b16 %v3734, %v3727
      %v3917 = vpack.c.b16 %v3735, %v3728
      %v3918 = vpack.c.b16 %v3736, %v3729
      %v3919 = vpack.c.b16 %v3737, %v3730
      %v3920 = vpack.c.b16 %v3738, %v3731
      %v3921 = vpack.c.b16 %v3739, %v3732
      %v3922 = vpack.c.b16 %v3747, %v3740
      %v3923 = vpack.c.b16 %v3748, %v3741
      %v3924 = vpack.c.b16 %v3749, %v3742
      %v3925 = vpack.c.b16 %v3750, %v3743
      %v3926 = vpack.c.b16 %v3751, %v3744
      %v3927 = vpack.c.b16 %v3752, %v3745
      %v3928 = vpack.c.b16 %v3753, %v3746
      %v4105 = vsel %vm1718, %v2962, 0
      %v4108 = vsel %vm1718, %v2966, 0
      %4110 = vmatprep.subr.bf16.mxu0 %v3755
      %4111 = vmatpush1.bf16.msra.mxu0 %v3754
      %4112 = vmatprep.subr.bf16.mxu0 %v3762
      %4113 = vmatpush1.bf16.msra.mxu0 %v3761
      %4114 = vmatprep.subr.bf16.mxu0 %v3769
      %4115 = vmatpush1.bf16.msra.mxu0 %v3768
      %4116 = vmatprep.subr.bf16.mxu0 %v3776
      %4117 = vmatpush1.bf16.msra.mxu0 %v3775
      %4118 = vmatprep.subr.bf16.mxu0 %v3783
      %4119 = vmatpush1.bf16.msra.mxu0 %v3782
      %4120 = vmatprep.subr.bf16.mxu0 %v3790
      %4121 = vmatpush1.bf16.msra.mxu0 %v3789
      %4122 = vmatprep.subr.bf16.mxu0 %v3797
      %4123 = vmatpush1.bf16.msra.mxu0 %v3796
      %4124 = vmatprep.subr.bf16.mxu0 %v3804
      %4125 = vmatpush1.bf16.msra.mxu0 %v3803
      %4126 = vmatprep.subr.bf16.mxu0 %v3811
      %4127 = vmatpush1.bf16.msra.mxu0 %v3810
      %4128 = vmatprep.subr.bf16.mxu0 %v3818
      %4129 = vmatpush1.bf16.msra.mxu0 %v3817
      %4130 = vmatprep.subr.bf16.mxu0 %v3825
      %4131 = vmatpush1.bf16.msra.mxu0 %v3824
      %4132 = vmatprep.subr.bf16.mxu0 %v3832
      %4133 = vmatpush1.bf16.msra.mxu0 %v3831
      %4134 = vmatprep.subr.bf16.mxu0 %v3839
      %4135 = vmatpush1.bf16.msra.mxu0 %v3838
      %4136 = vmatprep.subr.bf16.mxu0 %v3846
      %4137 = vmatpush1.bf16.msra.mxu0 %v3845
      %4138 = vmatprep.subr.bf16.mxu0 %v3853
      %4139 = vmatpush1.bf16.msra.mxu0 %v3852
      %4140 = vmatprep.subr.bf16.mxu0 %v3860
      %4141 = vmatpush1.bf16.msra.mxu0 %v3859
      %4142 = vmatprep.mubr.bf16.mxu0 %v2960
      %4143 = vmatmul.mubr.bf16.gmra.mrb[0].mxu0 %v2959
      %v4144 = vpop.f32.mrb[0].mxu0
      %v4145 = vadd.f32 %v3172, %v4144
      %v4146 = vpop.f32.mrb[0].mxu0
      %v4147 = vadd.f32 %v3176, %v4146
      %v4148 = vpop.f32.mrb[0].mxu0
      %v4149 = vadd.f32 %v3172, %v4148
      %v4150 = vpop.f32.mrb[0].mxu0
      %v4151 = vadd.f32 %v3176, %v4150
      %4152 = vmatprep.mubr.bf16.mxu0 %v2964
      %4153 = vmatmul.mubr.bf16.gmra.mrb[0].mxu0 %v2963
      %v4154 = vpop.f32.mrb[0].mxu0
      %v4155 = vadd.f32 %v3172, %v4154
      %v4156 = vpop.f32.mrb[0].mxu0
      %v4157 = vadd.f32 %v3176, %v4156
      %v4158 = vpop.f32.mrb[0].mxu0
      %v4159 = vadd.f32 %v3172, %v4158
      %v4160 = vpop.f32.mrb[0].mxu0
      %v4161 = vadd.f32 %v3176, %v4160
      %4162 = vdwg.mxu0
      %4163 = vmatprep.subr.bf16.mxu0 %v3867
      %4164 = vmatpush1.bf16.msra.mxu0 %v3866
      %4165 = vmatprep.subr.bf16.mxu0 %v3874
      %4166 = vmatpush1.bf16.msra.mxu0 %v3873
      %4167 = vmatprep.subr.bf16.mxu0 %v3881
      %4168 = vmatpush1.bf16.msra.mxu0 %v3880
      %4169 = vmatprep.subr.bf16.mxu0 %v3888
      %4170 = vmatpush1.bf16.msra.mxu0 %v3887
      %4171 = vmatprep.subr.bf16.mxu0 %v3895
      %4172 = vmatpush1.bf16.msra.mxu0 %v3894
      %4173 = vmatprep.subr.bf16.mxu0 %v3902
      %4174 = vmatpush1.bf16.msra.mxu0 %v3901
      %4175 = vmatprep.subr.bf16.mxu0 %v3909
      %4176 = vmatpush1.bf16.msra.mxu0 %v3908
      %4177 = vmatprep.subr.bf16.mxu0 %v3916
      %4178 = vmatpush1.bf16.msra.mxu0 %v3915
      %4179 = vmatprep.subr.bf16.mxu0 %v3923
      %4180 = vmatpush1.bf16.msra.mxu0 %v3922
      %4181 = vmatprep.subr.bf16.mxu0 0
      %4182 = vmatpush1.bf16.msra.mxu0 0
      %4183 = vmatprep.subr.bf16.mxu0 0
      %4184 = vmatpush1.bf16.msra.mxu0 0
      %4185 = vmatprep.subr.bf16.mxu0 0
      %4186 = vmatpush1.bf16.msra.mxu0 0
      %4187 = vmatprep.subr.bf16.mxu0 0
      %4188 = vmatpush1.bf16.msra.mxu0 0
      %4189 = vmatprep.subr.bf16.mxu0 0
      %4190 = vmatpush1.bf16.msra.mxu0 0
      %4191 = vmatprep.subr.bf16.mxu0 0
      %4192 = vmatpush1.bf16.msra.mxu0 0
      %4193 = vmatprep.subr.bf16.mxu0 0
      %4194 = vmatpush1.bf16.msra.mxu0 0
      %4195 = vmatprep.mubr.bf16.mxu0 %v4105
      %4196 = vmatmul.mubr.bf16.gmra.mrb[0].mxu0 %v2961
      %v4197 = vpop.f32.mrb[0].mxu0
      %v4198 = vadd.f32 %v4145, %v4197
      %v4199 = vpop.f32.mrb[0].mxu0
      %v4200 = vadd.f32 %v4147, %v4199
      %v4201 = vpop.f32.mrb[0].mxu0
      %v4202 = vadd.f32 %v4149, %v4201
      %v4203 = vpop.f32.mrb[0].mxu0
      %v4204 = vadd.f32 %v4151, %v4203
      %4205 = vmatprep.mubr.bf16.mxu0 %v4108
      %4206 = vmatmul.mubr.bf16.gmra.mrb[0].mxu0 %v2965
      %v4207 = vpop.f32.mrb[0].mxu0
      %v4208 = vadd.f32 %v4155, %v4207
      %v4209 = vpop.f32.mrb[0].mxu0
      %v4210 = vadd.f32 %v4157, %v4209
      %v4211 = vpop.f32.mrb[0].mxu0
      %v4212 = vadd.f32 %v4159, %v4211
      %v4213 = vpop.f32.mrb[0].mxu0
      %v4214 = vadd.f32 %v4161, %v4213
      %4215 = vdwg.mxu0
      %4216 = vmatprep.subr.bf16.mxu0 %v3757
      %4217 = vmatpush1.bf16.msra.mxu0 %v3756
      %4218 = vmatprep.subr.bf16.mxu0 %v3764
      %4219 = vmatpush1.bf16.msra.mxu0 %v3763
      %4220 = vmatprep.subr.bf16.mxu0 %v3771
      %4221 = vmatpush1.bf16.msra.mxu0 %v3770
      %4222 = vmatprep.subr.bf16.mxu0 %v3778
      %4223 = vmatpush1.bf16.msra.mxu0 %v3777
      %4224 = vmatprep.subr.bf16.mxu0 %v3785
      %4225 = vmatpush1.bf16.msra.mxu0 %v3784
      %4226 = vmatprep.subr.bf16.mxu0 %v3792
      %4227 = vmatpush1.bf16.msra.mxu0 %v3791
      %4228 = vmatprep.subr.bf16.mxu0 %v3799
      %4229 = vmatpush1.bf16.msra.mxu0 %v3798
      %4230 = vmatprep.subr.bf16.mxu0 %v3806
      %4231 = vmatpush1.bf16.msra.mxu0 %v3805
      %4232 = vmatprep.subr.bf16.mxu0 %v3813
      %4233 = vmatpush1.bf16.msra.mxu0 %v3812
      %4234 = vmatprep.subr.bf16.mxu0 %v3820
      %4235 = vmatpush1.bf16.msra.mxu0 %v3819
      %4236 = vmatprep.subr.bf16.mxu0 %v3827
      %4237 = vmatpush1.bf16.msra.mxu0 %v3826
      %4238 = vmatprep.subr.bf16.mxu0 %v3834
      %4239 = vmatpush1.bf16.msra.mxu0 %v3833
      %4240 = vmatprep.subr.bf16.mxu0 %v3841
      %4241 = vmatpush1.bf16.msra.mxu0 %v3840
      %4242 = vmatprep.subr.bf16.mxu0 %v3848
      %4243 = vmatpush1.bf16.msra.mxu0 %v3847
      %4244 = vmatprep.subr.bf16.mxu0 %v3855
      %4245 = vmatpush1.bf16.msra.mxu0 %v3854
      %4246 = vmatprep.subr.bf16.mxu0 %v3862
      %4247 = vmatpush1.bf16.msra.mxu0 %v3861
      %4248 = vmatprep.mubr.bf16.mxu0 %v2960
      %4249 = vmatmul.mubr.bf16.gmra.mrb[0].mxu0 %v2959
      %v4250 = vpop.f32.mrb[0].mxu0
      %v4251 = vadd.f32 %v3180, %v4250
      %v4252 = vpop.f32.mrb[0].mxu0
      %v4253 = vadd.f32 %v3184, %v4252
      %v4254 = vpop.f32.mrb[0].mxu0
      %v4255 = vadd.f32 %v3180, %v4254
      %v4256 = vpop.f32.mrb[0].mxu0
      %v4257 = vadd.f32 %v3184, %v4256
      %4258 = vmatprep.mubr.bf16.mxu0 %v2964
      %4259 = vmatmul.mubr.bf16.gmra.mrb[0].mxu0 %v2963
      %v4260 = vpop.f32.mrb[0].mxu0
      %v4261 = vadd.f32 %v3180, %v4260
      %v4262 = vpop.f32.mrb[0].mxu0
      %v4263 = vadd.f32 %v3184, %v4262
      %v4264 = vpop.f32.mrb[0].mxu0
      %v4265 = vadd.f32 %v3180, %v4264
      %v4266 = vpop.f32.mrb[0].mxu0
      %v4267 = vadd.f32 %v3184, %v4266
      %4268 = vdwg.mxu0
      %4269 = vmatprep.subr.bf16.mxu0 %v3869
      %4270 = vmatpush1.bf16.msra.mxu0 %v3868
      %4271 = vmatprep.subr.bf16.mxu0 %v3876
      %4272 = vmatpush1.bf16.msra.mxu0 %v3875
      %4273 = vmatprep.subr.bf16.mxu0 %v3883
      %4274 = vmatpush1.bf16.msra.mxu0 %v3882
      %4275 = vmatprep.subr.bf16.mxu0 %v3890
      %4276 = vmatpush1.bf16.msra.mxu0 %v3889
      %4277 = vmatprep.subr.bf16.mxu0 %v3897
      %4278 = vmatpush1.bf16.msra.mxu0 %v3896
      %4279 = vmatprep.subr.bf16.mxu0 %v3904
      %4280 = vmatpush1.bf16.msra.mxu0 %v3903
      %4281 = vmatprep.subr.bf16.mxu0 %v3911
      %4282 = vmatpush1.bf16.msra.mxu0 %v3910
      %4283 = vmatprep.subr.bf16.mxu0 %v3918
      %4284 = vmatpush1.bf16.msra.mxu0 %v3917
      %4285 = vmatprep.subr.bf16.mxu0 %v3925
      %4286 = vmatpush1.bf16.msra.mxu0 %v3924
      %4287 = vmatprep.subr.bf16.mxu0 0
      %4288 = vmatpush1.bf16.msra.mxu0 0
      %4289 = vmatprep.subr.bf16.mxu0 0
      %4290 = vmatpush1.bf16.msra.mxu0 0
      %4291 = vmatprep.subr.bf16.mxu0 0
      %4292 = vmatpush1.bf16.msra.mxu0 0
      %4293 = vmatprep.subr.bf16.mxu0 0
      %4294 = vmatpush1.bf16.msra.mxu0 0
      %4295 = vmatprep.subr.bf16.mxu0 0
      %4296 = vmatpush1.bf16.msra.mxu0 0
      %4297 = vmatprep.subr.bf16.mxu0 0
      %4298 = vmatpush1.bf16.msra.mxu0 0
      %4299 = vmatprep.subr.bf16.mxu0 0
      %4300 = vmatpush1.bf16.msra.mxu0 0
      %4301 = vmatprep.mubr.bf16.mxu0 %v4105
      %4302 = vmatmul.mubr.bf16.gmra.mrb[0].mxu0 %v2961
      %v4303 = vpop.f32.mrb[0].mxu0
      %v4304 = vadd.f32 %v4251, %v4303
      %v4305 = vpop.f32.mrb[0].mxu0
      %v4306 = vadd.f32 %v4253, %v4305
      %v4307 = vpop.f32.mrb[0].mxu0
      %v4308 = vadd.f32 %v4255, %v4307
      %v4309 = vpop.f32.mrb[0].mxu0
      %v4310 = vadd.f32 %v4257, %v4309
      %4311 = vmatprep.mubr.bf16.mxu0 %v4108
      %4312 = vmatmul.mubr.bf16.gmra.mrb[0].mxu0 %v2965
      %v4313 = vpop.f32.mrb[0].mxu0
      %v4314 = vadd.f32 %v4261, %v4313
      %v4315 = vpop.f32.mrb[0].mxu0
      %v4316 = vadd.f32 %v4263, %v4315
      %v4317 = vpop.f32.mrb[0].mxu0
      %v4318 = vadd.f32 %v4265, %v4317
      %v4319 = vpop.f32.mrb[0].mxu0
      %v4320 = vadd.f32 %v4267, %v4319
      %4321 = vdwg.mxu0
      %4322 = vmatprep.subr.bf16.mxu0 %v3759
      %4323 = vmatpush1.bf16.msra.mxu0 %v3758
      %4324 = vmatprep.subr.bf16.mxu0 %v3766
      %4325 = vmatpush1.bf16.msra.mxu0 %v3765
      %4326 = vmatprep.subr.bf16.mxu0 %v3773
      %4327 = vmatpush1.bf16.msra.mxu0 %v3772
      %4328 = vmatprep.subr.bf16.mxu0 %v3780
      %4329 = vmatpush1.bf16.msra.mxu0 %v3779
      %4330 = vmatprep.subr.bf16.mxu0 %v3787
      %4331 = vmatpush1.bf16.msra.mxu0 %v3786
      %4332 = vmatprep.subr.bf16.mxu0 %v3794
      %4333 = vmatpush1.bf16.msra.mxu0 %v3793
      %4334 = vmatprep.subr.bf16.mxu0 %v3801
      %4335 = vmatpush1.bf16.msra.mxu0 %v3800
      %4336 = vmatprep.subr.bf16.mxu0 %v3808
      %4337 = vmatpush1.bf16.msra.mxu0 %v3807
      %4338 = vmatprep.subr.bf16.mxu0 %v3815
      %4339 = vmatpush1.bf16.msra.mxu0 %v3814
      %4340 = vmatprep.subr.bf16.mxu0 %v3822
      %4341 = vmatpush1.bf16.msra.mxu0 %v3821
      %4342 = vmatprep.subr.bf16.mxu0 %v3829
      %4343 = vmatpush1.bf16.msra.mxu0 %v3828
      %4344 = vmatprep.subr.bf16.mxu0 %v3836
      %4345 = vmatpush1.bf16.msra.mxu0 %v3835
      %4346 = vmatprep.subr.bf16.mxu0 %v3843
      %4347 = vmatpush1.bf16.msra.mxu0 %v3842
      %4348 = vmatprep.subr.bf16.mxu0 %v3850
      %4349 = vmatpush1.bf16.msra.mxu0 %v3849
      %4350 = vmatprep.subr.bf16.mxu0 %v3857
      %4351 = vmatpush1.bf16.msra.mxu0 %v3856
      %4352 = vmatprep.subr.bf16.mxu0 %v3864
      %4353 = vmatpush1.bf16.msra.mxu0 %v3863
      %4354 = vmatprep.mubr.bf16.mxu0 %v2960
      %4355 = vmatmul.mubr.bf16.gmra.mrb[0].mxu0 %v2959
      %v4356 = vpop.f32.mrb[0].mxu0
      %v4357 = vadd.f32 %v3188, %v4356
      %v4358 = vpop.f32.mrb[0].mxu0
      %v4359 = vadd.f32 %v3192, %v4358
      %v4360 = vpop.f32.mrb[0].mxu0
      %v4361 = vadd.f32 %v3188, %v4360
      %v4362 = vpop.f32.mrb[0].mxu0
      %v4363 = vadd.f32 %v3192, %v4362
      %4364 = vmatprep.mubr.bf16.mxu0 %v2964
      %4365 = vmatmul.mubr.bf16.gmra.mrb[0].mxu0 %v2963
      %v4366 = vpop.f32.mrb[0].mxu0
      %v4367 = vadd.f32 %v3188, %v4366
      %v4368 = vpop.f32.mrb[0].mxu0
      %v4369 = vadd.f32 %v3192, %v4368
      %v4370 = vpop.f32.mrb[0].mxu0
      %v4371 = vadd.f32 %v3188, %v4370
      %v4372 = vpop.f32.mrb[0].mxu0
      %v4373 = vadd.f32 %v3192, %v4372
      %4374 = vdwg.mxu0
      %4375 = vmatprep.subr.bf16.mxu0 %v3871
      %4376 = vmatpush1.bf16.msra.mxu0 %v3870
      %4377 = vmatprep.subr.bf16.mxu0 %v3878
      %4378 = vmatpush1.bf16.msra.mxu0 %v3877
      %4379 = vmatprep.subr.bf16.mxu0 %v3885
      %4380 = vmatpush1.bf16.msra.mxu0 %v3884
      %4381 = vmatprep.subr.bf16.mxu0 %v3892
      %4382 = vmatpush1.bf16.msra.mxu0 %v3891
      %4383 = vmatprep.subr.bf16.mxu0 %v3899
      %4384 = vmatpush1.bf16.msra.mxu0 %v3898
      %4385 = vmatprep.subr.bf16.mxu0 %v3906
      %4386 = vmatpush1.bf16.msra.mxu0 %v3905
      %4387 = vmatprep.subr.bf16.mxu0 %v3913
      %4388 = vmatpush1.bf16.msra.mxu0 %v3912
      %4389 = vmatprep.subr.bf16.mxu0 %v3920
      %4390 = vmatpush1.bf16.msra.mxu0 %v3919
      %4391 = vmatprep.subr.bf16.mxu0 %v3927
      %4392 = vmatpush1.bf16.msra.mxu0 %v3926
      %4393 = vmatprep.subr.bf16.mxu0 0
      %4394 = vmatpush1.bf16.msra.mxu0 0
      %4395 = vmatprep.subr.bf16.mxu0 0
      %4396 = vmatpush1.bf16.msra.mxu0 0
      %4397 = vmatprep.subr.bf16.mxu0 0
      %4398 = vmatpush1.bf16.msra.mxu0 0
      %4399 = vmatprep.subr.bf16.mxu0 0
      %4400 = vmatpush1.bf16.msra.mxu0 0
      %4401 = vmatprep.subr.bf16.mxu0 0
      %4402 = vmatpush1.bf16.msra.mxu0 0
      %4403 = vmatprep.subr.bf16.mxu0 0
      %4404 = vmatpush1.bf16.msra.mxu0 0
      %4405 = vmatprep.subr.bf16.mxu0 0
      %4406 = vmatpush1.bf16.msra.mxu0 0
      %4407 = vmatprep.mubr.bf16.mxu0 %v4105
      %4408 = vmatmul.mubr.bf16.gmra.mrb[0].mxu0 %v2961
      %v4409 = vpop.f32.mrb[0].mxu0
      %v4410 = vadd.f32 %v4357, %v4409
      %v4411 = vpop.f32.mrb[0].mxu0
      %v4412 = vadd.f32 %v4359, %v4411
      %v4413 = vpop.f32.mrb[0].mxu0
      %v4414 = vadd.f32 %v4361, %v4413
      %v4415 = vpop.f32.mrb[0].mxu0
      %v4416 = vadd.f32 %v4363, %v4415
      %4417 = vmatprep.mubr.bf16.mxu0 %v4108
      %4418 = vmatmul.mubr.bf16.gmra.mrb[0].mxu0 %v2965
      %v4419 = vpop.f32.mrb[0].mxu0
      %v4420 = vadd.f32 %v4367, %v4419
      %v4421 = vpop.f32.mrb[0].mxu0
      %v4422 = vadd.f32 %v4369, %v4421
      %v4423 = vpop.f32.mrb[0].mxu0
      %v4424 = vadd.f32 %v4371, %v4423
      %v4425 = vpop.f32.mrb[0].mxu0
      %v4426 = vadd.f32 %v4373, %v4425
      %4427 = vdwg.mxu0
      %4428 = vmatprep.subr.bf16.mxu0 0
      %4429 = vmatpush1.bf16.msra.mxu0 %v3760
      %4430 = vmatprep.subr.bf16.mxu0 0
      %4431 = vmatpush1.bf16.msra.mxu0 %v3767
      %4432 = vmatprep.subr.bf16.mxu0 0
      %4433 = vmatpush1.bf16.msra.mxu0 %v3774
      %4434 = vmatprep.subr.bf16.mxu0 0
      %4435 = vmatpush1.bf16.msra.mxu0 %v3781
      %4436 = vmatprep.subr.bf16.mxu0 0
      %4437 = vmatpush1.bf16.msra.mxu0 %v3788
      %4438 = vmatprep.subr.bf16.mxu0 0
      %4439 = vmatpush1.bf16.msra.mxu0 %v3795
      %4440 = vmatprep.subr.bf16.mxu0 0
      %4441 = vmatpush1.bf16.msra.mxu0 %v3802
      %4442 = vmatprep.subr.bf16.mxu0 0
      %4443 = vmatpush1.bf16.msra.mxu0 %v3809
      %4444 = vmatprep.subr.bf16.mxu0 0
      %4445 = vmatpush1.bf16.msra.mxu0 %v3816
      %4446 = vmatprep.subr.bf16.mxu0 0
      %4447 = vmatpush1.bf16.msra.mxu0 %v3823
      %4448 = vmatprep.subr.bf16.mxu0 0
      %4449 = vmatpush1.bf16.msra.mxu0 %v3830
      %4450 = vmatprep.subr.bf16.mxu0 0
      %4451 = vmatpush1.bf16.msra.mxu0 %v3837
      %4452 = vmatprep.subr.bf16.mxu0 0
      %4453 = vmatpush1.bf16.msra.mxu0 %v3844
      %4454 = vmatprep.subr.bf16.mxu0 0
      %4455 = vmatpush1.bf16.msra.mxu0 %v3851
      %4456 = vmatprep.subr.bf16.mxu0 0
      %4457 = vmatpush1.bf16.msra.mxu0 %v3858
      %4458 = vmatprep.subr.bf16.mxu0 0
      %4459 = vmatpush1.bf16.msra.mxu0 %v3865
      %4460 = vmatprep.mubr.bf16.mxu0 %v2960
      %4461 = vmatmul.mubr.bf16.gmra.mrb[0].mxu0 %v2959
      %v4462 = vpop.f32.mrb[0].mxu0
      %v4463 = vadd.f32 %v3196, %v4462
      %v4464 = vpop.f32.mrb[0].mxu0
      %v4465 = vpop.f32.mrb[0].mxu0
      %v4466 = vadd.f32 %v3196, %v4465
      %v4467 = vpop.f32.mrb[0].mxu0
      %4468 = vmatprep.mubr.bf16.mxu0 %v2964
      %4469 = vmatmul.mubr.bf16.gmra.mrb[0].mxu0 %v2963
      %v4470 = vpop.f32.mrb[0].mxu0
      %v4471 = vadd.f32 %v3196, %v4470
      %v4472 = vpop.f32.mrb[0].mxu0
      %v4473 = vpop.f32.mrb[0].mxu0
      %v4474 = vadd.f32 %v3196, %v4473
      %v4475 = vpop.f32.mrb[0].mxu0
      %4476 = vdwg.mxu0
      %4477 = vmatprep.subr.bf16.mxu0 0
      %4478 = vmatpush1.bf16.msra.mxu0 %v3872
      %4479 = vmatprep.subr.bf16.mxu0 0
      %4480 = vmatpush1.bf16.msra.mxu0 %v3879
      %4481 = vmatprep.subr.bf16.mxu0 0
      %4482 = vmatpush1.bf16.msra.mxu0 %v3886
      %4483 = vmatprep.subr.bf16.mxu0 0
      %4484 = vmatpush1.bf16.msra.mxu0 %v3893
      %4485 = vmatprep.subr.bf16.mxu0 0
      %4486 = vmatpush1.bf16.msra.mxu0 %v3900
      %4487 = vmatprep.subr.bf16.mxu0 0
      %4488 = vmatpush1.bf16.msra.mxu0 %v3907
      %4489 = vmatprep.subr.bf16.mxu0 0
      %4490 = vmatpush1.bf16.msra.mxu0 %v3914
      %4491 = vmatprep.subr.bf16.mxu0 0
      %4492 = vmatpush1.bf16.msra.mxu0 %v3921
      %4493 = vmatprep.subr.bf16.mxu0 0
      %4494 = vmatpush1.bf16.msra.mxu0 %v3928
      %4495 = vmatprep.subr.bf16.mxu0 0
      %4496 = vmatpush1.bf16.msra.mxu0 0
      %4497 = vmatprep.subr.bf16.mxu0 0
      %4498 = vmatpush1.bf16.msra.mxu0 0
      %4499 = vmatprep.subr.bf16.mxu0 0
      %4500 = vmatpush1.bf16.msra.mxu0 0
      %4501 = vmatprep.subr.bf16.mxu0 0
      %4502 = vmatpush1.bf16.msra.mxu0 0
      %4503 = vmatprep.subr.bf16.mxu0 0
      %4504 = vmatpush1.bf16.msra.mxu0 0
      %4505 = vmatprep.subr.bf16.mxu0 0
      %4506 = vmatpush1.bf16.msra.mxu0 0
      %4507 = vmatprep.subr.bf16.mxu0 0
      %4508 = vmatpush1.bf16.msra.mxu0 0
      %4509 = vmatprep.mubr.bf16.mxu0 %v4105
      %4510 = vmatmul.mubr.bf16.gmra.mrb[0].mxu0 %v2961
      %v4511 = vpop.f32.mrb[0].mxu0
      %v4512 = vadd.f32 %v4463, %v4511
      %v4513 = vpop.f32.mrb[0].mxu0
      %v4514 = vpop.f32.mrb[0].mxu0
      %v4515 = vadd.f32 %v4466, %v4514
      %v4516 = vpop.f32.mrb[0].mxu0
      %4517 = vmatprep.mubr.bf16.mxu0 %v4108
      %4518 = vmatmul.mubr.bf16.gmra.mrb[0].mxu0 %v2965
      %v4519 = vpop.f32.mrb[0].mxu0
      %v4520 = vadd.f32 %v4471, %v4519
      %v4521 = vpop.f32.mrb[0].mxu0
      %v4522 = vpop.f32.mrb[0].mxu0
      %v4523 = vadd.f32 %v4474, %v4522
      %v4524 = vpop.f32.mrb[0].mxu0
      %4525 = vdwg.mxu0
      %v4526 = vxor.u32 %v4198, 2147483648
      %v4527 = vxor.u32 %v4200, 2147483648
      %v4528 = vxor.u32 %v4304, 2147483648
      %v4529 = vxor.u32 %v4306, 2147483648
      %v4530 = vxor.u32 %v4410, 2147483648
      %v4531 = vxor.u32 %v4412, 2147483648
      %v4532 = vxor.u32 %v4512, 2147483648
      %v4533 = vxor.u32 %v4202, 2147483648
      %v4534 = vxor.u32 %v4204, 2147483648
      %v4535 = vxor.u32 %v4308, 2147483648
      %v4536 = vxor.u32 %v4310, 2147483648
      %v4537 = vxor.u32 %v4414, 2147483648
      %v4538 = vxor.u32 %v4416, 2147483648
      %v4539 = vxor.u32 %v4515, 2147483648
      %v4540 = vxor.u32 %v4208, 2147483648
      %v4541 = vxor.u32 %v4210, 2147483648
      %v4542 = vxor.u32 %v4314, 2147483648
      %v4543 = vxor.u32 %v4316, 2147483648
      %v4544 = vxor.u32 %v4420, 2147483648
      %v4545 = vxor.u32 %v4422, 2147483648
      %v4546 = vxor.u32 %v4520, 2147483648
      %v4547 = vxor.u32 %v4212, 2147483648
      %v4548 = vxor.u32 %v4214, 2147483648
      %v4549 = vxor.u32 %v4318, 2147483648
      %v4550 = vxor.u32 %v4320, 2147483648
      %v4551 = vxor.u32 %v4424, 2147483648
      %v4552 = vxor.u32 %v4426, 2147483648
      %v4553 = vxor.u32 %v4523, 2147483648
      %v4554 = vmul.f32 %v4526, 1.442695
      %v4555 = vpow.pop %v4554
      %v4556 = vmul.f32 %v4527, 1.442695
      %v4557 = vpow.pop %v4556
      %v4558 = vmul.f32 %v4528, 1.442695
      %v4559 = vpow.pop %v4558
      %v4560 = vmul.f32 %v4529, 1.442695
      %v4561 = vpow.pop %v4560
      %v4562 = vmul.f32 %v4530, 1.442695
      %v4563 = vpow.pop %v4562
      %v4564 = vmul.f32 %v4531, 1.442695
      %v4565 = vpow.pop %v4564
      %v4566 = vmul.f32 %v4532, 1.442695
      %v4567 = vpow.pop %v4566
      %v4568 = vmul.f32 %v4533, 1.442695
      %v4569 = vpow.pop %v4568
      %v4570 = vmul.f32 %v4534, 1.442695
      %v4571 = vpow.pop %v4570
      %v4572 = vmul.f32 %v4535, 1.442695
      %v4573 = vpow.pop %v4572
      %v4574 = vmul.f32 %v4536, 1.442695
      %v4575 = vpow.pop %v4574
      %v4576 = vmul.f32 %v4537, 1.442695
      %v4577 = vpow.pop %v4576
      %v4578 = vmul.f32 %v4538, 1.442695
      %v4579 = vpow.pop %v4578
      %v4580 = vmul.f32 %v4539, 1.442695
      %v4581 = vpow.pop %v4580
      %v4582 = vmul.f32 %v4540, 1.442695
      %v4583 = vpow.pop %v4582
      %v4584 = vmul.f32 %v4541, 1.442695
      %v4585 = vpow.pop %v4584
      %v4586 = vmul.f32 %v4542, 1.442695
      %v4587 = vpow.pop %v4586
      %v4588 = vmul.f32 %v4543, 1.442695
      %v4589 = vpow.pop %v4588
      %v4590 = vmul.f32 %v4544, 1.442695
      %v4591 = vpow.pop %v4590
      %v4592 = vmul.f32 %v4545, 1.442695
      %v4593 = vpow.pop %v4592
      %v4594 = vmul.f32 %v4546, 1.442695
      %v4595 = vpow.pop %v4594
      %v4596 = vmul.f32 %v4547, 1.442695
      %v4597 = vpow.pop %v4596
      %v4598 = vmul.f32 %v4548, 1.442695
      %v4599 = vpow.pop %v4598
      %v4600 = vmul.f32 %v4549, 1.442695
      %v4601 = vpow.pop %v4600
      %v4602 = vmul.f32 %v4550, 1.442695
      %v4603 = vpow.pop %v4602
      %v4604 = vmul.f32 %v4551, 1.442695
      %v4605 = vpow.pop %v4604
      %v4606 = vmul.f32 %v4552, 1.442695
      %v4607 = vpow.pop %v4606
      %v4608 = vmul.f32 %v4553, 1.442695
      %v4609 = vpow.pop %v4608
      %v4610 = vadd.f32 %v4555, 1.0
      %v4611 = vadd.f32 %v4557, 1.0
      %v4612 = vadd.f32 %v4559, 1.0
      %v4613 = vadd.f32 %v4561, 1.0
      %v4614 = vadd.f32 %v4563, 1.0
      %v4615 = vadd.f32 %v4565, 1.0
      %v4616 = vadd.f32 %v4567, 1.0
      %v4617 = vadd.f32 %v4569, 1.0
      %v4618 = vadd.f32 %v4571, 1.0
      %v4619 = vadd.f32 %v4573, 1.0
      %v4620 = vadd.f32 %v4575, 1.0
      %v4621 = vadd.f32 %v4577, 1.0
      %v4622 = vadd.f32 %v4579, 1.0
      %v4623 = vadd.f32 %v4581, 1.0
      %v4624 = vadd.f32 %v4583, 1.0
      %v4625 = vadd.f32 %v4585, 1.0
      %v4626 = vadd.f32 %v4587, 1.0
      %v4627 = vadd.f32 %v4589, 1.0
      %v4628 = vadd.f32 %v4591, 1.0
      %v4629 = vadd.f32 %v4593, 1.0
      %v4630 = vadd.f32 %v4595, 1.0
      %v4631 = vadd.f32 %v4597, 1.0
      %v4632 = vadd.f32 %v4599, 1.0
      %v4633 = vadd.f32 %v4601, 1.0
      %v4634 = vadd.f32 %v4603, 1.0
      %v4635 = vadd.f32 %v4605, 1.0
      %v4636 = vadd.f32 %v4607, 1.0
      %v4637 = vadd.f32 %v4609, 1.0
      %v4638 = vrcp.pop %v4610
      %v4639 = vmul.f32 1.0, %v4638
      %v4640 = vrcp.pop %v4611
      %v4641 = vmul.f32 1.0, %v4640
      %v4642 = vrcp.pop %v4612
      %v4643 = vmul.f32 1.0, %v4642
      %v4644 = vrcp.pop %v4613
      %v4645 = vmul.f32 1.0, %v4644
      %v4646 = vrcp.pop %v4614
      %v4647 = vmul.f32 1.0, %v4646
      %v4648 = vrcp.pop %v4615
      %v4649 = vmul.f32 1.0, %v4648
      %v4650 = vrcp.pop %v4616
      %v4651 = vmul.f32 1.0, %v4650
      %v4652 = vrcp.pop %v4617
      %v4653 = vmul.f32 1.0, %v4652
      %v4654 = vrcp.pop %v4618
      %v4655 = vmul.f32 1.0, %v4654
      %v4656 = vrcp.pop %v4619
      %v4657 = vmul.f32 1.0, %v4656
      %v4658 = vrcp.pop %v4620
      %v4659 = vmul.f32 1.0, %v4658
      %v4660 = vrcp.pop %v4621
      %v4661 = vmul.f32 1.0, %v4660
      %v4662 = vrcp.pop %v4622
      %v4663 = vmul.f32 1.0, %v4662
      %v4664 = vrcp.pop %v4623
      %v4665 = vmul.f32 1.0, %v4664
      %v4666 = vrcp.pop %v4624
      %v4667 = vmul.f32 1.0, %v4666
      %v4668 = vrcp.pop %v4625
      %v4669 = vmul.f32 1.0, %v4668
      %v4670 = vrcp.pop %v4626
      %v4671 = vmul.f32 1.0, %v4670
      %v4672 = vrcp.pop %v4627
      %v4673 = vmul.f32 1.0, %v4672
      %v4674 = vrcp.pop %v4628
      %v4675 = vmul.f32 1.0, %v4674
      %v4676 = vrcp.pop %v4629
      %v4677 = vmul.f32 1.0, %v4676
      %v4678 = vrcp.pop %v4630
      %v4679 = vmul.f32 1.0, %v4678
      %v4680 = vrcp.pop %v4631
      %v4681 = vmul.f32 1.0, %v4680
      %v4682 = vrcp.pop %v4632
      %v4683 = vmul.f32 1.0, %v4682
      %v4684 = vrcp.pop %v4633
      %v4685 = vmul.f32 1.0, %v4684
      %v4686 = vrcp.pop %v4634
      %v4687 = vmul.f32 1.0, %v4686
      %v4688 = vrcp.pop %v4635
      %v4689 = vmul.f32 1.0, %v4688
      %v4690 = vrcp.pop %v4636
      %v4691 = vmul.f32 1.0, %v4690
      %v4692 = vrcp.pop %v4637
      %v4693 = vmul.f32 1.0, %v4692
      %v4694 = vpack.c.bf16 %v4653, %v4639
      %v4695 = vpack.c.bf16 %v4655, %v4641
      %v4696 = vpack.c.bf16 %v4657, %v4643
      %v4697 = vpack.c.bf16 %v4659, %v4645
      %v4698 = vpack.c.bf16 %v4661, %v4647
      %v4699 = vpack.c.bf16 %v4663, %v4649
      %v4700 = vpack.c.bf16 %v4665, %v4651
      %v4701 = vpack.c.bf16 %v4681, %v4667
      %v4702 = vpack.c.bf16 %v4683, %v4669
      %v4703 = vpack.c.bf16 %v4685, %v4671
      %v4704 = vpack.c.bf16 %v4687, %v4673
      %v4705 = vpack.c.bf16 %v4689, %v4675
      %v4706 = vpack.c.bf16 %v4691, %v4677
      %v4707 = vpack.c.bf16 %v4693, %v4679
      %v4722 = vunpack.c.l.b16 %v4694
      %v4723 = vunpack.c.l.b16 %v4695
      %v4724 = vunpack.c.l.b16 %v4696
      %v4725 = vunpack.c.l.b16 %v4697
      %v4726 = vunpack.c.l.b16 %v4698
      %v4727 = vunpack.c.l.b16 %v4699
      %v4728 = vunpack.c.l.b16 %v4700
      %v4729 = vunpack.c.h.b16 %v4694
      %v4730 = vunpack.c.h.b16 %v4695
      %v4731 = vunpack.c.h.b16 %v4696
      %v4732 = vunpack.c.h.b16 %v4697
      %v4733 = vunpack.c.h.b16 %v4698
      %v4734 = vunpack.c.h.b16 %v4699
      %v4735 = vunpack.c.h.b16 %v4700
      %v4736 = vunpack.c.l.b16 %v4701
      %v4737 = vunpack.c.l.b16 %v4702
      %v4738 = vunpack.c.l.b16 %v4703
      %v4739 = vunpack.c.l.b16 %v4704
      %v4740 = vunpack.c.l.b16 %v4705
      %v4741 = vunpack.c.l.b16 %v4706
      %v4742 = vunpack.c.l.b16 %v4707
      %v4743 = vunpack.c.h.b16 %v4701
      %v4744 = vunpack.c.h.b16 %v4702
      %v4745 = vunpack.c.h.b16 %v4703
      %v4746 = vunpack.c.h.b16 %v4704
      %v4747 = vunpack.c.h.b16 %v4705
      %v4748 = vunpack.c.h.b16 %v4706
      %v4749 = vunpack.c.h.b16 %v4707
      %v4750 = vpack.c.b16 %v4723, %v4722
      %v4751 = vpack.c.b16 %v4725, %v4724
      %v4752 = vpack.c.b16 %v4727, %v4726
      %v4753 = vpack.c.b16 %v4728, %v4728
      %v4754 = vpack.c.b16 %v4730, %v4729
      %v4755 = vpack.c.b16 %v4732, %v4731
      %v4756 = vpack.c.b16 %v4734, %v4733
      %v4757 = vpack.c.b16 %v4735, %v4735
      %v4758 = vpack.c.b16 %v4737, %v4736
      %v4759 = vpack.c.b16 %v4739, %v4738
      %v4760 = vpack.c.b16 %v4741, %v4740
      %v4761 = vpack.c.b16 %v4742, %v4742
      %v4762 = vpack.c.b16 %v4744, %v4743
      %v4763 = vpack.c.b16 %v4746, %v4745
      %v4764 = vpack.c.b16 %v4748, %v4747
      %v4765 = vpack.c.b16 %v4749, %v4749
      %4782 = vst [vmem:[%s424] sm:$0xff] %v4750
      %4783 = vst [vmem:[%s424 + $0x8] sm:$0xff] %v4751
      %4784 = vst [vmem:[%s424 + $0x10] sm:$0xff] %v4752
      %vm4785 = vcmask 125952
      %4786 = vst.msk [vmem:[%s424 + $0x18] sm:$0xf] %vm4785, %v4753
      %4787 = vst [vmem:[%s424 + $0x1c] sm:$0xff] %v4754
      %4788 = vst [vmem:[%s424 + $0x24] sm:$0xff] %v4755
      %4789 = vst [vmem:[%s424 + $0x2c] sm:$0xff] %v4756
      %4790 = vst.msk [vmem:[%s424 + $0x34] sm:$0xf] %vm4785, %v4757
      %4791 = vst [vmem:[%s424 + $0x38] sm:$0xff] %v4758
      %4792 = vst [vmem:[%s424 + $0x40] sm:$0xff] %v4759
      %4793 = vst [vmem:[%s424 + $0x48] sm:$0xff] %v4760
      %4794 = vst.msk [vmem:[%s424 + $0x50] sm:$0xf] %vm4785, %v4761
      %4795 = vst [vmem:[%s424 + $0x54] sm:$0xff] %v4762
      %4796 = vst [vmem:[%s424 + $0x5c] sm:$0xff] %v4763
      %4797 = vst [vmem:[%s424 + $0x64] sm:$0xff] %v4764
      %4798 = vst.msk [vmem:[%s424 + $0x6c] sm:$0xf] %vm4785, %v4765
      %4799 = vst [vmem:[%s431] sm:$0xff] %v2579
      %4800 = vst [vmem:[%s431 + $0x8] sm:$0xff] %v2581
      %4801 = vst [vmem:[%s431 + $0x10] sm:$0xff] %v2583
      %4802 = vst [vmem:[%s431 + $0x18] sm:$0xff] %v2585
      %4803 = vst [vmem:[%s431 + $0x20] sm:$0xff] %v2589
      %4804 = vst [vmem:[%s431 + $0x28] sm:$0xff] %v2591
      %4805 = vst [vmem:[%s431 + $0x30] sm:$0xff] %v2593
      %4806 = vst [vmem:[%s431 + $0x38] sm:$0xff] %v2595
      %s4807 = smul.u32 4, %s23
      %p4808 = scmp.lt.s32.totalorder %s4807, 7
      %s4809 = scalar_select %p4808, %s4807, 7
      %s4810 = smul.addr %s4809, 7
      %s4811 = smul.addr %s4810, 4
      %s4812 = scalar_lea.vmem %s10, %s4811
      %s4813 = smul.u32 4, %s23
      %p4814 = scmp.lt.s32.totalorder %s4813, 7
      %s4815 = scalar_select %p4814, %s4813, 7
      %s4816 = smul.addr %s4815, 2
      %s4817 = smul.addr %s4816, 8
      %s4818 = scalar_lea.vmem %s11, %s4817
      // Predicated region
      $region61: #{vae_forward.1} parent=59 // pred_check
        %p4819 = pneg %p261
      $region62: #{vae_forward.1} parent=59 // pred_check_branch
        %4821 = sbr.rel (%p4819) target = $region64
      $region63: #{vae_forward.1} parent=59 // pred_region
        %s4822 = smul.u32 4, %s23
      $region64: #{vae_forward.1} parent=59 // pred_fallthru
        _
      // Predicated region
      $region65: #{vae_forward.1} parent=59 // pred_check
        %p4823 = pneg %p287
      $region66: #{vae_forward.1} parent=59 // pred_check_branch
        %4825 = sbr.rel (%p4823) target = $region68
      $region67: #{vae_forward.1} parent=59 // pred_region
        %s4826 = smul.u32 4, %s23
      $region68: #{vae_forward.1} parent=59 // pred_fallthru
        _
    $region60: #{vae_forward.1} parent=5 // pred_fallthru
      _
    %p4827 = scmp.le.s32.totalorder 2, %s18
    // Predicated region
    $region69: #{vae_forward.1} parent=5 // pred_check
      %p4828 = pneg %p4827
    $region70: #{vae_forward.1} parent=5 // pred_check_branch
      %4830 = sbr.rel (%p4828) target = $region72
    $region71: #{vae_forward.1} parent=5 // pred_region
      %s4831 = ssub.s32 %s18, 2
      // Predicated region
      $region73: #{vae_forward.1} parent=71 // pred_check
        %p4832 = pneg %p267
      $region74: #{vae_forward.1} parent=71 // pred_check_branch
        %4834 = sbr.rel (%p4832) target = $region76
      $region75: #{vae_forward.1} parent=71 // pred_region
        %s4835 = smul.u32 4, %s24
        %p4836 = scmp.lt.s32.totalorder %s4835, 7
        %s4837 = scalar_select %p4836, %s4835, 7
        %s4838 = smul.addr %s4837, 7
        %s4839 = smul.addr %s4838, 4
        %s4840 = scalar_lea.vmem %s10, %s4839
      $region76: #{vae_forward.1} parent=71 // pred_fallthru
        _
      // Predicated region
      $region77: #{vae_forward.1} parent=71 // pred_check
        %p4841 = pneg %p293
      $region78: #{vae_forward.1} parent=71 // pred_check_branch
        %4843 = sbr.rel (%p4841) target = $region80
      $region79: #{vae_forward.1} parent=71 // pred_region
        %s4844 = smul.u32 4, %s24
        %p4845 = scmp.lt.s32.totalorder %s4844, 7
        %s4846 = scalar_select %p4845, %s4844, 7
        %s4847 = smul.addr %s4846, 2
        %s4848 = smul.addr %s4847, 8
        %s4849 = scalar_lea.vmem %s11, %s4848
      $region80: #{vae_forward.1} parent=71 // pred_fallthru
        _
    $region72: #{vae_forward.1} parent=5 // pred_fallthru
      _
  $region6: #{vae_forward.1} parent=0 // loop_footer
    %s22 = sadd.s32 1, %s18
  $region7: #{vae_forward.1} parent=0 // loop_footer_branch
    %17 = sbr.rel target = $region3
  $region8: #{vae_forward.1} parent=0 // loop_exit
    _

</llo_original>
